<compile_context>
chip_gen: v7x
topology: tpu7x:2x2x1
jax: 0.10.0
libtpu: 0.0.40
codegen_flags: <defaults>
</compile_context>

<pallas_src>
import functools

import jax
import jax.numpy as jnp
from jax.experimental import pallas as pl
from jax.experimental.pallas import tpu as pltpu

_HI = jax.lax.Precision.HIGHEST


# ----------------------------------------------------------------------------
# Fused DenseLayer forward (NCHW in, NCHW out, like the PyTorch module).
# ----------------------------------------------------------------------------
def dense_layer_forward(x_nchw, params, dilation, *, split_batch_over_grid=False):
    p = params
    B, Cin, H, W = x_nchw.shape
    Cout = p["w_conv0"].shape[0]
    K = p["ea_w0"].shape[0]
    N = H * W
    d = dilation
    Ctot = Cin + Cout

    # ---- tiny weight prep (XLA side, outside the kernel) --------------------
    # im2col conv weights, tap-major (t = kh*3+kw), bias folded as last column.
    w0_flat = jnp.transpose(p["w_conv0"], (0, 2, 3, 1)).reshape(Cout, 9 * Cin)
    w0_aug = jnp.concatenate([w0_flat, p["b_conv0"].reshape(Cout, 1)], axis=1)

    w1_flat = jnp.transpose(p["w_conv1"], (0, 2, 3, 1)).reshape(Cout, 9 * Cout)
    w1_aug = jnp.concatenate([w1_flat, p["b_conv1"].reshape(Cout, 1)], axis=1)

    # External-attention folding (exact linear algebra):
    #   attn = w0 @ (wc1 @ c1 + bc1) = wa @ c1 + ba,  wa = w0@wc1, ba = w0@bc1
    # and since c1 = W1_aug @ stack1 (with a ones row), fold further:
    #   attn = (wa @ W1_aug) @ stack1 + ba   -> one combined weight w_big whose
    # first Cout rows reproduce c1 and remaining K rows give attn directly.
    wa = jnp.dot(p["ea_w0"], p["ea_wc1"], precision=_HI)              # (K, Cout)
    ba = jnp.dot(p["ea_w0"], p["ea_bc1"], precision=_HI)              # (K,)
    w_attn = jnp.dot(wa, w1_aug, precision=_HI)                       # (K, 9*Cout+1)
    w_attn = w_attn.at[:, -1].add(ba)                                 # fold ba
    w_big = jnp.concatenate([w1_aug, w_attn], axis=0)                 # (Cout+K, 9*Cout+1)

    #   out = bn_s * (wc2 @ (w1 @ attn_n)) + bn_b = wb @ attn_n + bb
    wb = p["ea_bn_scale"][:, None] * jnp.dot(p["ea_wc2"], p["ea_w1"],
                                             precision=_HI)           # (Cout, K)
    bb = p["ea_bn_shift"].reshape(Cout, 1)                            # (Cout, 1)

    # Border-validity masks for the 9 dilated taps over flattened spatial n.
    offsets = tuple(((kh - 1) * d, (kw - 1) * d)
                    for kh in range(3) for kw in range(3))
    n_idx = jnp.arange(N, dtype=jnp.int32)
    h_idx, w_idx = n_idx // W, n_idx % W
    masks = jnp.stack(
        [((h_idx + dh >= 0) & (h_idx + dh < H) &
          (w_idx + dw >= 0) & (w_idx + dw < W)).astype(jnp.float32)
         for (dh, dw) in offsets], axis=0)                            # (9, N)

    x_flat = x_nchw.reshape(B, Cin, N)                                # free reshape
    stk_rows = 9 * max(Cin, Cout) + 1                                 # shared scratch

    def kernel(x_ref, m_ref, w0_ref, wbig_ref, wb_ref, bb_ref, o_ref, stk_ref):
        nb = x_ref.shape[0]                 # images handled by this grid step
        mk = m_ref[...]                     # (9, N)
        w0a = w0_ref[...]                   # (Cout, 9*Cin+1)
        wbig = wbig_ref[...]                # (Cout+K, 9*Cout+1)
        wbv = wb_ref[...]                   # (Cout, K)
        bbv = bb_ref[...]                   # (Cout, 1)
        ones_row = jnp.ones((1, N), jnp.float32)

        def im2col_matmul(v, ci, w_aug):
            # Stage rolled+masked taps (rows [0, 9*ci)) plus a ones row in the
            # shared VMEM scratch, then ONE wide MXU matmul with the bias
            # folded into the last weight column.
            for t, (dh, dw) in enumerate(offsets):
                off = dh * W + dw
                if off == 0:
                    s = v                           # center tap: always valid
                else:
                    s = pltpu.roll(v, shift=(-off) % N, axis=1) * mk[t:t + 1, :]
                stk_ref[pl.ds(t * ci, ci), :] = s
            stk_ref[pl.ds(9 * ci, 1), :] = ones_row
            return jnp.dot(w_aug, stk_ref[pl.ds(0, 9 * ci + 1), :],
                           preferred_element_type=jnp.float32, precision=_HI)

        for b in range(nb):                 # static unroll over the batch block
            x = x_ref[b]                    # (Cin, N), spatial on lanes
            # conv0: dilated 3x3 conv + bias (folded) + ReLU
            c0 = jnp.maximum(im2col_matmul(x, Cin, w0a), 0.0)         # (Cout, N)
            # conv1 + EA first linear in ONE matmul via the combined weight.
            cr = im2col_matmul(c0, Cout, wbig)                        # (Cout+K, N)
            c1 = cr[:Cout]                                            # (Cout, N)
            attn = cr[Cout:]                                          # (K, N)

            # softmax over spatial (lanes) with reciprocal-of-reduced only
            m = jnp.max(attn, axis=1, keepdims=True)                  # (K, 1)
            e = jnp.exp(attn - m)
            r = 1.0 / jnp.sum(e, axis=1, keepdims=True)               # (K, 1)
            p_sm = e * r                                              # softmax
            # K-renorm deferred past the wb matmul (per-column scale commutes)
            inv_d = 1.0 / (1e-9 + jnp.sum(p_sm, axis=0, keepdims=True))   # (1, N)
            ea = jnp.dot(wbv, p_sm, preferred_element_type=jnp.float32,
                         precision=_HI) * inv_d + bbv + c1
            ea = jnp.maximum(ea, 0.0)                                 # (Cout, N)

            # torch.cat([x, conv1_out], 1): one aligned full-tile store.
            o_ref[b] = jnp.concatenate([x, ea], axis=0).astype(o_ref.dtype)

    if split_batch_over_grid:
        # 1 image per grid step; "parallel" -> 1 image / TensorCore on v7x.
        grid, nb_blk, sem = (B,), 1, ("parallel",)
        x_map = lambda b: (b, 0, 0)
        o_map = lambda b: (b, 0, 0)
    else:
        # Whole batch in one step (amortizes per-step overhead on v5e/v6e).
        grid, nb_blk, sem = (1,), B, ("arbitrary",)
        x_map = lambda b: (0, 0, 0)
        o_map = lambda b: (0, 0, 0)
    wmap = lambda b: (0, 0)

    out_flat = pl.pallas_call(
        kernel,
        out_shape=jax.ShapeDtypeStruct((B, Ctot, N), x_nchw.dtype),
        grid=grid,
        in_specs=[
            pl.BlockSpec((nb_blk, Cin, N), x_map),
            pl.BlockSpec((9, N), wmap),
            pl.BlockSpec((Cout, 9 * Cin + 1), wmap),
            pl.BlockSpec((Cout + K, 9 * Cout + 1), wmap),
            pl.BlockSpec((Cout, K), wmap),
            pl.BlockSpec((Cout, 1), wmap),
        ],
        out_specs=pl.BlockSpec((nb_blk, Ctot, N), o_map),
        scratch_shapes=[pltpu.VMEM((stk_rows, N), jnp.float32)],
        compiler_params=pltpu.CompilerParams(dimension_semantics=sem),
    )(x_flat, masks, w0_aug, w_big, wb, bb)

    return out_flat.reshape(B, Ctot, H, W)                           # free reshape


# ----------------------------------------------------------------------------
# Pure-JAX reference (for correctness check).
# ----------------------------------------------------------------------------
def ref_forward(x_nchw, p, dilation):
    d = dilation

    def conv(x, w, b):
        y = jax.lax.conv_general_dilated(
            x, w, window_strides=(1, 1), padding=((d, d), (d, d)),
            rhs_dilation=(d, d), dimension_numbers=("NCHW", "OIHW", "NCHW"),
            precision=_HI)
        return y + b.reshape(1, -1, 1, 1)

    c0 = jax.nn.relu(conv(x_nchw, p["w_conv0"], p["b_conv0"]))
    c1 = conv(c0, p["w_conv1"], p["b_conv1"])

    B, C, H, W = c1.shape
    idn = c1
    y = jnp.einsum("bchw,oc->bohw", c1, p["ea_wc1"],
                   precision=_HI) + p["ea_bc1"].reshape(1, -1, 1, 1)
    yf = y.reshape(B, C, H * W)
    attn = jnp.einsum("kc,bcn->bkn", p["ea_w0"], yf, precision=_HI)
    attn = jax.nn.softmax(attn, axis=-1)
    attn = attn / (1e-9 + attn.sum(axis=1, keepdims=True))
    yf = jnp.einsum("ck,bkn->bcn", p["ea_w1"], attn, precision=_HI)
    y = yf.reshape(B, C, H, W)
    y = jnp.einsum("bchw,oc->bohw", y, p["ea_wc2"], precision=_HI)
    y = y * p["ea_bn_scale"].reshape(1, -1, 1, 1) + p["ea_bn_shift"].reshape(1, -1, 1, 1)
    ea = jax.nn.relu(y + idn)
    return jnp.concatenate([x_nchw, ea], axis=1)


# ----------------------------------------------------------------------------
# Deterministic parameter construction.
# ----------------------------------------------------------------------------
def make_params(key, in_channels, out_channels, k_ea=64):
    ks = jax.random.split(key, 8)
    C = out_channels
    p = {
        "w_conv0": 0.1 * jax.random.normal(ks[0], (C, in_channels, 3, 3), jnp.float32),
        "b_conv0": 0.1 * jax.random.normal(ks[1], (C,), jnp.float32),
        "w_conv1": 0.1 * jax.random.normal(ks[2], (C, C, 3, 3), jnp.float32),
        "b_conv1": 0.1 * jax.random.normal(ks[3], (C,), jnp.float32),
        "ea_wc1": 0.1 * jax.random.normal(ks[4], (C, C), jnp.float32),
        "ea_bc1": 0.1 * jax.random.normal(ks[5], (C,), jnp.float32),
        "ea_w0": 0.1 * jax.random.normal(ks[6], (k_ea, C), jnp.float32),
        "ea_wc2": 0.1 * jax.random.normal(ks[7], (C, C), jnp.float32),
    }
    # linear_1.weight = linear_0.weight.permute(1, 0, 2)  ->  (C, K) = W0^T
    p["ea_w1"] = jnp.transpose(p["ea_w0"])
    # BatchNorm in eval mode with gamma=1, beta=0, running_mean=0, running_var=1
    eps = 1e-5
    p["ea_bn_scale"] = jnp.full((C,), 1.0 / jnp.sqrt(1.0 + eps), jnp.float32)
    p["ea_bn_shift"] = jnp.zeros((C,), jnp.float32)
    return p


if __name__ == "__main__":
    in_channels, out_channels, dilation = 4, 8, 2
    B, H, W = 2, 16, 16

    key = jax.random.PRNGKey(0)
    kx, kp = jax.random.split(key)
    x = jax.random.normal(kx, (B, in_channels, H, W), jnp.float32)
    params = make_params(kp, in_channels, out_channels)

    ref = ref_forward(x, params, dilation)

    # Default path: whole batch in one grid step (single-TC v5e/v6e friendly).
    fwd = jax.jit(functools.partial(dense_layer_forward, dilation=dilation))
    out = jax.block_until_ready(fwd(x, params))
    assert out.shape == (B, in_channels + out_channels, H, W), out.shape
    assert jnp.allclose(out, ref, atol=1e-4, rtol=1e-4), (
        float(jnp.max(jnp.abs(out - ref))))

    # Batch-parallel grid variant (1 image per TensorCore on multi-TC v7x).
    fwd_p = jax.jit(functools.partial(dense_layer_forward, dilation=dilation,
                                      split_batch_over_grid=True))
    out_p = jax.block_until_ready(fwd_p(x, params))
    assert jnp.allclose(out_p, ref, atol=1e-4, rtol=1e-4), (
        float(jnp.max(jnp.abs(out_p - ref))))

    print("KERNEL_OK")
</pallas_src>

<mosaic_0001>
module attributes {stable_mosaic.version = 11 : i64} {
  func.func @kernel(%arg0: i32, %arg1: memref<2x4x256xf32, #tpu.memory_space<vmem>>, %arg2: memref<9x256xf32, #tpu.memory_space<vmem>>, %arg3: memref<8x37xf32, #tpu.memory_space<vmem>>, %arg4: memref<72x73xf32, #tpu.memory_space<vmem>>, %arg5: memref<8x64xf32, #tpu.memory_space<vmem>>, %arg6: memref<8x1xf32, #tpu.memory_space<vmem>>, %arg7: memref<2x12x256xf32, #tpu.memory_space<vmem>>, %arg8: memref<73x256xf32, #tpu.memory_space<vmem>>) attributes {dimension_semantics = [#tpu.dimension_semantics<arbitrary>], iteration_bounds = array<i64: 1>, scalar_prefetch = 0 : i64, scratch_operands = 1 : i64, tpu.core_type = #tpu.core_type<tc>, window_params = [{pipeline_mode = #tpu.pipeline_mode<synchronous>, transform_indices = @transform_0, window_bounds = array<i64: 2, 4, 256>}, {pipeline_mode = #tpu.pipeline_mode<synchronous>, transform_indices = @transform_1, window_bounds = array<i64: 9, 256>}, {pipeline_mode = #tpu.pipeline_mode<synchronous>, transform_indices = @transform_2, window_bounds = array<i64: 8, 37>}, {pipeline_mode = #tpu.pipeline_mode<synchronous>, transform_indices = @transform_3, window_bounds = array<i64: 72, 73>}, {pipeline_mode = #tpu.pipeline_mode<synchronous>, transform_indices = @transform_4, window_bounds = array<i64: 8, 64>}, {pipeline_mode = #tpu.pipeline_mode<synchronous>, transform_indices = @transform_5, window_bounds = array<i64: 8, 1>}, {pipeline_mode = #tpu.pipeline_mode<synchronous>, transform_indices = @transform_6, window_bounds = array<i64: 2, 12, 256>}]} {
    %c0 = arith.constant 0 : index
    %c0_0 = arith.constant 0 : index
    %0 = vector.load %arg2[%c0, %c0_0] : memref<9x256xf32, #tpu.memory_space<vmem>>, vector<9x256xf32>
    %c0_1 = arith.constant 0 : index
    %c0_2 = arith.constant 0 : index
    %1 = vector.load %arg3[%c0_1, %c0_2] : memref<8x37xf32, #tpu.memory_space<vmem>>, vector<8x37xf32>
    %c0_3 = arith.constant 0 : index
    %c0_4 = arith.constant 0 : index
    %2 = vector.load %arg4[%c0_3, %c0_4] : memref<72x73xf32, #tpu.memory_space<vmem>>, vector<72x73xf32>
    %c0_5 = arith.constant 0 : index
    %c0_6 = arith.constant 0 : index
    %3 = vector.load %arg5[%c0_5, %c0_6] : memref<8x64xf32, #tpu.memory_space<vmem>>, vector<8x64xf32>
    %c0_7 = arith.constant 0 : index
    %c0_8 = arith.constant 0 : index
    %4 = vector.load %arg6[%c0_7, %c0_8] : memref<8x1xf32, #tpu.memory_space<vmem>>, vector<8x1xf32>
    %cst = arith.constant 1.000000e+00 : f32
    %5 = vector.broadcast %cst : f32 to vector<1x256xf32>
    %c0_9 = arith.constant 0 : index
    %c0_10 = arith.constant 0 : index
    %c0_11 = arith.constant 0 : index
    %6 = vector.load %arg1[%c0_9, %c0_10, %c0_11] : memref<2x4x256xf32, #tpu.memory_space<vmem>>, vector<1x4x256xf32>
    %7 = vector.shape_cast %6 : vector<1x4x256xf32> to vector<4x256xf32>
    %c34_i32 = arith.constant 34 : i32
    %8 = tpu.dynamic_rotate %7 by %c34_i32 dim 1 : vector<4x256xf32>, i32 -> vector<4x256xf32>
    %9 = vector.extract_strided_slice %0 {offsets = [0, 0], sizes = [1, 256], strides = [1, 1]} : vector<9x256xf32> to vector<1x256xf32>
    %10 = vector.broadcast %9 : vector<1x256xf32> to vector<4x256xf32>
    %11 = arith.mulf %8, %10 : vector<4x256xf32>
    %c0_12 = arith.constant 0 : index
    %c0_13 = arith.constant 0 : index
    %12 = vector.load %arg8[%c0_12, %c0_13] : memref<73x256xf32, #tpu.memory_space<vmem>>, vector<4x256xf32>
    tpu.vector_store %arg8[%c0_12, %c0_13], %11 {strides = array<i32>} : memref<73x256xf32, #tpu.memory_space<vmem>>, vector<4x256xf32>,
    %c32_i32 = arith.constant 32 : i32
    %13 = tpu.dynamic_rotate %7 by %c32_i32 dim 1 : vector<4x256xf32>, i32 -> vector<4x256xf32>
    %14 = vector.extract_strided_slice %0 {offsets = [1, 0], sizes = [1, 256], strides = [1, 1]} : vector<9x256xf32> to vector<1x256xf32>
    %15 = vector.broadcast %14 : vector<1x256xf32> to vector<4x256xf32>
    %16 = arith.mulf %13, %15 : vector<4x256xf32>
    %c4 = arith.constant 4 : index
    %c0_14 = arith.constant 0 : index
    %17 = vector.load %arg8[%c4, %c0_14] : memref<73x256xf32, #tpu.memory_space<vmem>>, vector<4x256xf32>
    tpu.vector_store %arg8[%c4, %c0_14], %16 {strides = array<i32>} : memref<73x256xf32, #tpu.memory_space<vmem>>, vector<4x256xf32>,
    %c30_i32 = arith.constant 30 : i32
    %18 = tpu.dynamic_rotate %7 by %c30_i32 dim 1 : vector<4x256xf32>, i32 -> vector<4x256xf32>
    %19 = vector.extract_strided_slice %0 {offsets = [2, 0], sizes = [1, 256], strides = [1, 1]} : vector<9x256xf32> to vector<1x256xf32>
    %20 = vector.broadcast %19 : vector<1x256xf32> to vector<4x256xf32>
    %21 = arith.mulf %18, %20 : vector<4x256xf32>
    %c8 = arith.constant 8 : index
    %c0_15 = arith.constant 0 : index
    %22 = vector.load %arg8[%c8, %c0_15] : memref<73x256xf32, #tpu.memory_space<vmem>>, vector<4x256xf32>
    tpu.vector_store %arg8[%c8, %c0_15], %21 {strides = array<i32>} : memref<73x256xf32, #tpu.memory_space<vmem>>, vector<4x256xf32>,
    %c2_i32 = arith.constant 2 : i32
    %23 = tpu.dynamic_rotate %7 by %c2_i32 dim 1 : vector<4x256xf32>, i32 -> vector<4x256xf32>
    %24 = vector.extract_strided_slice %0 {offsets = [3, 0], sizes = [1, 256], strides = [1, 1]} : vector<9x256xf32> to vector<1x256xf32>
    %25 = vector.broadcast %24 : vector<1x256xf32> to vector<4x256xf32>
    %26 = arith.mulf %23, %25 : vector<4x256xf32>
    %c12 = arith.constant 12 : index
    %c0_16 = arith.constant 0 : index
    %27 = vector.load %arg8[%c12, %c0_16] : memref<73x256xf32, #tpu.memory_space<vmem>>, vector<4x256xf32>
    tpu.vector_store %arg8[%c12, %c0_16], %26 {strides = array<i32>} : memref<73x256xf32, #tpu.memory_space<vmem>>, vector<4x256xf32>,
    %c16 = arith.constant 16 : index
    %c0_17 = arith.constant 0 : index
    %28 = vector.load %arg8[%c16, %c0_17] : memref<73x256xf32, #tpu.memory_space<vmem>>, vector<4x256xf32>
    tpu.vector_store %arg8[%c16, %c0_17], %7 {strides = array<i32>} : memref<73x256xf32, #tpu.memory_space<vmem>>, vector<4x256xf32>,
    %c254_i32 = arith.constant 254 : i32
    %29 = tpu.dynamic_rotate %7 by %c254_i32 dim 1 : vector<4x256xf32>, i32 -> vector<4x256xf32>
    %30 = vector.extract_strided_slice %0 {offsets = [5, 0], sizes = [1, 256], strides = [1, 1]} : vector<9x256xf32> to vector<1x256xf32>
    %31 = vector.broadcast %30 : vector<1x256xf32> to vector<4x256xf32>
    %32 = arith.mulf %29, %31 : vector<4x256xf32>
    %c20 = arith.constant 20 : index
    %c0_18 = arith.constant 0 : index
    %33 = vector.load %arg8[%c20, %c0_18] : memref<73x256xf32, #tpu.memory_space<vmem>>, vector<4x256xf32>
    tpu.vector_store %arg8[%c20, %c0_18], %32 {strides = array<i32>} : memref<73x256xf32, #tpu.memory_space<vmem>>, vector<4x256xf32>,
    %c226_i32 = arith.constant 226 : i32
    %34 = tpu.dynamic_rotate %7 by %c226_i32 dim 1 : vector<4x256xf32>, i32 -> vector<4x256xf32>
    %35 = vector.extract_strided_slice %0 {offsets = [6, 0], sizes = [1, 256], strides = [1, 1]} : vector<9x256xf32> to vector<1x256xf32>
    %36 = vector.broadcast %35 : vector<1x256xf32> to vector<4x256xf32>
    %37 = arith.mulf %34, %36 : vector<4x256xf32>
    %c24 = arith.constant 24 : index
    %c0_19 = arith.constant 0 : index
    %38 = vector.load %arg8[%c24, %c0_19] : memref<73x256xf32, #tpu.memory_space<vmem>>, vector<4x256xf32>
    tpu.vector_store %arg8[%c24, %c0_19], %37 {strides = array<i32>} : memref<73x256xf32, #tpu.memory_space<vmem>>, vector<4x256xf32>,
    %c224_i32 = arith.constant 224 : i32
    %39 = tpu.dynamic_rotate %7 by %c224_i32 dim 1 : vector<4x256xf32>, i32 -> vector<4x256xf32>
    %40 = vector.extract_strided_slice %0 {offsets = [7, 0], sizes = [1, 256], strides = [1, 1]} : vector<9x256xf32> to vector<1x256xf32>
    %41 = vector.broadcast %40 : vector<1x256xf32> to vector<4x256xf32>
    %42 = arith.mulf %39, %41 : vector<4x256xf32>
    %c28 = arith.constant 28 : index
    %c0_20 = arith.constant 0 : index
    %43 = vector.load %arg8[%c28, %c0_20] : memref<73x256xf32, #tpu.memory_space<vmem>>, vector<4x256xf32>
    tpu.vector_store %arg8[%c28, %c0_20], %42 {strides = array<i32>} : memref<73x256xf32, #tpu.memory_space<vmem>>, vector<4x256xf32>,
    %c222_i32 = arith.constant 222 : i32
    %44 = tpu.dynamic_rotate %7 by %c222_i32 dim 1 : vector<4x256xf32>, i32 -> vector<4x256xf32>
    %45 = vector.extract_strided_slice %0 {offsets = [8, 0], sizes = [1, 256], strides = [1, 1]} : vector<9x256xf32> to vector<1x256xf32>
    %46 = vector.broadcast %45 : vector<1x256xf32> to vector<4x256xf32>
    %47 = arith.mulf %44, %46 : vector<4x256xf32>
    %c32 = arith.constant 32 : index
    %c0_21 = arith.constant 0 : index
    %48 = vector.load %arg8[%c32, %c0_21] : memref<73x256xf32, #tpu.memory_space<vmem>>, vector<4x256xf32>
    tpu.vector_store %arg8[%c32, %c0_21], %47 {strides = array<i32>} : memref<73x256xf32, #tpu.memory_space<vmem>>, vector<4x256xf32>,
    %c36 = arith.constant 36 : index
    %c0_22 = arith.constant 0 : index
    %49 = vector.load %arg8[%c36, %c0_22] : memref<73x256xf32, #tpu.memory_space<vmem>>, vector<1x256xf32>
    tpu.vector_store %arg8[%c36, %c0_22], %5 {strides = array<i32>} : memref<73x256xf32, #tpu.memory_space<vmem>>, vector<1x256xf32>,
    %c0_23 = arith.constant 0 : index
    %c0_24 = arith.constant 0 : index
    %50 = vector.load %arg8[%c0_23, %c0_24] : memref<73x256xf32, #tpu.memory_space<vmem>>, vector<37x256xf32>
    %cst_25 = arith.constant dense<0.000000e+00> : vector<8x256xf32>
    %51 = tpu.matmul %1, %50, %cst_25 {dimension_numbers = #tpu.dot_dimension_numbers<[1], [0], [0], [1], [0, 0, 1, 1], [], []>, precision = #tpu.contract_precision<fp32>} : vector<8x37xf32>, vector<37x256xf32>, vector<8x256xf32> -> vector<8x256xf32>
    %cst_26 = arith.constant 0.000000e+00 : f32
    %52 = vector.broadcast %cst_26 : f32 to vector<8x256xf32>
    %53 = arith.maximumf %51, %52 : vector<8x256xf32>
    %c34_i32_27 = arith.constant 34 : i32
    %54 = tpu.dynamic_rotate %53 by %c34_i32_27 dim 1 : vector<8x256xf32>, i32 -> vector<8x256xf32>
    %55 = vector.extract_strided_slice %0 {offsets = [0, 0], sizes = [1, 256], strides = [1, 1]} : vector<9x256xf32> to vector<1x256xf32>
    %56 = vector.broadcast %55 : vector<1x256xf32> to vector<8x256xf32>
    %57 = arith.mulf %54, %56 : vector<8x256xf32>
    %c0_28 = arith.constant 0 : index
    %c0_29 = arith.constant 0 : index
    %58 = vector.load %arg8[%c0_28, %c0_29] : memref<73x256xf32, #tpu.memory_space<vmem>>, vector<8x256xf32>
    tpu.vector_store %arg8[%c0_28, %c0_29], %57 {strides = array<i32>} : memref<73x256xf32, #tpu.memory_space<vmem>>, vector<8x256xf32>,
    %c32_i32_30 = arith.constant 32 : i32
    %59 = tpu.dynamic_rotate %53 by %c32_i32_30 dim 1 : vector<8x256xf32>, i32 -> vector<8x256xf32>
    %60 = vector.extract_strided_slice %0 {offsets = [1, 0], sizes = [1, 256], strides = [1, 1]} : vector<9x256xf32> to vector<1x256xf32>
    %61 = vector.broadcast %60 : vector<1x256xf32> to vector<8x256xf32>
    %62 = arith.mulf %59, %61 : vector<8x256xf32>
    %c8_31 = arith.constant 8 : index
    %c0_32 = arith.constant 0 : index
    %63 = vector.load %arg8[%c8_31, %c0_32] : memref<73x256xf32, #tpu.memory_space<vmem>>, vector<8x256xf32>
    tpu.vector_store %arg8[%c8_31, %c0_32], %62 {strides = array<i32>} : memref<73x256xf32, #tpu.memory_space<vmem>>, vector<8x256xf32>,
    %c30_i32_33 = arith.constant 30 : i32
    %64 = tpu.dynamic_rotate %53 by %c30_i32_33 dim 1 : vector<8x256xf32>, i32 -> vector<8x256xf32>
    %65 = vector.extract_strided_slice %0 {offsets = [2, 0], sizes = [1, 256], strides = [1, 1]} : vector<9x256xf32> to vector<1x256xf32>
    %66 = vector.broadcast %65 : vector<1x256xf32> to vector<8x256xf32>
    %67 = arith.mulf %64, %66 : vector<8x256xf32>
    %c16_34 = arith.constant 16 : index
    %c0_35 = arith.constant 0 : index
    %68 = vector.load %arg8[%c16_34, %c0_35] : memref<73x256xf32, #tpu.memory_space<vmem>>, vector<8x256xf32>
    tpu.vector_store %arg8[%c16_34, %c0_35], %67 {strides = array<i32>} : memref<73x256xf32, #tpu.memory_space<vmem>>, vector<8x256xf32>,
    %c2_i32_36 = arith.constant 2 : i32
    %69 = tpu.dynamic_rotate %53 by %c2_i32_36 dim 1 : vector<8x256xf32>, i32 -> vector<8x256xf32>
    %70 = vector.extract_strided_slice %0 {offsets = [3, 0], sizes = [1, 256], strides = [1, 1]} : vector<9x256xf32> to vector<1x256xf32>
    %71 = vector.broadcast %70 : vector<1x256xf32> to vector<8x256xf32>
    %72 = arith.mulf %69, %71 : vector<8x256xf32>
    %c24_37 = arith.constant 24 : index
    %c0_38 = arith.constant 0 : index
    %73 = vector.load %arg8[%c24_37, %c0_38] : memref<73x256xf32, #tpu.memory_space<vmem>>, vector<8x256xf32>
    tpu.vector_store %arg8[%c24_37, %c0_38], %72 {strides = array<i32>} : memref<73x256xf32, #tpu.memory_space<vmem>>, vector<8x256xf32>,
    %c32_39 = arith.constant 32 : index
    %c0_40 = arith.constant 0 : index
    %74 = vector.load %arg8[%c32_39, %c0_40] : memref<73x256xf32, #tpu.memory_space<vmem>>, vector<8x256xf32>
    tpu.vector_store %arg8[%c32_39, %c0_40], %53 {strides = array<i32>} : memref<73x256xf32, #tpu.memory_space<vmem>>, vector<8x256xf32>,
    %c254_i32_41 = arith.constant 254 : i32
    %75 = tpu.dynamic_rotate %53 by %c254_i32_41 dim 1 : vector<8x256xf32>, i32 -> vector<8x256xf32>
    %76 = vector.extract_strided_slice %0 {offsets = [5, 0], sizes = [1, 256], strides = [1, 1]} : vector<9x256xf32> to vector<1x256xf32>
    %77 = vector.broadcast %76 : vector<1x256xf32> to vector<8x256xf32>
    %78 = arith.mulf %75, %77 : vector<8x256xf32>
    %c40 = arith.constant 40 : index
    %c0_42 = arith.constant 0 : index
    %79 = vector.load %arg8[%c40, %c0_42] : memref<73x256xf32, #tpu.memory_space<vmem>>, vector<8x256xf32>
    tpu.vector_store %arg8[%c40, %c0_42], %78 {strides = array<i32>} : memref<73x256xf32, #tpu.memory_space<vmem>>, vector<8x256xf32>,
    %c226_i32_43 = arith.constant 226 : i32
    %80 = tpu.dynamic_rotate %53 by %c226_i32_43 dim 1 : vector<8x256xf32>, i32 -> vector<8x256xf32>
    %81 = vector.extract_strided_slice %0 {offsets = [6, 0], sizes = [1, 256], strides = [1, 1]} : vector<9x256xf32> to vector<1x256xf32>
    %82 = vector.broadcast %81 : vector<1x256xf32> to vector<8x256xf32>
    %83 = arith.mulf %80, %82 : vector<8x256xf32>
    %c48 = arith.constant 48 : index
    %c0_44 = arith.constant 0 : index
    %84 = vector.load %arg8[%c48, %c0_44] : memref<73x256xf32, #tpu.memory_space<vmem>>, vector<8x256xf32>
    tpu.vector_store %arg8[%c48, %c0_44], %83 {strides = array<i32>} : memref<73x256xf32, #tpu.memory_space<vmem>>, vector<8x256xf32>,
    %c224_i32_45 = arith.constant 224 : i32
    %85 = tpu.dynamic_rotate %53 by %c224_i32_45 dim 1 : vector<8x256xf32>, i32 -> vector<8x256xf32>
    %86 = vector.extract_strided_slice %0 {offsets = [7, 0], sizes = [1, 256], strides = [1, 1]} : vector<9x256xf32> to vector<1x256xf32>
    %87 = vector.broadcast %86 : vector<1x256xf32> to vector<8x256xf32>
    %88 = arith.mulf %85, %87 : vector<8x256xf32>
    %c56 = arith.constant 56 : index
    %c0_46 = arith.constant 0 : index
    %89 = vector.load %arg8[%c56, %c0_46] : memref<73x256xf32, #tpu.memory_space<vmem>>, vector<8x256xf32>
    tpu.vector_store %arg8[%c56, %c0_46], %88 {strides = array<i32>} : memref<73x256xf32, #tpu.memory_space<vmem>>, vector<8x256xf32>,
    %c222_i32_47 = arith.constant 222 : i32
    %90 = tpu.dynamic_rotate %53 by %c222_i32_47 dim 1 : vector<8x256xf32>, i32 -> vector<8x256xf32>
    %91 = vector.extract_strided_slice %0 {offsets = [8, 0], sizes = [1, 256], strides = [1, 1]} : vector<9x256xf32> to vector<1x256xf32>
    %92 = vector.broadcast %91 : vector<1x256xf32> to vector<8x256xf32>
    %93 = arith.mulf %90, %92 : vector<8x256xf32>
    %c64 = arith.constant 64 : index
    %c0_48 = arith.constant 0 : index
    %94 = vector.load %arg8[%c64, %c0_48] : memref<73x256xf32, #tpu.memory_space<vmem>>, vector<8x256xf32>
    tpu.vector_store %arg8[%c64, %c0_48], %93 {strides = array<i32>} : memref<73x256xf32, #tpu.memory_space<vmem>>, vector<8x256xf32>,
    %c72 = arith.constant 72 : index
    %c0_49 = arith.constant 0 : index
    %95 = vector.load %arg8[%c72, %c0_49] : memref<73x256xf32, #tpu.memory_space<vmem>>, vector<1x256xf32>
    tpu.vector_store %arg8[%c72, %c0_49], %5 {strides = array<i32>} : memref<73x256xf32, #tpu.memory_space<vmem>>, vector<1x256xf32>,
    %c0_50 = arith.constant 0 : index
    %c0_51 = arith.constant 0 : index
    %96 = vector.load %arg8[%c0_50, %c0_51] : memref<73x256xf32, #tpu.memory_space<vmem>>, vector<73x256xf32>
    %cst_52 = arith.constant dense<0.000000e+00> : vector<72x256xf32>
    %97 = tpu.matmul %2, %96, %cst_52 {dimension_numbers = #tpu.dot_dimension_numbers<[1], [0], [0], [1], [0, 0, 1, 1], [], []>, precision = #tpu.contract_precision<fp32>} : vector<72x73xf32>, vector<73x256xf32>, vector<72x256xf32> -> vector<72x256xf32>
    %98 = vector.extract_strided_slice %97 {offsets = [0, 0], sizes = [8, 256], strides = [1, 1]} : vector<72x256xf32> to vector<8x256xf32>
    %99 = vector.extract_strided_slice %97 {offsets = [8, 0], sizes = [64, 256], strides = [1, 1]} : vector<72x256xf32> to vector<64x256xf32>
    %cst_53 = arith.constant dense<0xFF800000> : vector<64xf32>
    %100 = vector.multi_reduction <maximumf>, %99, %cst_53 [1] : vector<64x256xf32> to vector<64xf32>
    %101 = vector.shape_cast %100 : vector<64xf32> to vector<64x1xf32>
    %102 = vector.broadcast %101 : vector<64x1xf32> to vector<64x256xf32>
    %103 = arith.subf %99, %102 : vector<64x256xf32>
    %104 = math.exp %103 : vector<64x256xf32>
    %cst_54 = arith.constant dense<0.000000e+00> : vector<64xf32>
    %105 = vector.multi_reduction <add>, %104, %cst_54 [1] : vector<64x256xf32> to vector<64xf32>
    %106 = vector.shape_cast %105 : vector<64xf32> to vector<64x1xf32>
    %cst_55 = arith.constant 1.000000e+00 : f32
    %107 = vector.broadcast %cst_55 : f32 to vector<64x1xf32>
    %108 = arith.divf %107, %106 : vector<64x1xf32>
    %109 = vector.broadcast %108 : vector<64x1xf32> to vector<64x256xf32>
    %110 = arith.mulf %104, %109 : vector<64x256xf32>
    %cst_56 = arith.constant dense<0.000000e+00> : vector<256xf32>
    %111 = vector.multi_reduction <add>, %110, %cst_56 [0] : vector<64x256xf32> to vector<256xf32>
    %112 = vector.shape_cast %111 : vector<256xf32> to vector<1x256xf32>
    %cst_57 = arith.constant 9.99999971E-10 : f32
    %113 = vector.broadcast %cst_57 : f32 to vector<1x256xf32>
    %114 = arith.addf %113, %112 : vector<1x256xf32>
    %cst_58 = arith.constant 1.000000e+00 : f32
    %115 = vector.broadcast %cst_58 : f32 to vector<1x256xf32>
    %116 = arith.divf %115, %114 : vector<1x256xf32>
    %cst_59 = arith.constant dense<0.000000e+00> : vector<8x256xf32>
    %117 = tpu.matmul %3, %110, %cst_59 {dimension_numbers = #tpu.dot_dimension_numbers<[1], [0], [0], [1], [0, 0, 1, 1], [], []>, precision = #tpu.contract_precision<fp32>} : vector<8x64xf32>, vector<64x256xf32>, vector<8x256xf32> -> vector<8x256xf32>
    %118 = vector.broadcast %116 : vector<1x256xf32> to vector<8x256xf32>
    %119 = arith.mulf %117, %118 : vector<8x256xf32>
    %120 = vector.broadcast %4 : vector<8x1xf32> to vector<8x256xf32>
    %121 = arith.addf %119, %120 : vector<8x256xf32>
    %122 = arith.addf %121, %98 : vector<8x256xf32>
    %cst_60 = arith.constant 0.000000e+00 : f32
    %123 = vector.broadcast %cst_60 : f32 to vector<8x256xf32>
    %124 = arith.maximumf %122, %123 : vector<8x256xf32>
    %125 = tpu.concatenate %7, %124 in 0 : vector<4x256xf32>, vector<8x256xf32> -> vector<12x256xf32>
    %c0_61 = arith.constant 0 : index
    %c0_62 = arith.constant 0 : index
    %c0_63 = arith.constant 0 : index
    %126 = vector.load %arg7[%c0_61, %c0_62, %c0_63] : memref<2x12x256xf32, #tpu.memory_space<vmem>>, vector<1x12x256xf32>
    %127 = vector.shape_cast %126 : vector<1x12x256xf32> to vector<12x256xf32>
    %128 = vector.shape_cast %125 : vector<12x256xf32> to vector<1x12x256xf32>
    tpu.vector_store %arg7[%c0_61, %c0_62, %c0_63], %128 {strides = array<i32>} : memref<2x12x256xf32, #tpu.memory_space<vmem>>, vector<1x12x256xf32>,
    %c1 = arith.constant 1 : index
    %c0_64 = arith.constant 0 : index
    %c0_65 = arith.constant 0 : index
    %129 = vector.load %arg1[%c1, %c0_64, %c0_65] : memref<2x4x256xf32, #tpu.memory_space<vmem>>, vector<1x4x256xf32>
    %130 = vector.shape_cast %129 : vector<1x4x256xf32> to vector<4x256xf32>
    %c34_i32_66 = arith.constant 34 : i32
    %131 = tpu.dynamic_rotate %130 by %c34_i32_66 dim 1 : vector<4x256xf32>, i32 -> vector<4x256xf32>
    %132 = vector.extract_strided_slice %0 {offsets = [0, 0], sizes = [1, 256], strides = [1, 1]} : vector<9x256xf32> to vector<1x256xf32>
    %133 = vector.broadcast %132 : vector<1x256xf32> to vector<4x256xf32>
    %134 = arith.mulf %131, %133 : vector<4x256xf32>
    %c0_67 = arith.constant 0 : index
    %c0_68 = arith.constant 0 : index
    %135 = vector.load %arg8[%c0_67, %c0_68] : memref<73x256xf32, #tpu.memory_space<vmem>>, vector<4x256xf32>
    tpu.vector_store %arg8[%c0_67, %c0_68], %134 {strides = array<i32>} : memref<73x256xf32, #tpu.memory_space<vmem>>, vector<4x256xf32>,
    %c32_i32_69 = arith.constant 32 : i32
    %136 = tpu.dynamic_rotate %130 by %c32_i32_69 dim 1 : vector<4x256xf32>, i32 -> vector<4x256xf32>
    %137 = vector.extract_strided_slice %0 {offsets = [1, 0], sizes = [1, 256], strides = [1, 1]} : vector<9x256xf32> to vector<1x256xf32>
    %138 = vector.broadcast %137 : vector<1x256xf32> to vector<4x256xf32>
    %139 = arith.mulf %136, %138 : vector<4x256xf32>
    %c4_70 = arith.constant 4 : index
    %c0_71 = arith.constant 0 : index
    %140 = vector.load %arg8[%c4_70, %c0_71] : memref<73x256xf32, #tpu.memory_space<vmem>>, vector<4x256xf32>
    tpu.vector_store %arg8[%c4_70, %c0_71], %139 {strides = array<i32>} : memref<73x256xf32, #tpu.memory_space<vmem>>, vector<4x256xf32>,
    %c30_i32_72 = arith.constant 30 : i32
    %141 = tpu.dynamic_rotate %130 by %c30_i32_72 dim 1 : vector<4x256xf32>, i32 -> vector<4x256xf32>
    %142 = vector.extract_strided_slice %0 {offsets = [2, 0], sizes = [1, 256], strides = [1, 1]} : vector<9x256xf32> to vector<1x256xf32>
    %143 = vector.broadcast %142 : vector<1x256xf32> to vector<4x256xf32>
    %144 = arith.mulf %141, %143 : vector<4x256xf32>
    %c8_73 = arith.constant 8 : index
    %c0_74 = arith.constant 0 : index
    %145 = vector.load %arg8[%c8_73, %c0_74] : memref<73x256xf32, #tpu.memory_space<vmem>>, vector<4x256xf32>
    tpu.vector_store %arg8[%c8_73, %c0_74], %144 {strides = array<i32>} : memref<73x256xf32, #tpu.memory_space<vmem>>, vector<4x256xf32>,
    %c2_i32_75 = arith.constant 2 : i32
    %146 = tpu.dynamic_rotate %130 by %c2_i32_75 dim 1 : vector<4x256xf32>, i32 -> vector<4x256xf32>
    %147 = vector.extract_strided_slice %0 {offsets = [3, 0], sizes = [1, 256], strides = [1, 1]} : vector<9x256xf32> to vector<1x256xf32>
    %148 = vector.broadcast %147 : vector<1x256xf32> to vector<4x256xf32>
    %149 = arith.mulf %146, %148 : vector<4x256xf32>
    %c12_76 = arith.constant 12 : index
    %c0_77 = arith.constant 0 : index
    %150 = vector.load %arg8[%c12_76, %c0_77] : memref<73x256xf32, #tpu.memory_space<vmem>>, vector<4x256xf32>
    tpu.vector_store %arg8[%c12_76, %c0_77], %149 {strides = array<i32>} : memref<73x256xf32, #tpu.memory_space<vmem>>, vector<4x256xf32>,
    %c16_78 = arith.constant 16 : index
    %c0_79 = arith.constant 0 : index
    %151 = vector.load %arg8[%c16_78, %c0_79] : memref<73x256xf32, #tpu.memory_space<vmem>>, vector<4x256xf32>
    tpu.vector_store %arg8[%c16_78, %c0_79], %130 {strides = array<i32>} : memref<73x256xf32, #tpu.memory_space<vmem>>, vector<4x256xf32>,
    %c254_i32_80 = arith.constant 254 : i32
    %152 = tpu.dynamic_rotate %130 by %c254_i32_80 dim 1 : vector<4x256xf32>, i32 -> vector<4x256xf32>
    %153 = vector.extract_strided_slice %0 {offsets = [5, 0], sizes = [1, 256], strides = [1, 1]} : vector<9x256xf32> to vector<1x256xf32>
    %154 = vector.broadcast %153 : vector<1x256xf32> to vector<4x256xf32>
    %155 = arith.mulf %152, %154 : vector<4x256xf32>
    %c20_81 = arith.constant 20 : index
    %c0_82 = arith.constant 0 : index
    %156 = vector.load %arg8[%c20_81, %c0_82] : memref<73x256xf32, #tpu.memory_space<vmem>>, vector<4x256xf32>
    tpu.vector_store %arg8[%c20_81, %c0_82], %155 {strides = array<i32>} : memref<73x256xf32, #tpu.memory_space<vmem>>, vector<4x256xf32>,
    %c226_i32_83 = arith.constant 226 : i32
    %157 = tpu.dynamic_rotate %130 by %c226_i32_83 dim 1 : vector<4x256xf32>, i32 -> vector<4x256xf32>
    %158 = vector.extract_strided_slice %0 {offsets = [6, 0], sizes = [1, 256], strides = [1, 1]} : vector<9x256xf32> to vector<1x256xf32>
    %159 = vector.broadcast %158 : vector<1x256xf32> to vector<4x256xf32>
    %160 = arith.mulf %157, %159 : vector<4x256xf32>
    %c24_84 = arith.constant 24 : index
    %c0_85 = arith.constant 0 : index
    %161 = vector.load %arg8[%c24_84, %c0_85] : memref<73x256xf32, #tpu.memory_space<vmem>>, vector<4x256xf32>
    tpu.vector_store %arg8[%c24_84, %c0_85], %160 {strides = array<i32>} : memref<73x256xf32, #tpu.memory_space<vmem>>, vector<4x256xf32>,
    %c224_i32_86 = arith.constant 224 : i32
    %162 = tpu.dynamic_rotate %130 by %c224_i32_86 dim 1 : vector<4x256xf32>, i32 -> vector<4x256xf32>
    %163 = vector.extract_strided_slice %0 {offsets = [7, 0], sizes = [1, 256], strides = [1, 1]} : vector<9x256xf32> to vector<1x256xf32>
    %164 = vector.broadcast %163 : vector<1x256xf32> to vector<4x256xf32>
    %165 = arith.mulf %162, %164 : vector<4x256xf32>
    %c28_87 = arith.constant 28 : index
    %c0_88 = arith.constant 0 : index
    %166 = vector.load %arg8[%c28_87, %c0_88] : memref<73x256xf32, #tpu.memory_space<vmem>>, vector<4x256xf32>
    tpu.vector_store %arg8[%c28_87, %c0_88], %165 {strides = array<i32>} : memref<73x256xf32, #tpu.memory_space<vmem>>, vector<4x256xf32>,
    %c222_i32_89 = arith.constant 222 : i32
    %167 = tpu.dynamic_rotate %130 by %c222_i32_89 dim 1 : vector<4x256xf32>, i32 -> vector<4x256xf32>
    %168 = vector.extract_strided_slice %0 {offsets = [8, 0], sizes = [1, 256], strides = [1, 1]} : vector<9x256xf32> to vector<1x256xf32>
    %169 = vector.broadcast %168 : vector<1x256xf32> to vector<4x256xf32>
    %170 = arith.mulf %167, %169 : vector<4x256xf32>
    %c32_90 = arith.constant 32 : index
    %c0_91 = arith.constant 0 : index
    %171 = vector.load %arg8[%c32_90, %c0_91] : memref<73x256xf32, #tpu.memory_space<vmem>>, vector<4x256xf32>
    tpu.vector_store %arg8[%c32_90, %c0_91], %170 {strides = array<i32>} : memref<73x256xf32, #tpu.memory_space<vmem>>, vector<4x256xf32>,
    %c36_92 = arith.constant 36 : index
    %c0_93 = arith.constant 0 : index
    %172 = vector.load %arg8[%c36_92, %c0_93] : memref<73x256xf32, #tpu.memory_space<vmem>>, vector<1x256xf32>
    tpu.vector_store %arg8[%c36_92, %c0_93], %5 {strides = array<i32>} : memref<73x256xf32, #tpu.memory_space<vmem>>, vector<1x256xf32>,
    %c0_94 = arith.constant 0 : index
    %c0_95 = arith.constant 0 : index
    %173 = vector.load %arg8[%c0_94, %c0_95] : memref<73x256xf32, #tpu.memory_space<vmem>>, vector<37x256xf32>
    %cst_96 = arith.constant dense<0.000000e+00> : vector<8x256xf32>
    %174 = tpu.matmul %1, %173, %cst_96 {dimension_numbers = #tpu.dot_dimension_numbers<[1], [0], [0], [1], [0, 0, 1, 1], [], []>, precision = #tpu.contract_precision<fp32>} : vector<8x37xf32>, vector<37x256xf32>, vector<8x256xf32> -> vector<8x256xf32>
    %cst_97 = arith.constant 0.000000e+00 : f32
    %175 = vector.broadcast %cst_97 : f32 to vector<8x256xf32>
    %176 = arith.maximumf %174, %175 : vector<8x256xf32>
    %c34_i32_98 = arith.constant 34 : i32
    %177 = tpu.dynamic_rotate %176 by %c34_i32_98 dim 1 : vector<8x256xf32>, i32 -> vector<8x256xf32>
    %178 = vector.extract_strided_slice %0 {offsets = [0, 0], sizes = [1, 256], strides = [1, 1]} : vector<9x256xf32> to vector<1x256xf32>
    %179 = vector.broadcast %178 : vector<1x256xf32> to vector<8x256xf32>
    %180 = arith.mulf %177, %179 : vector<8x256xf32>
    %c0_99 = arith.constant 0 : index
    %c0_100 = arith.constant 0 : index
    %181 = vector.load %arg8[%c0_99, %c0_100] : memref<73x256xf32, #tpu.memory_space<vmem>>, vector<8x256xf32>
    tpu.vector_store %arg8[%c0_99, %c0_100], %180 {strides = array<i32>} : memref<73x256xf32, #tpu.memory_space<vmem>>, vector<8x256xf32>,
    %c32_i32_101 = arith.constant 32 : i32
    %182 = tpu.dynamic_rotate %176 by %c32_i32_101 dim 1 : vector<8x256xf32>, i32 -> vector<8x256xf32>
    %183 = vector.extract_strided_slice %0 {offsets = [1, 0], sizes = [1, 256], strides = [1, 1]} : vector<9x256xf32> to vector<1x256xf32>
    %184 = vector.broadcast %183 : vector<1x256xf32> to vector<8x256xf32>
    %185 = arith.mulf %182, %184 : vector<8x256xf32>
    %c8_102 = arith.constant 8 : index
    %c0_103 = arith.constant 0 : index
    %186 = vector.load %arg8[%c8_102, %c0_103] : memref<73x256xf32, #tpu.memory_space<vmem>>, vector<8x256xf32>
    tpu.vector_store %arg8[%c8_102, %c0_103], %185 {strides = array<i32>} : memref<73x256xf32, #tpu.memory_space<vmem>>, vector<8x256xf32>,
    %c30_i32_104 = arith.constant 30 : i32
    %187 = tpu.dynamic_rotate %176 by %c30_i32_104 dim 1 : vector<8x256xf32>, i32 -> vector<8x256xf32>
    %188 = vector.extract_strided_slice %0 {offsets = [2, 0], sizes = [1, 256], strides = [1, 1]} : vector<9x256xf32> to vector<1x256xf32>
    %189 = vector.broadcast %188 : vector<1x256xf32> to vector<8x256xf32>
    %190 = arith.mulf %187, %189 : vector<8x256xf32>
    %c16_105 = arith.constant 16 : index
    %c0_106 = arith.constant 0 : index
    %191 = vector.load %arg8[%c16_105, %c0_106] : memref<73x256xf32, #tpu.memory_space<vmem>>, vector<8x256xf32>
    tpu.vector_store %arg8[%c16_105, %c0_106], %190 {strides = array<i32>} : memref<73x256xf32, #tpu.memory_space<vmem>>, vector<8x256xf32>,
    %c2_i32_107 = arith.constant 2 : i32
    %192 = tpu.dynamic_rotate %176 by %c2_i32_107 dim 1 : vector<8x256xf32>, i32 -> vector<8x256xf32>
    %193 = vector.extract_strided_slice %0 {offsets = [3, 0], sizes = [1, 256], strides = [1, 1]} : vector<9x256xf32> to vector<1x256xf32>
    %194 = vector.broadcast %193 : vector<1x256xf32> to vector<8x256xf32>
    %195 = arith.mulf %192, %194 : vector<8x256xf32>
    %c24_108 = arith.constant 24 : index
    %c0_109 = arith.constant 0 : index
    %196 = vector.load %arg8[%c24_108, %c0_109] : memref<73x256xf32, #tpu.memory_space<vmem>>, vector<8x256xf32>
    tpu.vector_store %arg8[%c24_108, %c0_109], %195 {strides = array<i32>} : memref<73x256xf32, #tpu.memory_space<vmem>>, vector<8x256xf32>,
    %c32_110 = arith.constant 32 : index
    %c0_111 = arith.constant 0 : index
    %197 = vector.load %arg8[%c32_110, %c0_111] : memref<73x256xf32, #tpu.memory_space<vmem>>, vector<8x256xf32>
    tpu.vector_store %arg8[%c32_110, %c0_111], %176 {strides = array<i32>} : memref<73x256xf32, #tpu.memory_space<vmem>>, vector<8x256xf32>,
    %c254_i32_112 = arith.constant 254 : i32
    %198 = tpu.dynamic_rotate %176 by %c254_i32_112 dim 1 : vector<8x256xf32>, i32 -> vector<8x256xf32>
    %199 = vector.extract_strided_slice %0 {offsets = [5, 0], sizes = [1, 256], strides = [1, 1]} : vector<9x256xf32> to vector<1x256xf32>
    %200 = vector.broadcast %199 : vector<1x256xf32> to vector<8x256xf32>
    %201 = arith.mulf %198, %200 : vector<8x256xf32>
    %c40_113 = arith.constant 40 : index
    %c0_114 = arith.constant 0 : index
    %202 = vector.load %arg8[%c40_113, %c0_114] : memref<73x256xf32, #tpu.memory_space<vmem>>, vector<8x256xf32>
    tpu.vector_store %arg8[%c40_113, %c0_114], %201 {strides = array<i32>} : memref<73x256xf32, #tpu.memory_space<vmem>>, vector<8x256xf32>,
    %c226_i32_115 = arith.constant 226 : i32
    %203 = tpu.dynamic_rotate %176 by %c226_i32_115 dim 1 : vector<8x256xf32>, i32 -> vector<8x256xf32>
    %204 = vector.extract_strided_slice %0 {offsets = [6, 0], sizes = [1, 256], strides = [1, 1]} : vector<9x256xf32> to vector<1x256xf32>
    %205 = vector.broadcast %204 : vector<1x256xf32> to vector<8x256xf32>
    %206 = arith.mulf %203, %205 : vector<8x256xf32>
    %c48_116 = arith.constant 48 : index
    %c0_117 = arith.constant 0 : index
    %207 = vector.load %arg8[%c48_116, %c0_117] : memref<73x256xf32, #tpu.memory_space<vmem>>, vector<8x256xf32>
    tpu.vector_store %arg8[%c48_116, %c0_117], %206 {strides = array<i32>} : memref<73x256xf32, #tpu.memory_space<vmem>>, vector<8x256xf32>,
    %c224_i32_118 = arith.constant 224 : i32
    %208 = tpu.dynamic_rotate %176 by %c224_i32_118 dim 1 : vector<8x256xf32>, i32 -> vector<8x256xf32>
    %209 = vector.extract_strided_slice %0 {offsets = [7, 0], sizes = [1, 256], strides = [1, 1]} : vector<9x256xf32> to vector<1x256xf32>
    %210 = vector.broadcast %209 : vector<1x256xf32> to vector<8x256xf32>
    %211 = arith.mulf %208, %210 : vector<8x256xf32>
    %c56_119 = arith.constant 56 : index
    %c0_120 = arith.constant 0 : index
    %212 = vector.load %arg8[%c56_119, %c0_120] : memref<73x256xf32, #tpu.memory_space<vmem>>, vector<8x256xf32>
    tpu.vector_store %arg8[%c56_119, %c0_120], %211 {strides = array<i32>} : memref<73x256xf32, #tpu.memory_space<vmem>>, vector<8x256xf32>,
    %c222_i32_121 = arith.constant 222 : i32
    %213 = tpu.dynamic_rotate %176 by %c222_i32_121 dim 1 : vector<8x256xf32>, i32 -> vector<8x256xf32>
    %214 = vector.extract_strided_slice %0 {offsets = [8, 0], sizes = [1, 256], strides = [1, 1]} : vector<9x256xf32> to vector<1x256xf32>
    %215 = vector.broadcast %214 : vector<1x256xf32> to vector<8x256xf32>
    %216 = arith.mulf %213, %215 : vector<8x256xf32>
    %c64_122 = arith.constant 64 : index
    %c0_123 = arith.constant 0 : index
    %217 = vector.load %arg8[%c64_122, %c0_123] : memref<73x256xf32, #tpu.memory_space<vmem>>, vector<8x256xf32>
    tpu.vector_store %arg8[%c64_122, %c0_123], %216 {strides = array<i32>} : memref<73x256xf32, #tpu.memory_space<vmem>>, vector<8x256xf32>,
    %c72_124 = arith.constant 72 : index
    %c0_125 = arith.constant 0 : index
    %218 = vector.load %arg8[%c72_124, %c0_125] : memref<73x256xf32, #tpu.memory_space<vmem>>, vector<1x256xf32>
    tpu.vector_store %arg8[%c72_124, %c0_125], %5 {strides = array<i32>} : memref<73x256xf32, #tpu.memory_space<vmem>>, vector<1x256xf32>,
    %c0_126 = arith.constant 0 : index
    %c0_127 = arith.constant 0 : index
    %219 = vector.load %arg8[%c0_126, %c0_127] : memref<73x256xf32, #tpu.memory_space<vmem>>, vector<73x256xf32>
    %cst_128 = arith.constant dense<0.000000e+00> : vector<72x256xf32>
    %220 = tpu.matmul %2, %219, %cst_128 {dimension_numbers = #tpu.dot_dimension_numbers<[1], [0], [0], [1], [0, 0, 1, 1], [], []>, precision = #tpu.contract_precision<fp32>} : vector<72x73xf32>, vector<73x256xf32>, vector<72x256xf32> -> vector<72x256xf32>
    %221 = vector.extract_strided_slice %220 {offsets = [0, 0], sizes = [8, 256], strides = [1, 1]} : vector<72x256xf32> to vector<8x256xf32>
    %222 = vector.extract_strided_slice %220 {offsets = [8, 0], sizes = [64, 256], strides = [1, 1]} : vector<72x256xf32> to vector<64x256xf32>
    %cst_129 = arith.constant dense<0xFF800000> : vector<64xf32>
    %223 = vector.multi_reduction <maximumf>, %222, %cst_129 [1] : vector<64x256xf32> to vector<64xf32>
    %224 = vector.shape_cast %223 : vector<64xf32> to vector<64x1xf32>
    %225 = vector.broadcast %224 : vector<64x1xf32> to vector<64x256xf32>
    %226 = arith.subf %222, %225 : vector<64x256xf32>
    %227 = math.exp %226 : vector<64x256xf32>
    %cst_130 = arith.constant dense<0.000000e+00> : vector<64xf32>
    %228 = vector.multi_reduction <add>, %227, %cst_130 [1] : vector<64x256xf32> to vector<64xf32>
    %229 = vector.shape_cast %228 : vector<64xf32> to vector<64x1xf32>
    %cst_131 = arith.constant 1.000000e+00 : f32
    %230 = vector.broadcast %cst_131 : f32 to vector<64x1xf32>
    %231 = arith.divf %230, %229 : vector<64x1xf32>
    %232 = vector.broadcast %231 : vector<64x1xf32> to vector<64x256xf32>
    %233 = arith.mulf %227, %232 : vector<64x256xf32>
    %cst_132 = arith.constant dense<0.000000e+00> : vector<256xf32>
    %234 = vector.multi_reduction <add>, %233, %cst_132 [0] : vector<64x256xf32> to vector<256xf32>
    %235 = vector.shape_cast %234 : vector<256xf32> to vector<1x256xf32>
    %cst_133 = arith.constant 9.99999971E-10 : f32
    %236 = vector.broadcast %cst_133 : f32 to vector<1x256xf32>
    %237 = arith.addf %236, %235 : vector<1x256xf32>
    %cst_134 = arith.constant 1.000000e+00 : f32
    %238 = vector.broadcast %cst_134 : f32 to vector<1x256xf32>
    %239 = arith.divf %238, %237 : vector<1x256xf32>
    %cst_135 = arith.constant dense<0.000000e+00> : vector<8x256xf32>
    %240 = tpu.matmul %3, %233, %cst_135 {dimension_numbers = #tpu.dot_dimension_numbers<[1], [0], [0], [1], [0, 0, 1, 1], [], []>, precision = #tpu.contract_precision<fp32>} : vector<8x64xf32>, vector<64x256xf32>, vector<8x256xf32> -> vector<8x256xf32>
    %241 = vector.broadcast %239 : vector<1x256xf32> to vector<8x256xf32>
    %242 = arith.mulf %240, %241 : vector<8x256xf32>
    %243 = vector.broadcast %4 : vector<8x1xf32> to vector<8x256xf32>
    %244 = arith.addf %242, %243 : vector<8x256xf32>
    %245 = arith.addf %244, %221 : vector<8x256xf32>
    %cst_136 = arith.constant 0.000000e+00 : f32
    %246 = vector.broadcast %cst_136 : f32 to vector<8x256xf32>
    %247 = arith.maximumf %245, %246 : vector<8x256xf32>
    %248 = tpu.concatenate %130, %247 in 0 : vector<4x256xf32>, vector<8x256xf32> -> vector<12x256xf32>
    %c1_137 = arith.constant 1 : index
    %c0_138 = arith.constant 0 : index
    %c0_139 = arith.constant 0 : index
    %249 = vector.load %arg7[%c1_137, %c0_138, %c0_139] : memref<2x12x256xf32, #tpu.memory_space<vmem>>, vector<1x12x256xf32>
    %250 = vector.shape_cast %249 : vector<1x12x256xf32> to vector<12x256xf32>
    %251 = vector.shape_cast %248 : vector<12x256xf32> to vector<1x12x256xf32>
    tpu.vector_store %arg7[%c1_137, %c0_138, %c0_139], %251 {strides = array<i32>} : memref<2x12x256xf32, #tpu.memory_space<vmem>>, vector<1x12x256xf32>,
    return
  }
  func.func @transform_0(%arg0: i32) -> (i32, i32, i32) {
    %c0_i32 = arith.constant 0 : i32
    %c0_i32_0 = arith.constant 0 : i32
    %c0_i32_1 = arith.constant 0 : i32
    %c0_i32_2 = arith.constant 0 : i32
    return %c0_i32, %c0_i32_0, %c0_i32_1 : i32, i32, i32
  }
  func.func @transform_1(%arg0: i32) -> (i32, i32) {
    %c0_i32 = arith.constant 0 : i32
    %c0_i32_0 = arith.constant 0 : i32
    %c0_i32_1 = arith.constant 0 : i32
    return %c0_i32, %c0_i32_0 : i32, i32
  }
  func.func @transform_2(%arg0: i32) -> (i32, i32) {
    %c0_i32 = arith.constant 0 : i32
    %c0_i32_0 = arith.constant 0 : i32
    %c0_i32_1 = arith.constant 0 : i32
    return %c0_i32, %c0_i32_0 : i32, i32
  }
  func.func @transform_3(%arg0: i32) -> (i32, i32) {
    %c0_i32 = arith.constant 0 : i32
    %c0_i32_0 = arith.constant 0 : i32
    %c0_i32_1 = arith.constant 0 : i32
    return %c0_i32, %c0_i32_0 : i32, i32
  }
  func.func @transform_4(%arg0: i32) -> (i32, i32) {
    %c0_i32 = arith.constant 0 : i32
    %c0_i32_0 = arith.constant 0 : i32
    %c0_i32_1 = arith.constant 0 : i32
    return %c0_i32, %c0_i32_0 : i32, i32
  }
  func.func @transform_5(%arg0: i32) -> (i32, i32) {
    %c0_i32 = arith.constant 0 : i32
    %c0_i32_0 = arith.constant 0 : i32
    %c0_i32_1 = arith.constant 0 : i32
    return %c0_i32, %c0_i32_0 : i32, i32
  }
  func.func @transform_6(%arg0: i32) -> (i32, i32, i32) {
    %c0_i32 = arith.constant 0 : i32
    %c0_i32_0 = arith.constant 0 : i32
    %c0_i32_1 = arith.constant 0 : i32
    %c0_i32_2 = arith.constant 0 : i32
    return %c0_i32, %c0_i32_0, %c0_i32_1 : i32, i32, i32
  }
}

</mosaic_0001>

<llo_original>
// kernel: dense_layer_forward.1
$region0: #{dense_layer_forward.1}
  #allocation0 [shape = 'u32[]', space=smem, size = 0x4, offset = 0x4, fixed_abs, tag = 'smem constant byte address 0x4 - core index']
  #allocation1 [shape = 'u32[144,128]{1,0:T(1,128)}', space=vmem, size = 0x12000, scoped, tag = 'internal scratch']
  #allocation2 [shape = 'f32[73,256]{1,0:T(8,128)}', space=vmem, size = 0x14000, scoped, tag = 'scratch operand']
  %s0 = inlined_call_operand.vmem [shape: f32[2,4,256], index: 0, kind: input, shape index: {}]
  %s1 = inlined_call_operand.vmem [shape: f32[9,256], index: 1, kind: input, shape index: {}]
  %s2 = inlined_call_operand.vmem [shape: f32[8,37], index: 2, kind: input, shape index: {}]
  %s3 = inlined_call_operand.vmem [shape: f32[72,73], index: 3, kind: input, shape index: {}]
  %s4 = inlined_call_operand.vmem [shape: f32[8,64], index: 4, kind: input, shape index: {}]
  %s5 = inlined_call_operand.vmem [shape: f32[8,1], index: 5, kind: input, shape index: {}]
  %s6 = inlined_call_operand.vmem [shape: f32[2,12,256], index: 6, kind: output, shape index: {}]
  %s7 = sld [smem:[#allocation0]]
  $region34: #{dense_layer_forward.1} parent=0
    _
  %s9 = ssub.s32 1, %s7
  %s10 = scalar_select 0, %s9, %s7
  // Predicated region
  $region2: #{dense_layer_forward.1} parent=0 // pred_check
    _
  $region3: #{dense_layer_forward.1} parent=0 // pred_check_branch
    %12 = sbr.rel (0) target = $region5
  $region4: #{dense_layer_forward.1} parent=0 // pred_region
    _
  $region5: #{dense_layer_forward.1} parent=0 // pred_fallthru
    _
  // Predicated region
  $region6: #{dense_layer_forward.1} parent=0 // pred_check
    _
  $region7: #{dense_layer_forward.1} parent=0 // pred_check_branch
    %14 = sbr.rel (0) target = $region9
  $region8: #{dense_layer_forward.1} parent=0 // pred_region
    _
  $region9: #{dense_layer_forward.1} parent=0 // pred_fallthru
    _
  // Predicated region
  $region10: #{dense_layer_forward.1} parent=0 // pred_check
    _
  $region11: #{dense_layer_forward.1} parent=0 // pred_check_branch
    %16 = sbr.rel (0) target = $region13
  $region12: #{dense_layer_forward.1} parent=0 // pred_region
    _
  $region13: #{dense_layer_forward.1} parent=0 // pred_fallthru
    _
  // Predicated region
  $region14: #{dense_layer_forward.1} parent=0 // pred_check
    _
  $region15: #{dense_layer_forward.1} parent=0 // pred_check_branch
    %18 = sbr.rel (0) target = $region17
  $region16: #{dense_layer_forward.1} parent=0 // pred_region
    _
  $region17: #{dense_layer_forward.1} parent=0 // pred_fallthru
    _
  // Predicated region
  $region18: #{dense_layer_forward.1} parent=0 // pred_check
    _
  $region19: #{dense_layer_forward.1} parent=0 // pred_check_branch
    %20 = sbr.rel (0) target = $region21
  $region20: #{dense_layer_forward.1} parent=0 // pred_region
    _
  $region21: #{dense_layer_forward.1} parent=0 // pred_fallthru
    _
  // Predicated region
  $region22: #{dense_layer_forward.1} parent=0 // pred_check
    _
  $region23: #{dense_layer_forward.1} parent=0 // pred_check_branch
    %22 = sbr.rel (0) target = $region25
  $region24: #{dense_layer_forward.1} parent=0 // pred_region
    _
  $region25: #{dense_layer_forward.1} parent=0 // pred_fallthru
    _
  %v23 = vld [vmem:[%s1] sm:$0xff]
  %v24 = vld [vmem:[%s1 + $0x8] sm:$0xff]
  %v25 = vld [vmem:[%s1 + $0x10] sm:$0x1]
  %v26 = vld [vmem:[%s1 + $0x18] sm:$0x1]
  %v27 = vld [vmem:[%s2] sm:$0xff]
  %v28 = vld [vmem:[%s3] sm:$0xff]
  %v29 = vld [vmem:[%s3 + $0x8] sm:$0xff]
  %v30 = vld [vmem:[%s3 + $0x10] sm:$0xff]
  %v31 = vld [vmem:[%s3 + $0x18] sm:$0xff]
  %v32 = vld [vmem:[%s3 + $0x20] sm:$0xff]
  %v33 = vld [vmem:[%s3 + $0x28] sm:$0xff]
  %v34 = vld [vmem:[%s3 + $0x30] sm:$0xff]
  %v35 = vld [vmem:[%s3 + $0x38] sm:$0xff]
  %v36 = vld [vmem:[%s3 + $0x40] sm:$0xff]
  %v37 = vld [vmem:[%s4] sm:$0xff]
  %v38 = vld [vmem:[%s5] sm:$0xff]
  %v39 = vld [vmem:[%s0] sm:$0xff]
  %v41 = vcombine.high %v39, %v39
  %43 = vrot.lane.b32.xlu0 %v39, 34
  %v44 = vpop.permute.xlu0 %43
  %45 = vrot.lane.b32.xlu0 %v41, 34
  %v46 = vpop.permute.xlu0 %45
  %v47 = vlaneseq
  %v48 = vand.u32 %v47, 127
  %vm49 = vcmp.lt.s32.totalorder %v48, 34
  %v50 = vsel %vm49, %v44, %v46
  %v51 = vsel %vm49, %v46, %v44
  %v52 = vlaneseq
  %v53 = vshrl.u32 %v52, 7
  %v54 = vsub.s32 0, %v53
  %v55 = vrot.slane %v23, %v54
  %v56 = vlaneseq
  %v57 = vshrl.u32 %v56, 7
  %v58 = vsub.s32 0, %v57
  %v59 = vrot.slane %v24, %v58
  %v60 = vmul.f32 %v51, %v55
  %v61 = vmul.f32 %v50, %v59
  %62 = vst [vmem:[#allocation2] sm:$0xf] %v60
  %63 = vst [vmem:[#allocation2 + $0x8] sm:$0xf] %v61
  %64 = vrot.lane.b32.xlu0 %v39, 32
  %v65 = vpop.permute.xlu0 %64
  %66 = vrot.lane.b32.xlu0 %v41, 32
  %v67 = vpop.permute.xlu0 %66
  %vm68 = vcmp.lt.s32.totalorder %v48, 32
  %v69 = vsel %vm68, %v65, %v67
  %v70 = vsel %vm68, %v67, %v65
  %v71 = vlaneseq
  %v72 = vshrl.u32 %v71, 7
  %v73 = vsub.s32 1, %v72
  %v74 = vrot.slane %v23, %v73
  %v75 = vlaneseq
  %v76 = vshrl.u32 %v75, 7
  %v77 = vsub.s32 1, %v76
  %v78 = vrot.slane %v24, %v77
  %v79 = vmul.f32 %v70, %v74
  %v80 = vmul.f32 %v69, %v78
  %v83 = vrot.slane %v79, 4
  %v84 = vrot.slane %v80, 4
  %87 = vst [vmem:[#allocation2] sm:$0xf0] %v83
  %88 = vst [vmem:[#allocation2 + $0x8] sm:$0xf0] %v84
  %89 = vrot.lane.b32.xlu0 %v39, 30
  %v90 = vpop.permute.xlu0 %89
  %91 = vrot.lane.b32.xlu0 %v41, 30
  %v92 = vpop.permute.xlu0 %91
  %vm93 = vcmp.lt.s32.totalorder %v48, 30
  %v94 = vsel %vm93, %v90, %v92
  %v95 = vsel %vm93, %v92, %v90
  %v96 = vlaneseq
  %v97 = vshrl.u32 %v96, 7
  %v98 = vsub.s32 2, %v97
  %v99 = vrot.slane %v23, %v98
  %v100 = vlaneseq
  %v101 = vshrl.u32 %v100, 7
  %v102 = vsub.s32 2, %v101
  %v103 = vrot.slane %v24, %v102
  %v104 = vmul.f32 %v95, %v99
  %v105 = vmul.f32 %v94, %v103
  %106 = vst [vmem:[#allocation2 + $0x10] sm:$0xf] %v104
  %107 = vst [vmem:[#allocation2 + $0x18] sm:$0xf] %v105
  %108 = vrot.lane.b32.xlu0 %v39, 2
  %v109 = vpop.permute.xlu0 %108
  %110 = vrot.lane.b32.xlu0 %v41, 2
  %v111 = vpop.permute.xlu0 %110
  %vm112 = vcmp.lt.s32.totalorder %v48, 2
  %v113 = vsel %vm112, %v109, %v111
  %v114 = vsel %vm112, %v111, %v109
  %v115 = vlaneseq
  %v116 = vshrl.u32 %v115, 7
  %v117 = vsub.s32 3, %v116
  %v118 = vrot.slane %v23, %v117
  %v119 = vlaneseq
  %v120 = vshrl.u32 %v119, 7
  %v121 = vsub.s32 3, %v120
  %v122 = vrot.slane %v24, %v121
  %v123 = vmul.f32 %v114, %v118
  %v124 = vmul.f32 %v113, %v122
  %v127 = vrot.slane %v123, 4
  %v128 = vrot.slane %v124, 4
  %131 = vst [vmem:[#allocation2 + $0x10] sm:$0xf0] %v127
  %132 = vst [vmem:[#allocation2 + $0x18] sm:$0xf0] %v128
  %133 = vst [vmem:[#allocation2 + $0x20] sm:$0xf] %v39
  %134 = vst [vmem:[#allocation2 + $0x28] sm:$0xf] %v41
  %135 = vrot.lane.b32.xlu0 %v39, 126
  %v136 = vpop.permute.xlu0 %135
  %137 = vrot.lane.b32.xlu0 %v41, 126
  %v138 = vpop.permute.xlu0 %137
  %vm139 = vcmp.lt.s32.totalorder %v48, 126
  %v140 = vsel %vm139, %v136, %v138
  %v141 = vsel %vm139, %v138, %v136
  %v142 = vlaneseq
  %v143 = vshrl.u32 %v142, 7
  %v144 = vsub.s32 5, %v143
  %v145 = vrot.slane %v23, %v144
  %v146 = vlaneseq
  %v147 = vshrl.u32 %v146, 7
  %v148 = vsub.s32 5, %v147
  %v149 = vrot.slane %v24, %v148
  %v150 = vmul.f32 %v140, %v145
  %v151 = vmul.f32 %v141, %v149
  %v154 = vrot.slane %v150, 4
  %v155 = vrot.slane %v151, 4
  %158 = vst [vmem:[#allocation2 + $0x20] sm:$0xf0] %v154
  %159 = vst [vmem:[#allocation2 + $0x28] sm:$0xf0] %v155
  %160 = vrot.lane.b32.xlu0 %v39, 98
  %v161 = vpop.permute.xlu0 %160
  %162 = vrot.lane.b32.xlu0 %v41, 98
  %v163 = vpop.permute.xlu0 %162
  %vm164 = vcmp.lt.s32.totalorder %v48, 98
  %v165 = vsel %vm164, %v161, %v163
  %v166 = vsel %vm164, %v163, %v161
  %v167 = vlaneseq
  %v168 = vshrl.u32 %v167, 7
  %v169 = vsub.s32 6, %v168
  %v170 = vrot.slane %v23, %v169
  %v171 = vlaneseq
  %v172 = vshrl.u32 %v171, 7
  %v173 = vsub.s32 6, %v172
  %v174 = vrot.slane %v24, %v173
  %v175 = vmul.f32 %v165, %v170
  %v176 = vmul.f32 %v166, %v174
  %177 = vst [vmem:[#allocation2 + $0x30] sm:$0xf] %v175
  %178 = vst [vmem:[#allocation2 + $0x38] sm:$0xf] %v176
  %179 = vrot.lane.b32.xlu0 %v39, 96
  %v180 = vpop.permute.xlu0 %179
  %181 = vrot.lane.b32.xlu0 %v41, 96
  %v182 = vpop.permute.xlu0 %181
  %vm183 = vcmp.lt.s32.totalorder %v48, 96
  %v184 = vsel %vm183, %v180, %v182
  %v185 = vsel %vm183, %v182, %v180
  %v186 = vlaneseq
  %v187 = vshrl.u32 %v186, 7
  %v188 = vsub.s32 7, %v187
  %v189 = vrot.slane %v23, %v188
  %v190 = vlaneseq
  %v191 = vshrl.u32 %v190, 7
  %v192 = vsub.s32 7, %v191
  %v193 = vrot.slane %v24, %v192
  %v194 = vmul.f32 %v184, %v189
  %v195 = vmul.f32 %v185, %v193
  %v198 = vrot.slane %v194, 4
  %v199 = vrot.slane %v195, 4
  %202 = vst [vmem:[#allocation2 + $0x30] sm:$0xf0] %v198
  %203 = vst [vmem:[#allocation2 + $0x38] sm:$0xf0] %v199
  %204 = vrot.lane.b32.xlu0 %v39, 94
  %v205 = vpop.permute.xlu0 %204
  %206 = vrot.lane.b32.xlu0 %v41, 94
  %v207 = vpop.permute.xlu0 %206
  %vm208 = vcmp.lt.s32.totalorder %v48, 94
  %v209 = vsel %vm208, %v205, %v207
  %v210 = vsel %vm208, %v207, %v205
  %v211 = vlaneseq
  %v212 = vshrl.u32 %v211, 7
  %v213 = vsub.s32 0, %v212
  %v214 = vrot.slane %v25, %v213
  %v215 = vlaneseq
  %v216 = vshrl.u32 %v215, 7
  %v217 = vsub.s32 0, %v216
  %v218 = vrot.slane %v26, %v217
  %v219 = vmul.f32 %v209, %v214
  %v220 = vmul.f32 %v210, %v218
  %221 = vst [vmem:[#allocation2 + $0x40] sm:$0xf] %v219
  %222 = vst [vmem:[#allocation2 + $0x48] sm:$0xf] %v220
  %v223 = vlaneseq
  %vm224 = vcmp.ge.s32.totalorder %v223, 0
  %vm225 = vcmp.lt.s32.totalorder %v223, 256
  %vm226 = vmand %vm224, %vm225
  %s227 = scalar_lea.vmem [#allocation2], 68
  %228 = vst.msk [vmem:[%s227] ss:$8 sm:$0x3] %vm226, 1.0
  %229 = vst.msk [vmem:[%s227] ss:$8 sm:$0x0] %vm226, 1.0
  %v230 = vld [vmem:[#allocation2] sm:$0xff]
  %v231 = vld [vmem:[#allocation2 + $0x8] sm:$0xff]
  %v232 = vld [vmem:[#allocation2 + $0x10] sm:$0xff]
  %v233 = vld [vmem:[#allocation2 + $0x18] sm:$0xff]
  %v234 = vld [vmem:[#allocation2 + $0x20] sm:$0xff]
  %v235 = vld [vmem:[#allocation2 + $0x28] sm:$0xff]
  %v236 = vld [vmem:[#allocation2 + $0x30] sm:$0xff]
  %v237 = vld [vmem:[#allocation2 + $0x38] sm:$0xff]
  %v238 = vld [vmem:[#allocation2 + $0x40] sm:$0x1f]
  %v239 = vld [vmem:[#allocation2 + $0x48] sm:$0x1f]
  %vm240 = vcmask 302080
  %v242 = vsel %vm240, %v27, 0
  %vm244 = vcmask 1044480
  %v246 = vsel %vm244, %v238, 0
  %v249 = vsel %vm244, %v239, 0
  %v251 = vand.u32 %v231, 4294901760
  %252 = vmatprep.subr.mxu0 %v251
  %v253 = vand.u32 %v230, 4294901760
  %254 = vmatpush1.msra.mxu0 %v253
  %v255 = vand.u32 %v233, 4294901760
  %256 = vmatprep.subr.mxu0 %v255
  %v257 = vand.u32 %v232, 4294901760
  %258 = vmatpush1.msra.mxu0 %v257
  %v259 = vand.u32 %v235, 4294901760
  %260 = vmatprep.subr.mxu0 %v259
  %v261 = vand.u32 %v234, 4294901760
  %262 = vmatpush1.msra.mxu0 %v261
  %v263 = vand.u32 %v237, 4294901760
  %264 = vmatprep.subr.mxu0 %v263
  %v265 = vand.u32 %v236, 4294901760
  %266 = vmatpush1.msra.mxu0 %v265
  %v267 = vand.u32 %v249, 4294901760
  %268 = vmatprep.subr.mxu0 %v267
  %v269 = vand.u32 %v246, 4294901760
  %270 = vmatpush1.msra.mxu0 %v269
  %271 = vmatprep.subr.mxu0 0.0
  %272 = vmatpush1.msra.mxu0 0.0
  %273 = vmatprep.subr.mxu0 0.0
  %274 = vmatpush1.msra.mxu0 0.0
  %275 = vmatprep.subr.mxu0 0.0
  %276 = vmatpush1.msra.mxu0 0.0
  %277 = vmatprep.subr.mxu0 0.0
  %278 = vmatpush1.msra.mxu0 0.0
  %279 = vmatprep.subr.mxu0 0.0
  %280 = vmatpush1.msra.mxu0 0.0
  %281 = vmatprep.subr.mxu0 0.0
  %282 = vmatpush1.msra.mxu0 0.0
  %283 = vmatprep.subr.mxu0 0.0
  %284 = vmatpush1.msra.mxu0 0.0
  %285 = vmatprep.subr.mxu0 0.0
  %286 = vmatpush1.msra.mxu0 0.0
  %287 = vmatprep.subr.mxu0 0.0
  %288 = vmatpush1.msra.mxu0 0.0
  %289 = vmatprep.subr.mxu0 0.0
  %290 = vmatpush1.msra.mxu0 0.0
  %291 = vmatprep.subr.mxu0 0.0
  %292 = vmatpush1.msra.mxu0 0.0
  %293 = vmatprep.subr.mxu0 0.0
  %294 = vmatpush1.msra.mxu0 0.0
  %295 = vmatprep.subr.mxu0 0.0
  %296 = vmatpush1.msra.mxu0 0.0
  %297 = vmatprep.subr.mxu0 0.0
  %298 = vmatpush1.msra.mxu0 0.0
  %299 = vmatprep.subr.mxu0 0.0
  %300 = vmatpush1.msra.mxu0 0.0
  %301 = vmatprep.subr.mxu0 0.0
  %302 = vmatpush1.msra.mxu0 0.0
  %303 = vmatprep.subr.mxu0 0.0
  %304 = vmatpush1.msra.mxu0 0.0
  %305 = vmatprep.subr.mxu0 0.0
  %306 = vmatpush1.msra.mxu0 0.0
  %307 = vmatprep.subr.mxu0 0.0
  %308 = vmatpush1.msra.mxu0 0.0
  %309 = vmatprep.subr.mxu0 0.0
  %310 = vmatpush1.msra.mxu0 0.0
  %311 = vmatprep.subr.mxu0 0.0
  %312 = vmatpush1.msra.mxu0 0.0
  %313 = vmatprep.subr.mxu0 0.0
  %314 = vmatpush1.msra.mxu0 0.0
  %315 = vmatprep.subr.mxu0 0.0
  %316 = vmatpush1.msra.mxu0 0.0
  %317 = vmatprep.subr.mxu0 0.0
  %318 = vmatpush1.msra.mxu0 0.0
  %319 = vmatprep.subr.mxu0 0.0
  %320 = vmatpush1.msra.mxu0 0.0
  %321 = vmatprep.subr.mxu0 0.0
  %322 = vmatpush1.msra.mxu0 0.0
  %323 = vmatprep.subr.mxu0 0.0
  %324 = vmatpush1.msra.mxu0 0.0
  %325 = vmatprep.mubr.f32.mxu0 0.0
  %v326 = vand.u32 %v242, 4294901760
  %v327 = vsub.f32 %v242, %v326
  %v328 = vand.u32 %v327, 4294901760
  %v329 = vsub.f32 %v327, %v328
  %v330 = vand.u32 %v329, 4294901760
  %331 = vmatmul.mubr.f32.gmra.mrb[0].mxu0 %v330
  %v332 = vpop.f32.mrb[0].mxu0
  %v333 = vadd.f32 0.0, %v332
  %v334 = vpop.f32.mrb[0].mxu0
  %v335 = vadd.f32 0.0, %v334
  %336 = vdwg.mxu0
  %v337 = vand.u32 %v231, 4294901760
  %v338 = vsub.f32 %v231, %v337
  %v339 = vand.u32 %v338, 4294901760
  %v340 = vsub.f32 %v338, %v339
  %v341 = vand.u32 %v340, 4294901760
  %342 = vmatprep.subr.mxu0 %v341
  %v343 = vand.u32 %v230, 4294901760
  %v344 = vsub.f32 %v230, %v343
  %v345 = vand.u32 %v344, 4294901760
  %v346 = vsub.f32 %v344, %v345
  %v347 = vand.u32 %v346, 4294901760
  %348 = vmatpush1.msra.mxu0 %v347
  %v349 = vand.u32 %v233, 4294901760
  %v350 = vsub.f32 %v233, %v349
  %v351 = vand.u32 %v350, 4294901760
  %v352 = vsub.f32 %v350, %v351
  %v353 = vand.u32 %v352, 4294901760
  %354 = vmatprep.subr.mxu0 %v353
  %v355 = vand.u32 %v232, 4294901760
  %v356 = vsub.f32 %v232, %v355
  %v357 = vand.u32 %v356, 4294901760
  %v358 = vsub.f32 %v356, %v357
  %v359 = vand.u32 %v358, 4294901760
  %360 = vmatpush1.msra.mxu0 %v359
  %v361 = vand.u32 %v235, 4294901760
  %v362 = vsub.f32 %v235, %v361
  %v363 = vand.u32 %v362, 4294901760
  %v364 = vsub.f32 %v362, %v363
  %v365 = vand.u32 %v364, 4294901760
  %366 = vmatprep.subr.mxu0 %v365
  %v367 = vand.u32 %v234, 4294901760
  %v368 = vsub.f32 %v234, %v367
  %v369 = vand.u32 %v368, 4294901760
  %v370 = vsub.f32 %v368, %v369
  %v371 = vand.u32 %v370, 4294901760
  %372 = vmatpush1.msra.mxu0 %v371
  %v373 = vand.u32 %v237, 4294901760
  %v374 = vsub.f32 %v237, %v373
  %v375 = vand.u32 %v374, 4294901760
  %v376 = vsub.f32 %v374, %v375
  %v377 = vand.u32 %v376, 4294901760
  %378 = vmatprep.subr.mxu0 %v377
  %v379 = vand.u32 %v236, 4294901760
  %v380 = vsub.f32 %v236, %v379
  %v381 = vand.u32 %v380, 4294901760
  %v382 = vsub.f32 %v380, %v381
  %v383 = vand.u32 %v382, 4294901760
  %384 = vmatpush1.msra.mxu0 %v383
  %v385 = vand.u32 %v249, 4294901760
  %v386 = vsub.f32 %v249, %v385
  %v387 = vand.u32 %v386, 4294901760
  %v388 = vsub.f32 %v386, %v387
  %v389 = vand.u32 %v388, 4294901760
  %390 = vmatprep.subr.mxu0 %v389
  %v391 = vand.u32 %v246, 4294901760
  %v392 = vsub.f32 %v246, %v391
  %v393 = vand.u32 %v392, 4294901760
  %v394 = vsub.f32 %v392, %v393
  %v395 = vand.u32 %v394, 4294901760
  %396 = vmatpush1.msra.mxu0 %v395
  %397 = vmatprep.subr.mxu0 0.0
  %398 = vmatpush1.msra.mxu0 0.0
  %399 = vmatprep.subr.mxu0 0.0
  %400 = vmatpush1.msra.mxu0 0.0
  %401 = vmatprep.subr.mxu0 0.0
  %402 = vmatpush1.msra.mxu0 0.0
  %403 = vmatprep.subr.mxu0 0.0
  %404 = vmatpush1.msra.mxu0 0.0
  %405 = vmatprep.subr.mxu0 0.0
  %406 = vmatpush1.msra.mxu0 0.0
  %407 = vmatprep.subr.mxu0 0.0
  %408 = vmatpush1.msra.mxu0 0.0
  %409 = vmatprep.subr.mxu0 0.0
  %410 = vmatpush1.msra.mxu0 0.0
  %411 = vmatprep.subr.mxu0 0.0
  %412 = vmatpush1.msra.mxu0 0.0
  %413 = vmatprep.subr.mxu0 0.0
  %414 = vmatpush1.msra.mxu0 0.0
  %415 = vmatprep.subr.mxu0 0.0
  %416 = vmatpush1.msra.mxu0 0.0
  %417 = vmatprep.subr.mxu0 0.0
  %418 = vmatpush1.msra.mxu0 0.0
  %419 = vmatprep.subr.mxu0 0.0
  %420 = vmatpush1.msra.mxu0 0.0
  %421 = vmatprep.subr.mxu0 0.0
  %422 = vmatpush1.msra.mxu0 0.0
  %423 = vmatprep.subr.mxu0 0.0
  %424 = vmatpush1.msra.mxu0 0.0
  %425 = vmatprep.subr.mxu0 0.0
  %426 = vmatpush1.msra.mxu0 0.0
  %427 = vmatprep.subr.mxu0 0.0
  %428 = vmatpush1.msra.mxu0 0.0
  %429 = vmatprep.subr.mxu0 0.0
  %430 = vmatpush1.msra.mxu0 0.0
  %431 = vmatprep.subr.mxu0 0.0
  %432 = vmatpush1.msra.mxu0 0.0
  %433 = vmatprep.subr.mxu0 0.0
  %434 = vmatpush1.msra.mxu0 0.0
  %435 = vmatprep.subr.mxu0 0.0
  %436 = vmatpush1.msra.mxu0 0.0
  %437 = vmatprep.subr.mxu0 0.0
  %438 = vmatpush1.msra.mxu0 0.0
  %439 = vmatprep.subr.mxu0 0.0
  %440 = vmatpush1.msra.mxu0 0.0
  %441 = vmatprep.subr.mxu0 0.0
  %442 = vmatpush1.msra.mxu0 0.0
  %443 = vmatprep.subr.mxu0 0.0
  %444 = vmatpush1.msra.mxu0 0.0
  %445 = vmatprep.subr.mxu0 0.0
  %446 = vmatpush1.msra.mxu0 0.0
  %447 = vmatprep.subr.mxu0 0.0
  %448 = vmatpush1.msra.mxu0 0.0
  %449 = vmatprep.subr.mxu0 0.0
  %450 = vmatpush1.msra.mxu0 0.0
  %451 = vmatprep.mubr.f32.mxu0 0.0
  %v452 = vand.u32 %v242, 4294901760
  %453 = vmatmul.mubr.f32.gmra.mrb[0].mxu0 %v452
  %v454 = vpop.f32.mrb[0].mxu0
  %v455 = vadd.f32 %v333, %v454
  %v456 = vpop.f32.mrb[0].mxu0
  %v457 = vadd.f32 %v335, %v456
  %458 = vdwg.mxu0
  %v459 = vand.u32 %v231, 4294901760
  %v460 = vsub.f32 %v231, %v459
  %461 = vmatprep.subr.mxu0 %v460
  %v462 = vand.u32 %v230, 4294901760
  %v463 = vsub.f32 %v230, %v462
  %464 = vmatpush1.msra.mxu0 %v463
  %v465 = vand.u32 %v233, 4294901760
  %v466 = vsub.f32 %v233, %v465
  %467 = vmatprep.subr.mxu0 %v466
  %v468 = vand.u32 %v232, 4294901760
  %v469 = vsub.f32 %v232, %v468
  %470 = vmatpush1.msra.mxu0 %v469
  %v471 = vand.u32 %v235, 4294901760
  %v472 = vsub.f32 %v235, %v471
  %473 = vmatprep.subr.mxu0 %v472
  %v474 = vand.u32 %v234, 4294901760
  %v475 = vsub.f32 %v234, %v474
  %476 = vmatpush1.msra.mxu0 %v475
  %v477 = vand.u32 %v237, 4294901760
  %v478 = vsub.f32 %v237, %v477
  %479 = vmatprep.subr.mxu0 %v478
  %v480 = vand.u32 %v236, 4294901760
  %v481 = vsub.f32 %v236, %v480
  %482 = vmatpush1.msra.mxu0 %v481
  %v483 = vand.u32 %v249, 4294901760
  %v484 = vsub.f32 %v249, %v483
  %485 = vmatprep.subr.mxu0 %v484
  %v486 = vand.u32 %v246, 4294901760
  %v487 = vsub.f32 %v246, %v486
  %488 = vmatpush1.msra.mxu0 %v487
  %489 = vmatprep.subr.mxu0 0.0
  %490 = vmatpush1.msra.mxu0 0.0
  %491 = vmatprep.subr.mxu0 0.0
  %492 = vmatpush1.msra.mxu0 0.0
  %493 = vmatprep.subr.mxu0 0.0
  %494 = vmatpush1.msra.mxu0 0.0
  %495 = vmatprep.subr.mxu0 0.0
  %496 = vmatpush1.msra.mxu0 0.0
  %497 = vmatprep.subr.mxu0 0.0
  %498 = vmatpush1.msra.mxu0 0.0
  %499 = vmatprep.subr.mxu0 0.0
  %500 = vmatpush1.msra.mxu0 0.0
  %501 = vmatprep.subr.mxu0 0.0
  %502 = vmatpush1.msra.mxu0 0.0
  %503 = vmatprep.subr.mxu0 0.0
  %504 = vmatpush1.msra.mxu0 0.0
  %505 = vmatprep.subr.mxu0 0.0
  %506 = vmatpush1.msra.mxu0 0.0
  %507 = vmatprep.subr.mxu0 0.0
  %508 = vmatpush1.msra.mxu0 0.0
  %509 = vmatprep.subr.mxu0 0.0
  %510 = vmatpush1.msra.mxu0 0.0
  %511 = vmatprep.subr.mxu0 0.0
  %512 = vmatpush1.msra.mxu0 0.0
  %513 = vmatprep.subr.mxu0 0.0
  %514 = vmatpush1.msra.mxu0 0.0
  %515 = vmatprep.subr.mxu0 0.0
  %516 = vmatpush1.msra.mxu0 0.0
  %517 = vmatprep.subr.mxu0 0.0
  %518 = vmatpush1.msra.mxu0 0.0
  %519 = vmatprep.subr.mxu0 0.0
  %520 = vmatpush1.msra.mxu0 0.0
  %521 = vmatprep.subr.mxu0 0.0
  %522 = vmatpush1.msra.mxu0 0.0
  %523 = vmatprep.subr.mxu0 0.0
  %524 = vmatpush1.msra.mxu0 0.0
  %525 = vmatprep.subr.mxu0 0.0
  %526 = vmatpush1.msra.mxu0 0.0
  %527 = vmatprep.subr.mxu0 0.0
  %528 = vmatpush1.msra.mxu0 0.0
  %529 = vmatprep.subr.mxu0 0.0
  %530 = vmatpush1.msra.mxu0 0.0
  %531 = vmatprep.subr.mxu0 0.0
  %532 = vmatpush1.msra.mxu0 0.0
  %533 = vmatprep.subr.mxu0 0.0
  %534 = vmatpush1.msra.mxu0 0.0
  %535 = vmatprep.subr.mxu0 0.0
  %536 = vmatpush1.msra.mxu0 0.0
  %537 = vmatprep.subr.mxu0 0.0
  %538 = vmatpush1.msra.mxu0 0.0
  %539 = vmatprep.subr.mxu0 0.0
  %540 = vmatpush1.msra.mxu0 0.0
  %541 = vmatprep.subr.mxu0 0.0
  %542 = vmatpush1.msra.mxu0 0.0
  %543 = vmatprep.mubr.f32.mxu0 0.0
  %v544 = vand.u32 %v242, 4294901760
  %v545 = vsub.f32 %v242, %v544
  %546 = vmatmul.mubr.f32.gmra.mrb[0].mxu0 %v545
  %v547 = vpop.f32.mrb[0].mxu0
  %v548 = vadd.f32 %v455, %v547
  %v549 = vpop.f32.mrb[0].mxu0
  %v550 = vadd.f32 %v457, %v549
  %551 = vdwg.mxu0
  %v552 = vand.u32 %v231, 4294901760
  %553 = vmatprep.subr.mxu0 %v552
  %v554 = vand.u32 %v230, 4294901760
  %555 = vmatpush1.msra.mxu0 %v554
  %v556 = vand.u32 %v233, 4294901760
  %557 = vmatprep.subr.mxu0 %v556
  %v558 = vand.u32 %v232, 4294901760
  %559 = vmatpush1.msra.mxu0 %v558
  %v560 = vand.u32 %v235, 4294901760
  %561 = vmatprep.subr.mxu0 %v560
  %v562 = vand.u32 %v234, 4294901760
  %563 = vmatpush1.msra.mxu0 %v562
  %v564 = vand.u32 %v237, 4294901760
  %565 = vmatprep.subr.mxu0 %v564
  %v566 = vand.u32 %v236, 4294901760
  %567 = vmatpush1.msra.mxu0 %v566
  %v568 = vand.u32 %v249, 4294901760
  %569 = vmatprep.subr.mxu0 %v568
  %v570 = vand.u32 %v246, 4294901760
  %571 = vmatpush1.msra.mxu0 %v570
  %572 = vmatprep.subr.mxu0 0.0
  %573 = vmatpush1.msra.mxu0 0.0
  %574 = vmatprep.subr.mxu0 0.0
  %575 = vmatpush1.msra.mxu0 0.0
  %576 = vmatprep.subr.mxu0 0.0
  %577 = vmatpush1.msra.mxu0 0.0
  %578 = vmatprep.subr.mxu0 0.0
  %579 = vmatpush1.msra.mxu0 0.0
  %580 = vmatprep.subr.mxu0 0.0
  %581 = vmatpush1.msra.mxu0 0.0
  %582 = vmatprep.subr.mxu0 0.0
  %583 = vmatpush1.msra.mxu0 0.0
  %584 = vmatprep.subr.mxu0 0.0
  %585 = vmatpush1.msra.mxu0 0.0
  %586 = vmatprep.subr.mxu0 0.0
  %587 = vmatpush1.msra.mxu0 0.0
  %588 = vmatprep.subr.mxu0 0.0
  %589 = vmatpush1.msra.mxu0 0.0
  %590 = vmatprep.subr.mxu0 0.0
  %591 = vmatpush1.msra.mxu0 0.0
  %592 = vmatprep.subr.mxu0 0.0
  %593 = vmatpush1.msra.mxu0 0.0
  %594 = vmatprep.subr.mxu0 0.0
  %595 = vmatpush1.msra.mxu0 0.0
  %596 = vmatprep.subr.mxu0 0.0
  %597 = vmatpush1.msra.mxu0 0.0
  %598 = vmatprep.subr.mxu0 0.0
  %599 = vmatpush1.msra.mxu0 0.0
  %600 = vmatprep.subr.mxu0 0.0
  %601 = vmatpush1.msra.mxu0 0.0
  %602 = vmatprep.subr.mxu0 0.0
  %603 = vmatpush1.msra.mxu0 0.0
  %604 = vmatprep.subr.mxu0 0.0
  %605 = vmatpush1.msra.mxu0 0.0
  %606 = vmatprep.subr.mxu0 0.0
  %607 = vmatpush1.msra.mxu0 0.0
  %608 = vmatprep.subr.mxu0 0.0
  %609 = vmatpush1.msra.mxu0 0.0
  %610 = vmatprep.subr.mxu0 0.0
  %611 = vmatpush1.msra.mxu0 0.0
  %612 = vmatprep.subr.mxu0 0.0
  %613 = vmatpush1.msra.mxu0 0.0
  %614 = vmatprep.subr.mxu0 0.0
  %615 = vmatpush1.msra.mxu0 0.0
  %616 = vmatprep.subr.mxu0 0.0
  %617 = vmatpush1.msra.mxu0 0.0
  %618 = vmatprep.subr.mxu0 0.0
  %619 = vmatpush1.msra.mxu0 0.0
  %620 = vmatprep.subr.mxu0 0.0
  %621 = vmatpush1.msra.mxu0 0.0
  %622 = vmatprep.subr.mxu0 0.0
  %623 = vmatpush1.msra.mxu0 0.0
  %624 = vmatprep.subr.mxu0 0.0
  %625 = vmatpush1.msra.mxu0 0.0
  %626 = vmatprep.mubr.f32.mxu0 0.0
  %v627 = vand.u32 %v242, 4294901760
  %v628 = vsub.f32 %v242, %v627
  %v629 = vand.u32 %v628, 4294901760
  %630 = vmatmul.mubr.f32.gmra.mrb[0].mxu0 %v629
  %v631 = vpop.f32.mrb[0].mxu0
  %v632 = vadd.f32 %v548, %v631
  %v633 = vpop.f32.mrb[0].mxu0
  %v634 = vadd.f32 %v550, %v633
  %635 = vdwg.mxu0
  %v636 = vand.u32 %v231, 4294901760
  %v637 = vsub.f32 %v231, %v636
  %v638 = vand.u32 %v637, 4294901760
  %639 = vmatprep.subr.mxu0 %v638
  %v640 = vand.u32 %v230, 4294901760
  %v641 = vsub.f32 %v230, %v640
  %v642 = vand.u32 %v641, 4294901760
  %643 = vmatpush1.msra.mxu0 %v642
  %v644 = vand.u32 %v233, 4294901760
  %v645 = vsub.f32 %v233, %v644
  %v646 = vand.u32 %v645, 4294901760
  %647 = vmatprep.subr.mxu0 %v646
  %v648 = vand.u32 %v232, 4294901760
  %v649 = vsub.f32 %v232, %v648
  %v650 = vand.u32 %v649, 4294901760
  %651 = vmatpush1.msra.mxu0 %v650
  %v652 = vand.u32 %v235, 4294901760
  %v653 = vsub.f32 %v235, %v652
  %v654 = vand.u32 %v653, 4294901760
  %655 = vmatprep.subr.mxu0 %v654
  %v656 = vand.u32 %v234, 4294901760
  %v657 = vsub.f32 %v234, %v656
  %v658 = vand.u32 %v657, 4294901760
  %659 = vmatpush1.msra.mxu0 %v658
  %v660 = vand.u32 %v237, 4294901760
  %v661 = vsub.f32 %v237, %v660
  %v662 = vand.u32 %v661, 4294901760
  %663 = vmatprep.subr.mxu0 %v662
  %v664 = vand.u32 %v236, 4294901760
  %v665 = vsub.f32 %v236, %v664
  %v666 = vand.u32 %v665, 4294901760
  %667 = vmatpush1.msra.mxu0 %v666
  %v668 = vand.u32 %v249, 4294901760
  %v669 = vsub.f32 %v249, %v668
  %v670 = vand.u32 %v669, 4294901760
  %671 = vmatprep.subr.mxu0 %v670
  %v672 = vand.u32 %v246, 4294901760
  %v673 = vsub.f32 %v246, %v672
  %v674 = vand.u32 %v673, 4294901760
  %675 = vmatpush1.msra.mxu0 %v674
  %676 = vmatprep.subr.mxu0 0.0
  %677 = vmatpush1.msra.mxu0 0.0
  %678 = vmatprep.subr.mxu0 0.0
  %679 = vmatpush1.msra.mxu0 0.0
  %680 = vmatprep.subr.mxu0 0.0
  %681 = vmatpush1.msra.mxu0 0.0
  %682 = vmatprep.subr.mxu0 0.0
  %683 = vmatpush1.msra.mxu0 0.0
  %684 = vmatprep.subr.mxu0 0.0
  %685 = vmatpush1.msra.mxu0 0.0
  %686 = vmatprep.subr.mxu0 0.0
  %687 = vmatpush1.msra.mxu0 0.0
  %688 = vmatprep.subr.mxu0 0.0
  %689 = vmatpush1.msra.mxu0 0.0
  %690 = vmatprep.subr.mxu0 0.0
  %691 = vmatpush1.msra.mxu0 0.0
  %692 = vmatprep.subr.mxu0 0.0
  %693 = vmatpush1.msra.mxu0 0.0
  %694 = vmatprep.subr.mxu0 0.0
  %695 = vmatpush1.msra.mxu0 0.0
  %696 = vmatprep.subr.mxu0 0.0
  %697 = vmatpush1.msra.mxu0 0.0
  %698 = vmatprep.subr.mxu0 0.0
  %699 = vmatpush1.msra.mxu0 0.0
  %700 = vmatprep.subr.mxu0 0.0
  %701 = vmatpush1.msra.mxu0 0.0
  %702 = vmatprep.subr.mxu0 0.0
  %703 = vmatpush1.msra.mxu0 0.0
  %704 = vmatprep.subr.mxu0 0.0
  %705 = vmatpush1.msra.mxu0 0.0
  %706 = vmatprep.subr.mxu0 0.0
  %707 = vmatpush1.msra.mxu0 0.0
  %708 = vmatprep.subr.mxu0 0.0
  %709 = vmatpush1.msra.mxu0 0.0
  %710 = vmatprep.subr.mxu0 0.0
  %711 = vmatpush1.msra.mxu0 0.0
  %712 = vmatprep.subr.mxu0 0.0
  %713 = vmatpush1.msra.mxu0 0.0
  %714 = vmatprep.subr.mxu0 0.0
  %715 = vmatpush1.msra.mxu0 0.0
  %716 = vmatprep.subr.mxu0 0.0
  %717 = vmatpush1.msra.mxu0 0.0
  %718 = vmatprep.subr.mxu0 0.0
  %719 = vmatpush1.msra.mxu0 0.0
  %720 = vmatprep.subr.mxu0 0.0
  %721 = vmatpush1.msra.mxu0 0.0
  %722 = vmatprep.subr.mxu0 0.0
  %723 = vmatpush1.msra.mxu0 0.0
  %724 = vmatprep.subr.mxu0 0.0
  %725 = vmatpush1.msra.mxu0 0.0
  %726 = vmatprep.subr.mxu0 0.0
  %727 = vmatpush1.msra.mxu0 0.0
  %728 = vmatprep.subr.mxu0 0.0
  %729 = vmatpush1.msra.mxu0 0.0
  %730 = vmatprep.mubr.f32.mxu0 0.0
  %v731 = vand.u32 %v242, 4294901760
  %732 = vmatmul.mubr.f32.gmra.mrb[0].mxu0 %v731
  %v733 = vpop.f32.mrb[0].mxu0
  %v734 = vadd.f32 %v632, %v733
  %v735 = vpop.f32.mrb[0].mxu0
  %v736 = vadd.f32 %v634, %v735
  %737 = vdwg.mxu0
  %v738 = vand.u32 %v231, 4294901760
  %739 = vmatprep.subr.mxu0 %v738
  %v740 = vand.u32 %v230, 4294901760
  %741 = vmatpush1.msra.mxu0 %v740
  %v742 = vand.u32 %v233, 4294901760
  %743 = vmatprep.subr.mxu0 %v742
  %v744 = vand.u32 %v232, 4294901760
  %745 = vmatpush1.msra.mxu0 %v744
  %v746 = vand.u32 %v235, 4294901760
  %747 = vmatprep.subr.mxu0 %v746
  %v748 = vand.u32 %v234, 4294901760
  %749 = vmatpush1.msra.mxu0 %v748
  %v750 = vand.u32 %v237, 4294901760
  %751 = vmatprep.subr.mxu0 %v750
  %v752 = vand.u32 %v236, 4294901760
  %753 = vmatpush1.msra.mxu0 %v752
  %v754 = vand.u32 %v249, 4294901760
  %755 = vmatprep.subr.mxu0 %v754
  %v756 = vand.u32 %v246, 4294901760
  %757 = vmatpush1.msra.mxu0 %v756
  %758 = vmatprep.subr.mxu0 0.0
  %759 = vmatpush1.msra.mxu0 0.0
  %760 = vmatprep.subr.mxu0 0.0
  %761 = vmatpush1.msra.mxu0 0.0
  %762 = vmatprep.subr.mxu0 0.0
  %763 = vmatpush1.msra.mxu0 0.0
  %764 = vmatprep.subr.mxu0 0.0
  %765 = vmatpush1.msra.mxu0 0.0
  %766 = vmatprep.subr.mxu0 0.0
  %767 = vmatpush1.msra.mxu0 0.0
  %768 = vmatprep.subr.mxu0 0.0
  %769 = vmatpush1.msra.mxu0 0.0
  %770 = vmatprep.subr.mxu0 0.0
  %771 = vmatpush1.msra.mxu0 0.0
  %772 = vmatprep.subr.mxu0 0.0
  %773 = vmatpush1.msra.mxu0 0.0
  %774 = vmatprep.subr.mxu0 0.0
  %775 = vmatpush1.msra.mxu0 0.0
  %776 = vmatprep.subr.mxu0 0.0
  %777 = vmatpush1.msra.mxu0 0.0
  %778 = vmatprep.subr.mxu0 0.0
  %779 = vmatpush1.msra.mxu0 0.0
  %780 = vmatprep.subr.mxu0 0.0
  %781 = vmatpush1.msra.mxu0 0.0
  %782 = vmatprep.subr.mxu0 0.0
  %783 = vmatpush1.msra.mxu0 0.0
  %784 = vmatprep.subr.mxu0 0.0
  %785 = vmatpush1.msra.mxu0 0.0
  %786 = vmatprep.subr.mxu0 0.0
  %787 = vmatpush1.msra.mxu0 0.0
  %788 = vmatprep.subr.mxu0 0.0
  %789 = vmatpush1.msra.mxu0 0.0
  %790 = vmatprep.subr.mxu0 0.0
  %791 = vmatpush1.msra.mxu0 0.0
  %792 = vmatprep.subr.mxu0 0.0
  %793 = vmatpush1.msra.mxu0 0.0
  %794 = vmatprep.subr.mxu0 0.0
  %795 = vmatpush1.msra.mxu0 0.0
  %796 = vmatprep.subr.mxu0 0.0
  %797 = vmatpush1.msra.mxu0 0.0
  %798 = vmatprep.subr.mxu0 0.0
  %799 = vmatpush1.msra.mxu0 0.0
  %800 = vmatprep.subr.mxu0 0.0
  %801 = vmatpush1.msra.mxu0 0.0
  %802 = vmatprep.subr.mxu0 0.0
  %803 = vmatpush1.msra.mxu0 0.0
  %804 = vmatprep.subr.mxu0 0.0
  %805 = vmatpush1.msra.mxu0 0.0
  %806 = vmatprep.subr.mxu0 0.0
  %807 = vmatpush1.msra.mxu0 0.0
  %808 = vmatprep.subr.mxu0 0.0
  %809 = vmatpush1.msra.mxu0 0.0
  %810 = vmatprep.subr.mxu0 0.0
  %811 = vmatpush1.msra.mxu0 0.0
  %812 = vmatprep.mubr.f32.mxu0 0.0
  %v813 = vand.u32 %v242, 4294901760
  %814 = vmatmul.mubr.f32.gmra.mrb[0].mxu0 %v813
  %v815 = vpop.f32.mrb[0].mxu0
  %v816 = vadd.f32 %v734, %v815
  %v817 = vpop.f32.mrb[0].mxu0
  %v818 = vadd.f32 %v736, %v817
  %819 = vdwg.mxu0
  %v820 = vmax.f32 %v816, 0.0
  %v821 = vmax.f32 %v818, 0.0
  %822 = vrot.lane.b32.xlu0 %v820, 34
  %v823 = vpop.permute.xlu0 %822
  %824 = vrot.lane.b32.xlu0 %v821, 34
  %v825 = vpop.permute.xlu0 %824
  %v826 = vsel %vm49, %v823, %v825
  %v827 = vsel %vm49, %v825, %v823
  %v828 = vmul.f32 %v827, %v55
  %v829 = vmul.f32 %v826, %v59
  %830 = vst [vmem:[#allocation2] sm:$0xff] %v828
  %831 = vst [vmem:[#allocation2 + $0x8] sm:$0xff] %v829
  %832 = vrot.lane.b32.xlu0 %v820, 32
  %v833 = vpop.permute.xlu0 %832
  %834 = vrot.lane.b32.xlu0 %v821, 32
  %v835 = vpop.permute.xlu0 %834
  %v836 = vsel %vm68, %v833, %v835
  %v837 = vsel %vm68, %v835, %v833
  %v838 = vmul.f32 %v837, %v74
  %v839 = vmul.f32 %v836, %v78
  %840 = vst [vmem:[#allocation2 + $0x10] sm:$0xff] %v838
  %841 = vst [vmem:[#allocation2 + $0x18] sm:$0xff] %v839
  %842 = vrot.lane.b32.xlu0 %v820, 30
  %v843 = vpop.permute.xlu0 %842
  %844 = vrot.lane.b32.xlu0 %v821, 30
  %v845 = vpop.permute.xlu0 %844
  %v846 = vsel %vm93, %v843, %v845
  %v847 = vsel %vm93, %v845, %v843
  %v848 = vmul.f32 %v847, %v99
  %v849 = vmul.f32 %v846, %v103
  %850 = vst [vmem:[#allocation2 + $0x20] sm:$0xff] %v848
  %851 = vst [vmem:[#allocation2 + $0x28] sm:$0xff] %v849
  %852 = vrot.lane.b32.xlu0 %v820, 2
  %v853 = vpop.permute.xlu0 %852
  %854 = vrot.lane.b32.xlu0 %v821, 2
  %v855 = vpop.permute.xlu0 %854
  %v856 = vsel %vm112, %v853, %v855
  %v857 = vsel %vm112, %v855, %v853
  %v858 = vmul.f32 %v857, %v118
  %v859 = vmul.f32 %v856, %v122
  %860 = vst [vmem:[#allocation2 + $0x30] sm:$0xff] %v858
  %861 = vst [vmem:[#allocation2 + $0x38] sm:$0xff] %v859
  %862 = vst [vmem:[#allocation2 + $0x40] sm:$0xff] %v820
  %863 = vst [vmem:[#allocation2 + $0x48] sm:$0xff] %v821
  %864 = vrot.lane.b32.xlu0 %v820, 126
  %v865 = vpop.permute.xlu0 %864
  %866 = vrot.lane.b32.xlu0 %v821, 126
  %v867 = vpop.permute.xlu0 %866
  %v868 = vsel %vm139, %v865, %v867
  %v869 = vsel %vm139, %v867, %v865
  %v870 = vmul.f32 %v868, %v145
  %v871 = vmul.f32 %v869, %v149
  %872 = vst [vmem:[#allocation2 + $0x50] sm:$0xff] %v870
  %873 = vst [vmem:[#allocation2 + $0x58] sm:$0xff] %v871
  %874 = vrot.lane.b32.xlu0 %v820, 98
  %v875 = vpop.permute.xlu0 %874
  %876 = vrot.lane.b32.xlu0 %v821, 98
  %v877 = vpop.permute.xlu0 %876
  %v878 = vsel %vm164, %v875, %v877
  %v879 = vsel %vm164, %v877, %v875
  %v880 = vmul.f32 %v878, %v170
  %v881 = vmul.f32 %v879, %v174
  %882 = vst [vmem:[#allocation2 + $0x60] sm:$0xff] %v880
  %883 = vst [vmem:[#allocation2 + $0x68] sm:$0xff] %v881
  %884 = vrot.lane.b32.xlu0 %v820, 96
  %v885 = vpop.permute.xlu0 %884
  %886 = vrot.lane.b32.xlu0 %v821, 96
  %v887 = vpop.permute.xlu0 %886
  %v888 = vsel %vm183, %v885, %v887
  %v889 = vsel %vm183, %v887, %v885
  %v890 = vmul.f32 %v888, %v189
  %v891 = vmul.f32 %v889, %v193
  %892 = vst [vmem:[#allocation2 + $0x70] sm:$0xff] %v890
  %893 = vst [vmem:[#allocation2 + $0x78] sm:$0xff] %v891
  %894 = vrot.lane.b32.xlu0 %v820, 94
  %v895 = vpop.permute.xlu0 %894
  %896 = vrot.lane.b32.xlu0 %v821, 94
  %v897 = vpop.permute.xlu0 %896
  %v898 = vsel %vm208, %v895, %v897
  %v899 = vsel %vm208, %v897, %v895
  %v900 = vmul.f32 %v898, %v214
  %v901 = vmul.f32 %v899, %v218
  %902 = vst [vmem:[#allocation2 + $0x80] sm:$0xff] %v900
  %903 = vst [vmem:[#allocation2 + $0x88] sm:$0xff] %v901
  %s904 = scalar_lea.vmem [#allocation2], 144
  %905 = vst.msk [vmem:[%s904] ss:$8 sm:$0x3] %vm226, 1.0
  %906 = vst.msk [vmem:[%s904] ss:$8 sm:$0x0] %vm226, 1.0
  %v907 = vld [vmem:[#allocation2] sm:$0xff]
  %v908 = vld [vmem:[#allocation2 + $0x8] sm:$0xff]
  %v909 = vld [vmem:[#allocation2 + $0x10] sm:$0xff]
  %v910 = vld [vmem:[#allocation2 + $0x18] sm:$0xff]
  %v911 = vld [vmem:[#allocation2 + $0x20] sm:$0xff]
  %v912 = vld [vmem:[#allocation2 + $0x28] sm:$0xff]
  %v913 = vld [vmem:[#allocation2 + $0x30] sm:$0xff]
  %v914 = vld [vmem:[#allocation2 + $0x38] sm:$0xff]
  %v915 = vld [vmem:[#allocation2 + $0x40] sm:$0xff]
  %v916 = vld [vmem:[#allocation2 + $0x48] sm:$0xff]
  %v917 = vld [vmem:[#allocation2 + $0x50] sm:$0xff]
  %v918 = vld [vmem:[#allocation2 + $0x58] sm:$0xff]
  %v919 = vld [vmem:[#allocation2 + $0x60] sm:$0xff]
  %v920 = vld [vmem:[#allocation2 + $0x68] sm:$0xff]
  %v921 = vld [vmem:[#allocation2 + $0x70] sm:$0xff]
  %v922 = vld [vmem:[#allocation2 + $0x78] sm:$0xff]
  %v923 = vld [vmem:[#allocation2 + $0x80] sm:$0xff]
  %v924 = vld [vmem:[#allocation2 + $0x88] sm:$0xff]
  %v925 = vld [vmem:[#allocation2 + $0x90] sm:$0x1]
  %v926 = vld [vmem:[#allocation2 + $0x98] sm:$0x1]
  %vm927 = vcmask 596992
  %v929 = vsel %vm927, %v28, 0
  %v932 = vsel %vm927, %v29, 0
  %v935 = vsel %vm927, %v30, 0
  %v938 = vsel %vm927, %v31, 0
  %v941 = vsel %vm927, %v32, 0
  %v944 = vsel %vm927, %v33, 0
  %v947 = vsel %vm927, %v34, 0
  %v950 = vsel %vm927, %v35, 0
  %v953 = vsel %vm927, %v36, 0
  %vm955 = vcmask 1040384
  %v957 = vsel %vm955, %v925, 0
  %v960 = vsel %vm955, %v926, 0
  %v962 = vand.u32 %v908, 4294901760
  %963 = vmatprep.subr.mxu0 %v962
  %v964 = vand.u32 %v907, 4294901760
  %965 = vmatpush1.msra.mxu0 %v964
  %v966 = vand.u32 %v910, 4294901760
  %967 = vmatprep.subr.mxu0 %v966
  %v968 = vand.u32 %v909, 4294901760
  %969 = vmatpush1.msra.mxu0 %v968
  %v970 = vand.u32 %v912, 4294901760
  %971 = vmatprep.subr.mxu0 %v970
  %v972 = vand.u32 %v911, 4294901760
  %973 = vmatpush1.msra.mxu0 %v972
  %v974 = vand.u32 %v914, 4294901760
  %975 = vmatprep.subr.mxu0 %v974
  %v976 = vand.u32 %v913, 4294901760
  %977 = vmatpush1.msra.mxu0 %v976
  %v978 = vand.u32 %v916, 4294901760
  %979 = vmatprep.subr.mxu0 %v978
  %v980 = vand.u32 %v915, 4294901760
  %981 = vmatpush1.msra.mxu0 %v980
  %v982 = vand.u32 %v918, 4294901760
  %983 = vmatprep.subr.mxu0 %v982
  %v984 = vand.u32 %v917, 4294901760
  %985 = vmatpush1.msra.mxu0 %v984
  %v986 = vand.u32 %v920, 4294901760
  %987 = vmatprep.subr.mxu0 %v986
  %v988 = vand.u32 %v919, 4294901760
  %989 = vmatpush1.msra.mxu0 %v988
  %v990 = vand.u32 %v922, 4294901760
  %991 = vmatprep.subr.mxu0 %v990
  %v992 = vand.u32 %v921, 4294901760
  %993 = vmatpush1.msra.mxu0 %v992
  %v994 = vand.u32 %v924, 4294901760
  %995 = vmatprep.subr.mxu0 %v994
  %v996 = vand.u32 %v923, 4294901760
  %997 = vmatpush1.msra.mxu0 %v996
  %v998 = vand.u32 %v960, 4294901760
  %999 = vmatprep.subr.mxu0 %v998
  %v1000 = vand.u32 %v957, 4294901760
  %1001 = vmatpush1.msra.mxu0 %v1000
  %1002 = vmatprep.subr.mxu0 0.0
  %1003 = vmatpush1.msra.mxu0 0.0
  %1004 = vmatprep.subr.mxu0 0.0
  %1005 = vmatpush1.msra.mxu0 0.0
  %1006 = vmatprep.subr.mxu0 0.0
  %1007 = vmatpush1.msra.mxu0 0.0
  %1008 = vmatprep.subr.mxu0 0.0
  %1009 = vmatpush1.msra.mxu0 0.0
  %1010 = vmatprep.subr.mxu0 0.0
  %1011 = vmatpush1.msra.mxu0 0.0
  %1012 = vmatprep.subr.mxu0 0.0
  %1013 = vmatpush1.msra.mxu0 0.0
  %1014 = vmatprep.subr.mxu0 0.0
  %1015 = vmatpush1.msra.mxu0 0.0
  %1016 = vmatprep.subr.mxu0 0.0
  %1017 = vmatpush1.msra.mxu0 0.0
  %1018 = vmatprep.subr.mxu0 0.0
  %1019 = vmatpush1.msra.mxu0 0.0
  %1020 = vmatprep.subr.mxu0 0.0
  %1021 = vmatpush1.msra.mxu0 0.0
  %1022 = vmatprep.subr.mxu0 0.0
  %1023 = vmatpush1.msra.mxu0 0.0
  %1024 = vmatprep.subr.mxu0 0.0
  %1025 = vmatpush1.msra.mxu0 0.0
  %1026 = vmatprep.subr.mxu0 0.0
  %1027 = vmatpush1.msra.mxu0 0.0
  %1028 = vmatprep.subr.mxu0 0.0
  %1029 = vmatpush1.msra.mxu0 0.0
  %1030 = vmatprep.subr.mxu0 0.0
  %1031 = vmatpush1.msra.mxu0 0.0
  %1032 = vmatprep.subr.mxu0 0.0
  %1033 = vmatpush1.msra.mxu0 0.0
  %1034 = vmatprep.subr.mxu0 0.0
  %1035 = vmatpush1.msra.mxu0 0.0
  %1036 = vmatprep.subr.mxu0 0.0
  %1037 = vmatpush1.msra.mxu0 0.0
  %1038 = vmatprep.subr.mxu0 0.0
  %1039 = vmatpush1.msra.mxu0 0.0
  %1040 = vmatprep.subr.mxu0 0.0
  %1041 = vmatpush1.msra.mxu0 0.0
  %1042 = vmatprep.subr.mxu0 0.0
  %1043 = vmatpush1.msra.mxu0 0.0
  %1044 = vmatprep.subr.mxu0 0.0
  %1045 = vmatpush1.msra.mxu0 0.0
  %1046 = vmatprep.mubr.f32.mxu0 0.0
  %v1047 = vand.u32 %v929, 4294901760
  %v1048 = vsub.f32 %v929, %v1047
  %v1049 = vand.u32 %v1048, 4294901760
  %v1050 = vsub.f32 %v1048, %v1049
  %v1051 = vand.u32 %v1050, 4294901760
  %1052 = vmatmul.mubr.f32.gmra.mrb[0].mxu0 %v1051
  %v1053 = vpop.f32.mrb[0].mxu0
  %v1054 = vadd.f32 0.0, %v1053
  %v1055 = vpop.f32.mrb[0].mxu0
  %v1056 = vadd.f32 0.0, %v1055
  %1057 = vmatprep.mubr.f32.mxu0 0.0
  %v1058 = vand.u32 %v932, 4294901760
  %v1059 = vsub.f32 %v932, %v1058
  %v1060 = vand.u32 %v1059, 4294901760
  %v1061 = vsub.f32 %v1059, %v1060
  %v1062 = vand.u32 %v1061, 4294901760
  %1063 = vmatmul.mubr.f32.gmra.mrb[0].mxu0 %v1062
  %v1064 = vpop.f32.mrb[0].mxu0
  %v1065 = vadd.f32 0.0, %v1064
  %v1066 = vpop.f32.mrb[0].mxu0
  %v1067 = vadd.f32 0.0, %v1066
  %1068 = vmatprep.mubr.f32.mxu0 0.0
  %v1069 = vand.u32 %v935, 4294901760
  %v1070 = vsub.f32 %v935, %v1069
  %v1071 = vand.u32 %v1070, 4294901760
  %v1072 = vsub.f32 %v1070, %v1071
  %v1073 = vand.u32 %v1072, 4294901760
  %1074 = vmatmul.mubr.f32.gmra.mrb[0].mxu0 %v1073
  %v1075 = vpop.f32.mrb[0].mxu0
  %v1076 = vadd.f32 0.0, %v1075
  %v1077 = vpop.f32.mrb[0].mxu0
  %v1078 = vadd.f32 0.0, %v1077
  %1079 = vmatprep.mubr.f32.mxu0 0.0
  %v1080 = vand.u32 %v938, 4294901760
  %v1081 = vsub.f32 %v938, %v1080
  %v1082 = vand.u32 %v1081, 4294901760
  %v1083 = vsub.f32 %v1081, %v1082
  %v1084 = vand.u32 %v1083, 4294901760
  %1085 = vmatmul.mubr.f32.gmra.mrb[0].mxu0 %v1084
  %v1086 = vpop.f32.mrb[0].mxu0
  %v1087 = vadd.f32 0.0, %v1086
  %v1088 = vpop.f32.mrb[0].mxu0
  %v1089 = vadd.f32 0.0, %v1088
  %1090 = vmatprep.mubr.f32.mxu0 0.0
  %v1091 = vand.u32 %v941, 4294901760
  %v1092 = vsub.f32 %v941, %v1091
  %v1093 = vand.u32 %v1092, 4294901760
  %v1094 = vsub.f32 %v1092, %v1093
  %v1095 = vand.u32 %v1094, 4294901760
  %1096 = vmatmul.mubr.f32.gmra.mrb[0].mxu0 %v1095
  %v1097 = vpop.f32.mrb[0].mxu0
  %v1098 = vadd.f32 0.0, %v1097
  %v1099 = vpop.f32.mrb[0].mxu0
  %v1100 = vadd.f32 0.0, %v1099
  %1101 = vmatprep.mubr.f32.mxu0 0.0
  %v1102 = vand.u32 %v944, 4294901760
  %v1103 = vsub.f32 %v944, %v1102
  %v1104 = vand.u32 %v1103, 4294901760
  %v1105 = vsub.f32 %v1103, %v1104
  %v1106 = vand.u32 %v1105, 4294901760
  %1107 = vmatmul.mubr.f32.gmra.mrb[0].mxu0 %v1106
  %v1108 = vpop.f32.mrb[0].mxu0
  %v1109 = vadd.f32 0.0, %v1108
  %v1110 = vpop.f32.mrb[0].mxu0
  %v1111 = vadd.f32 0.0, %v1110
  %1112 = vmatprep.mubr.f32.mxu0 0.0
  %v1113 = vand.u32 %v947, 4294901760
  %v1114 = vsub.f32 %v947, %v1113
  %v1115 = vand.u32 %v1114, 4294901760
  %v1116 = vsub.f32 %v1114, %v1115
  %v1117 = vand.u32 %v1116, 4294901760
  %1118 = vmatmul.mubr.f32.gmra.mrb[0].mxu0 %v1117
  %v1119 = vpop.f32.mrb[0].mxu0
  %v1120 = vadd.f32 0.0, %v1119
  %v1121 = vpop.f32.mrb[0].mxu0
  %v1122 = vadd.f32 0.0, %v1121
  %1123 = vmatprep.mubr.f32.mxu0 0.0
  %v1124 = vand.u32 %v950, 4294901760
  %v1125 = vsub.f32 %v950, %v1124
  %v1126 = vand.u32 %v1125, 4294901760
  %v1127 = vsub.f32 %v1125, %v1126
  %v1128 = vand.u32 %v1127, 4294901760
  %1129 = vmatmul.mubr.f32.gmra.mrb[0].mxu0 %v1128
  %v1130 = vpop.f32.mrb[0].mxu0
  %v1131 = vadd.f32 0.0, %v1130
  %v1132 = vpop.f32.mrb[0].mxu0
  %v1133 = vadd.f32 0.0, %v1132
  %1134 = vmatprep.mubr.f32.mxu0 0.0
  %v1135 = vand.u32 %v953, 4294901760
  %v1136 = vsub.f32 %v953, %v1135
  %v1137 = vand.u32 %v1136, 4294901760
  %v1138 = vsub.f32 %v1136, %v1137
  %v1139 = vand.u32 %v1138, 4294901760
  %1140 = vmatmul.mubr.f32.gmra.mrb[0].mxu0 %v1139
  %v1141 = vpop.f32.mrb[0].mxu0
  %v1142 = vadd.f32 0.0, %v1141
  %v1143 = vpop.f32.mrb[0].mxu0
  %v1144 = vadd.f32 0.0, %v1143
  %1145 = vdwg.mxu0
  %v1146 = vand.u32 %v908, 4294901760
  %v1147 = vsub.f32 %v908, %v1146
  %v1148 = vand.u32 %v1147, 4294901760
  %v1149 = vsub.f32 %v1147, %v1148
  %v1150 = vand.u32 %v1149, 4294901760
  %1151 = vmatprep.subr.mxu0 %v1150
  %v1152 = vand.u32 %v907, 4294901760
  %v1153 = vsub.f32 %v907, %v1152
  %v1154 = vand.u32 %v1153, 4294901760
  %v1155 = vsub.f32 %v1153, %v1154
  %v1156 = vand.u32 %v1155, 4294901760
  %1157 = vmatpush1.msra.mxu0 %v1156
  %v1158 = vand.u32 %v910, 4294901760
  %v1159 = vsub.f32 %v910, %v1158
  %v1160 = vand.u32 %v1159, 4294901760
  %v1161 = vsub.f32 %v1159, %v1160
  %v1162 = vand.u32 %v1161, 4294901760
  %1163 = vmatprep.subr.mxu0 %v1162
  %v1164 = vand.u32 %v909, 4294901760
  %v1165 = vsub.f32 %v909, %v1164
  %v1166 = vand.u32 %v1165, 4294901760
  %v1167 = vsub.f32 %v1165, %v1166
  %v1168 = vand.u32 %v1167, 4294901760
  %1169 = vmatpush1.msra.mxu0 %v1168
  %v1170 = vand.u32 %v912, 4294901760
  %v1171 = vsub.f32 %v912, %v1170
  %v1172 = vand.u32 %v1171, 4294901760
  %v1173 = vsub.f32 %v1171, %v1172
  %v1174 = vand.u32 %v1173, 4294901760
  %1175 = vmatprep.subr.mxu0 %v1174
  %v1176 = vand.u32 %v911, 4294901760
  %v1177 = vsub.f32 %v911, %v1176
  %v1178 = vand.u32 %v1177, 4294901760
  %v1179 = vsub.f32 %v1177, %v1178
  %v1180 = vand.u32 %v1179, 4294901760
  %1181 = vmatpush1.msra.mxu0 %v1180
  %v1182 = vand.u32 %v914, 4294901760
  %v1183 = vsub.f32 %v914, %v1182
  %v1184 = vand.u32 %v1183, 4294901760
  %v1185 = vsub.f32 %v1183, %v1184
  %v1186 = vand.u32 %v1185, 4294901760
  %1187 = vmatprep.subr.mxu0 %v1186
  %v1188 = vand.u32 %v913, 4294901760
  %v1189 = vsub.f32 %v913, %v1188
  %v1190 = vand.u32 %v1189, 4294901760
  %v1191 = vsub.f32 %v1189, %v1190
  %v1192 = vand.u32 %v1191, 4294901760
  %1193 = vmatpush1.msra.mxu0 %v1192
  %v1194 = vand.u32 %v916, 4294901760
  %v1195 = vsub.f32 %v916, %v1194
  %v1196 = vand.u32 %v1195, 4294901760
  %v1197 = vsub.f32 %v1195, %v1196
  %v1198 = vand.u32 %v1197, 4294901760
  %1199 = vmatprep.subr.mxu0 %v1198
  %v1200 = vand.u32 %v915, 4294901760
  %v1201 = vsub.f32 %v915, %v1200
  %v1202 = vand.u32 %v1201, 4294901760
  %v1203 = vsub.f32 %v1201, %v1202
  %v1204 = vand.u32 %v1203, 4294901760
  %1205 = vmatpush1.msra.mxu0 %v1204
  %v1206 = vand.u32 %v918, 4294901760
  %v1207 = vsub.f32 %v918, %v1206
  %v1208 = vand.u32 %v1207, 4294901760
  %v1209 = vsub.f32 %v1207, %v1208
  %v1210 = vand.u32 %v1209, 4294901760
  %1211 = vmatprep.subr.mxu0 %v1210
  %v1212 = vand.u32 %v917, 4294901760
  %v1213 = vsub.f32 %v917, %v1212
  %v1214 = vand.u32 %v1213, 4294901760
  %v1215 = vsub.f32 %v1213, %v1214
  %v1216 = vand.u32 %v1215, 4294901760
  %1217 = vmatpush1.msra.mxu0 %v1216
  %v1218 = vand.u32 %v920, 4294901760
  %v1219 = vsub.f32 %v920, %v1218
  %v1220 = vand.u32 %v1219, 4294901760
  %v1221 = vsub.f32 %v1219, %v1220
  %v1222 = vand.u32 %v1221, 4294901760
  %1223 = vmatprep.subr.mxu0 %v1222
  %v1224 = vand.u32 %v919, 4294901760
  %v1225 = vsub.f32 %v919, %v1224
  %v1226 = vand.u32 %v1225, 4294901760
  %v1227 = vsub.f32 %v1225, %v1226
  %v1228 = vand.u32 %v1227, 4294901760
  %1229 = vmatpush1.msra.mxu0 %v1228
  %v1230 = vand.u32 %v922, 4294901760
  %v1231 = vsub.f32 %v922, %v1230
  %v1232 = vand.u32 %v1231, 4294901760
  %v1233 = vsub.f32 %v1231, %v1232
  %v1234 = vand.u32 %v1233, 4294901760
  %1235 = vmatprep.subr.mxu0 %v1234
  %v1236 = vand.u32 %v921, 4294901760
  %v1237 = vsub.f32 %v921, %v1236
  %v1238 = vand.u32 %v1237, 4294901760
  %v1239 = vsub.f32 %v1237, %v1238
  %v1240 = vand.u32 %v1239, 4294901760
  %1241 = vmatpush1.msra.mxu0 %v1240
  %v1242 = vand.u32 %v924, 4294901760
  %v1243 = vsub.f32 %v924, %v1242
  %v1244 = vand.u32 %v1243, 4294901760
  %v1245 = vsub.f32 %v1243, %v1244
  %v1246 = vand.u32 %v1245, 4294901760
  %1247 = vmatprep.subr.mxu0 %v1246
  %v1248 = vand.u32 %v923, 4294901760
  %v1249 = vsub.f32 %v923, %v1248
  %v1250 = vand.u32 %v1249, 4294901760
  %v1251 = vsub.f32 %v1249, %v1250
  %v1252 = vand.u32 %v1251, 4294901760
  %1253 = vmatpush1.msra.mxu0 %v1252
  %v1254 = vand.u32 %v960, 4294901760
  %v1255 = vsub.f32 %v960, %v1254
  %v1256 = vand.u32 %v1255, 4294901760
  %v1257 = vsub.f32 %v1255, %v1256
  %v1258 = vand.u32 %v1257, 4294901760
  %1259 = vmatprep.subr.mxu0 %v1258
  %v1260 = vand.u32 %v957, 4294901760
  %v1261 = vsub.f32 %v957, %v1260
  %v1262 = vand.u32 %v1261, 4294901760
  %v1263 = vsub.f32 %v1261, %v1262
  %v1264 = vand.u32 %v1263, 4294901760
  %1265 = vmatpush1.msra.mxu0 %v1264
  %1266 = vmatprep.subr.mxu0 0.0
  %1267 = vmatpush1.msra.mxu0 0.0
  %1268 = vmatprep.subr.mxu0 0.0
  %1269 = vmatpush1.msra.mxu0 0.0
  %1270 = vmatprep.subr.mxu0 0.0
  %1271 = vmatpush1.msra.mxu0 0.0
  %1272 = vmatprep.subr.mxu0 0.0
  %1273 = vmatpush1.msra.mxu0 0.0
  %1274 = vmatprep.subr.mxu0 0.0
  %1275 = vmatpush1.msra.mxu0 0.0
  %1276 = vmatprep.subr.mxu0 0.0
  %1277 = vmatpush1.msra.mxu0 0.0
  %1278 = vmatprep.subr.mxu0 0.0
  %1279 = vmatpush1.msra.mxu0 0.0
  %1280 = vmatprep.subr.mxu0 0.0
  %1281 = vmatpush1.msra.mxu0 0.0
  %1282 = vmatprep.subr.mxu0 0.0
  %1283 = vmatpush1.msra.mxu0 0.0
  %1284 = vmatprep.subr.mxu0 0.0
  %1285 = vmatpush1.msra.mxu0 0.0
  %1286 = vmatprep.subr.mxu0 0.0
  %1287 = vmatpush1.msra.mxu0 0.0
  %1288 = vmatprep.subr.mxu0 0.0
  %1289 = vmatpush1.msra.mxu0 0.0
  %1290 = vmatprep.subr.mxu0 0.0
  %1291 = vmatpush1.msra.mxu0 0.0
  %1292 = vmatprep.subr.mxu0 0.0
  %1293 = vmatpush1.msra.mxu0 0.0
  %1294 = vmatprep.subr.mxu0 0.0
  %1295 = vmatpush1.msra.mxu0 0.0
  %1296 = vmatprep.subr.mxu0 0.0
  %1297 = vmatpush1.msra.mxu0 0.0
  %1298 = vmatprep.subr.mxu0 0.0
  %1299 = vmatpush1.msra.mxu0 0.0
  %1300 = vmatprep.subr.mxu0 0.0
  %1301 = vmatpush1.msra.mxu0 0.0
  %1302 = vmatprep.subr.mxu0 0.0
  %1303 = vmatpush1.msra.mxu0 0.0
  %1304 = vmatprep.subr.mxu0 0.0
  %1305 = vmatpush1.msra.mxu0 0.0
  %1306 = vmatprep.subr.mxu0 0.0
  %1307 = vmatpush1.msra.mxu0 0.0
  %1308 = vmatprep.subr.mxu0 0.0
  %1309 = vmatpush1.msra.mxu0 0.0
  %1310 = vmatprep.mubr.f32.mxu0 0.0
  %v1311 = vand.u32 %v929, 4294901760
  %1312 = vmatmul.mubr.f32.gmra.mrb[0].mxu0 %v1311
  %v1313 = vpop.f32.mrb[0].mxu0
  %v1314 = vadd.f32 %v1054, %v1313
  %v1315 = vpop.f32.mrb[0].mxu0
  %v1316 = vadd.f32 %v1056, %v1315
  %1317 = vmatprep.mubr.f32.mxu0 0.0
  %v1318 = vand.u32 %v932, 4294901760
  %1319 = vmatmul.mubr.f32.gmra.mrb[0].mxu0 %v1318
  %v1320 = vpop.f32.mrb[0].mxu0
  %v1321 = vadd.f32 %v1065, %v1320
  %v1322 = vpop.f32.mrb[0].mxu0
  %v1323 = vadd.f32 %v1067, %v1322
  %1324 = vmatprep.mubr.f32.mxu0 0.0
  %v1325 = vand.u32 %v935, 4294901760
  %1326 = vmatmul.mubr.f32.gmra.mrb[0].mxu0 %v1325
  %v1327 = vpop.f32.mrb[0].mxu0
  %v1328 = vadd.f32 %v1076, %v1327
  %v1329 = vpop.f32.mrb[0].mxu0
  %v1330 = vadd.f32 %v1078, %v1329
  %1331 = vmatprep.mubr.f32.mxu0 0.0
  %v1332 = vand.u32 %v938, 4294901760
  %1333 = vmatmul.mubr.f32.gmra.mrb[0].mxu0 %v1332
  %v1334 = vpop.f32.mrb[0].mxu0
  %v1335 = vadd.f32 %v1087, %v1334
  %v1336 = vpop.f32.mrb[0].mxu0
  %v1337 = vadd.f32 %v1089, %v1336
  %1338 = vmatprep.mubr.f32.mxu0 0.0
  %v1339 = vand.u32 %v941, 4294901760
  %1340 = vmatmul.mubr.f32.gmra.mrb[0].mxu0 %v1339
  %v1341 = vpop.f32.mrb[0].mxu0
  %v1342 = vadd.f32 %v1098, %v1341
  %v1343 = vpop.f32.mrb[0].mxu0
  %v1344 = vadd.f32 %v1100, %v1343
  %1345 = vmatprep.mubr.f32.mxu0 0.0
  %v1346 = vand.u32 %v944, 4294901760
  %1347 = vmatmul.mubr.f32.gmra.mrb[0].mxu0 %v1346
  %v1348 = vpop.f32.mrb[0].mxu0
  %v1349 = vadd.f32 %v1109, %v1348
  %v1350 = vpop.f32.mrb[0].mxu0
  %v1351 = vadd.f32 %v1111, %v1350
  %1352 = vmatprep.mubr.f32.mxu0 0.0
  %v1353 = vand.u32 %v947, 4294901760
  %1354 = vmatmul.mubr.f32.gmra.mrb[0].mxu0 %v1353
  %v1355 = vpop.f32.mrb[0].mxu0
  %v1356 = vadd.f32 %v1120, %v1355
  %v1357 = vpop.f32.mrb[0].mxu0
  %v1358 = vadd.f32 %v1122, %v1357
  %1359 = vmatprep.mubr.f32.mxu0 0.0
  %v1360 = vand.u32 %v950, 4294901760
  %1361 = vmatmul.mubr.f32.gmra.mrb[0].mxu0 %v1360
  %v1362 = vpop.f32.mrb[0].mxu0
  %v1363 = vadd.f32 %v1131, %v1362
  %v1364 = vpop.f32.mrb[0].mxu0
  %v1365 = vadd.f32 %v1133, %v1364
  %1366 = vmatprep.mubr.f32.mxu0 0.0
  %v1367 = vand.u32 %v953, 4294901760
  %1368 = vmatmul.mubr.f32.gmra.mrb[0].mxu0 %v1367
  %v1369 = vpop.f32.mrb[0].mxu0
  %v1370 = vadd.f32 %v1142, %v1369
  %v1371 = vpop.f32.mrb[0].mxu0
  %v1372 = vadd.f32 %v1144, %v1371
  %1373 = vdwg.mxu0
  %v1374 = vand.u32 %v908, 4294901760
  %v1375 = vsub.f32 %v908, %v1374
  %1376 = vmatprep.subr.mxu0 %v1375
  %v1377 = vand.u32 %v907, 4294901760
  %v1378 = vsub.f32 %v907, %v1377
  %1379 = vmatpush1.msra.mxu0 %v1378
  %v1380 = vand.u32 %v910, 4294901760
  %v1381 = vsub.f32 %v910, %v1380
  %1382 = vmatprep.subr.mxu0 %v1381
  %v1383 = vand.u32 %v909, 4294901760
  %v1384 = vsub.f32 %v909, %v1383
  %1385 = vmatpush1.msra.mxu0 %v1384
  %v1386 = vand.u32 %v912, 4294901760
  %v1387 = vsub.f32 %v912, %v1386
  %1388 = vmatprep.subr.mxu0 %v1387
  %v1389 = vand.u32 %v911, 4294901760
  %v1390 = vsub.f32 %v911, %v1389
  %1391 = vmatpush1.msra.mxu0 %v1390
  %v1392 = vand.u32 %v914, 4294901760
  %v1393 = vsub.f32 %v914, %v1392
  %1394 = vmatprep.subr.mxu0 %v1393
  %v1395 = vand.u32 %v913, 4294901760
  %v1396 = vsub.f32 %v913, %v1395
  %1397 = vmatpush1.msra.mxu0 %v1396
  %v1398 = vand.u32 %v916, 4294901760
  %v1399 = vsub.f32 %v916, %v1398
  %1400 = vmatprep.subr.mxu0 %v1399
  %v1401 = vand.u32 %v915, 4294901760
  %v1402 = vsub.f32 %v915, %v1401
  %1403 = vmatpush1.msra.mxu0 %v1402
  %v1404 = vand.u32 %v918, 4294901760
  %v1405 = vsub.f32 %v918, %v1404
  %1406 = vmatprep.subr.mxu0 %v1405
  %v1407 = vand.u32 %v917, 4294901760
  %v1408 = vsub.f32 %v917, %v1407
  %1409 = vmatpush1.msra.mxu0 %v1408
  %v1410 = vand.u32 %v920, 4294901760
  %v1411 = vsub.f32 %v920, %v1410
  %1412 = vmatprep.subr.mxu0 %v1411
  %v1413 = vand.u32 %v919, 4294901760
  %v1414 = vsub.f32 %v919, %v1413
  %1415 = vmatpush1.msra.mxu0 %v1414
  %v1416 = vand.u32 %v922, 4294901760
  %v1417 = vsub.f32 %v922, %v1416
  %1418 = vmatprep.subr.mxu0 %v1417
  %v1419 = vand.u32 %v921, 4294901760
  %v1420 = vsub.f32 %v921, %v1419
  %1421 = vmatpush1.msra.mxu0 %v1420
  %v1422 = vand.u32 %v924, 4294901760
  %v1423 = vsub.f32 %v924, %v1422
  %1424 = vmatprep.subr.mxu0 %v1423
  %v1425 = vand.u32 %v923, 4294901760
  %v1426 = vsub.f32 %v923, %v1425
  %1427 = vmatpush1.msra.mxu0 %v1426
  %v1428 = vand.u32 %v960, 4294901760
  %v1429 = vsub.f32 %v960, %v1428
  %1430 = vmatprep.subr.mxu0 %v1429
  %v1431 = vand.u32 %v957, 4294901760
  %v1432 = vsub.f32 %v957, %v1431
  %1433 = vmatpush1.msra.mxu0 %v1432
  %1434 = vmatprep.subr.mxu0 0.0
  %1435 = vmatpush1.msra.mxu0 0.0
  %1436 = vmatprep.subr.mxu0 0.0
  %1437 = vmatpush1.msra.mxu0 0.0
  %1438 = vmatprep.subr.mxu0 0.0
  %1439 = vmatpush1.msra.mxu0 0.0
  %1440 = vmatprep.subr.mxu0 0.0
  %1441 = vmatpush1.msra.mxu0 0.0
  %1442 = vmatprep.subr.mxu0 0.0
  %1443 = vmatpush1.msra.mxu0 0.0
  %1444 = vmatprep.subr.mxu0 0.0
  %1445 = vmatpush1.msra.mxu0 0.0
  %1446 = vmatprep.subr.mxu0 0.0
  %1447 = vmatpush1.msra.mxu0 0.0
  %1448 = vmatprep.subr.mxu0 0.0
  %1449 = vmatpush1.msra.mxu0 0.0
  %1450 = vmatprep.subr.mxu0 0.0
  %1451 = vmatpush1.msra.mxu0 0.0
  %1452 = vmatprep.subr.mxu0 0.0
  %1453 = vmatpush1.msra.mxu0 0.0
  %1454 = vmatprep.subr.mxu0 0.0
  %1455 = vmatpush1.msra.mxu0 0.0
  %1456 = vmatprep.subr.mxu0 0.0
  %1457 = vmatpush1.msra.mxu0 0.0
  %1458 = vmatprep.subr.mxu0 0.0
  %1459 = vmatpush1.msra.mxu0 0.0
  %1460 = vmatprep.subr.mxu0 0.0
  %1461 = vmatpush1.msra.mxu0 0.0
  %1462 = vmatprep.subr.mxu0 0.0
  %1463 = vmatpush1.msra.mxu0 0.0
  %1464 = vmatprep.subr.mxu0 0.0
  %1465 = vmatpush1.msra.mxu0 0.0
  %1466 = vmatprep.subr.mxu0 0.0
  %1467 = vmatpush1.msra.mxu0 0.0
  %1468 = vmatprep.subr.mxu0 0.0
  %1469 = vmatpush1.msra.mxu0 0.0
  %1470 = vmatprep.subr.mxu0 0.0
  %1471 = vmatpush1.msra.mxu0 0.0
  %1472 = vmatprep.subr.mxu0 0.0
  %1473 = vmatpush1.msra.mxu0 0.0
  %1474 = vmatprep.subr.mxu0 0.0
  %1475 = vmatpush1.msra.mxu0 0.0
  %1476 = vmatprep.subr.mxu0 0.0
  %1477 = vmatpush1.msra.mxu0 0.0
  %1478 = vmatprep.mubr.f32.mxu0 0.0
  %v1479 = vand.u32 %v929, 4294901760
  %v1480 = vsub.f32 %v929, %v1479
  %1481 = vmatmul.mubr.f32.gmra.mrb[0].mxu0 %v1480
  %v1482 = vpop.f32.mrb[0].mxu0
  %v1483 = vadd.f32 %v1314, %v1482
  %v1484 = vpop.f32.mrb[0].mxu0
  %v1485 = vadd.f32 %v1316, %v1484
  %1486 = vmatprep.mubr.f32.mxu0 0.0
  %v1487 = vand.u32 %v932, 4294901760
  %v1488 = vsub.f32 %v932, %v1487
  %1489 = vmatmul.mubr.f32.gmra.mrb[0].mxu0 %v1488
  %v1490 = vpop.f32.mrb[0].mxu0
  %v1491 = vadd.f32 %v1321, %v1490
  %v1492 = vpop.f32.mrb[0].mxu0
  %v1493 = vadd.f32 %v1323, %v1492
  %1494 = vmatprep.mubr.f32.mxu0 0.0
  %v1495 = vand.u32 %v935, 4294901760
  %v1496 = vsub.f32 %v935, %v1495
  %1497 = vmatmul.mubr.f32.gmra.mrb[0].mxu0 %v1496
  %v1498 = vpop.f32.mrb[0].mxu0
  %v1499 = vadd.f32 %v1328, %v1498
  %v1500 = vpop.f32.mrb[0].mxu0
  %v1501 = vadd.f32 %v1330, %v1500
  %1502 = vmatprep.mubr.f32.mxu0 0.0
  %v1503 = vand.u32 %v938, 4294901760
  %v1504 = vsub.f32 %v938, %v1503
  %1505 = vmatmul.mubr.f32.gmra.mrb[0].mxu0 %v1504
  %v1506 = vpop.f32.mrb[0].mxu0
  %v1507 = vadd.f32 %v1335, %v1506
  %v1508 = vpop.f32.mrb[0].mxu0
  %v1509 = vadd.f32 %v1337, %v1508
  %1510 = vmatprep.mubr.f32.mxu0 0.0
  %v1511 = vand.u32 %v941, 4294901760
  %v1512 = vsub.f32 %v941, %v1511
  %1513 = vmatmul.mubr.f32.gmra.mrb[0].mxu0 %v1512
  %v1514 = vpop.f32.mrb[0].mxu0
  %v1515 = vadd.f32 %v1342, %v1514
  %v1516 = vpop.f32.mrb[0].mxu0
  %v1517 = vadd.f32 %v1344, %v1516
  %1518 = vmatprep.mubr.f32.mxu0 0.0
  %v1519 = vand.u32 %v944, 4294901760
  %v1520 = vsub.f32 %v944, %v1519
  %1521 = vmatmul.mubr.f32.gmra.mrb[0].mxu0 %v1520
  %v1522 = vpop.f32.mrb[0].mxu0
  %v1523 = vadd.f32 %v1349, %v1522
  %v1524 = vpop.f32.mrb[0].mxu0
  %v1525 = vadd.f32 %v1351, %v1524
  %1526 = vmatprep.mubr.f32.mxu0 0.0
  %v1527 = vand.u32 %v947, 4294901760
  %v1528 = vsub.f32 %v947, %v1527
  %1529 = vmatmul.mubr.f32.gmra.mrb[0].mxu0 %v1528
  %v1530 = vpop.f32.mrb[0].mxu0
  %v1531 = vadd.f32 %v1356, %v1530
  %v1532 = vpop.f32.mrb[0].mxu0
  %v1533 = vadd.f32 %v1358, %v1532
  %1534 = vmatprep.mubr.f32.mxu0 0.0
  %v1535 = vand.u32 %v950, 4294901760
  %v1536 = vsub.f32 %v950, %v1535
  %1537 = vmatmul.mubr.f32.gmra.mrb[0].mxu0 %v1536
  %v1538 = vpop.f32.mrb[0].mxu0
  %v1539 = vadd.f32 %v1363, %v1538
  %v1540 = vpop.f32.mrb[0].mxu0
  %v1541 = vadd.f32 %v1365, %v1540
  %1542 = vmatprep.mubr.f32.mxu0 0.0
  %v1543 = vand.u32 %v953, 4294901760
  %v1544 = vsub.f32 %v953, %v1543
  %1545 = vmatmul.mubr.f32.gmra.mrb[0].mxu0 %v1544
  %v1546 = vpop.f32.mrb[0].mxu0
  %v1547 = vadd.f32 %v1370, %v1546
  %v1548 = vpop.f32.mrb[0].mxu0
  %v1549 = vadd.f32 %v1372, %v1548
  %1550 = vdwg.mxu0
  %v1551 = vand.u32 %v908, 4294901760
  %1552 = vmatprep.subr.mxu0 %v1551
  %v1553 = vand.u32 %v907, 4294901760
  %1554 = vmatpush1.msra.mxu0 %v1553
  %v1555 = vand.u32 %v910, 4294901760
  %1556 = vmatprep.subr.mxu0 %v1555
  %v1557 = vand.u32 %v909, 4294901760
  %1558 = vmatpush1.msra.mxu0 %v1557
  %v1559 = vand.u32 %v912, 4294901760
  %1560 = vmatprep.subr.mxu0 %v1559
  %v1561 = vand.u32 %v911, 4294901760
  %1562 = vmatpush1.msra.mxu0 %v1561
  %v1563 = vand.u32 %v914, 4294901760
  %1564 = vmatprep.subr.mxu0 %v1563
  %v1565 = vand.u32 %v913, 4294901760
  %1566 = vmatpush1.msra.mxu0 %v1565
  %v1567 = vand.u32 %v916, 4294901760
  %1568 = vmatprep.subr.mxu0 %v1567
  %v1569 = vand.u32 %v915, 4294901760
  %1570 = vmatpush1.msra.mxu0 %v1569
  %v1571 = vand.u32 %v918, 4294901760
  %1572 = vmatprep.subr.mxu0 %v1571
  %v1573 = vand.u32 %v917, 4294901760
  %1574 = vmatpush1.msra.mxu0 %v1573
  %v1575 = vand.u32 %v920, 4294901760
  %1576 = vmatprep.subr.mxu0 %v1575
  %v1577 = vand.u32 %v919, 4294901760
  %1578 = vmatpush1.msra.mxu0 %v1577
  %v1579 = vand.u32 %v922, 4294901760
  %1580 = vmatprep.subr.mxu0 %v1579
  %v1581 = vand.u32 %v921, 4294901760
  %1582 = vmatpush1.msra.mxu0 %v1581
  %v1583 = vand.u32 %v924, 4294901760
  %1584 = vmatprep.subr.mxu0 %v1583
  %v1585 = vand.u32 %v923, 4294901760
  %1586 = vmatpush1.msra.mxu0 %v1585
  %v1587 = vand.u32 %v960, 4294901760
  %1588 = vmatprep.subr.mxu0 %v1587
  %v1589 = vand.u32 %v957, 4294901760
  %1590 = vmatpush1.msra.mxu0 %v1589
  %1591 = vmatprep.subr.mxu0 0.0
  %1592 = vmatpush1.msra.mxu0 0.0
  %1593 = vmatprep.subr.mxu0 0.0
  %1594 = vmatpush1.msra.mxu0 0.0
  %1595 = vmatprep.subr.mxu0 0.0
  %1596 = vmatpush1.msra.mxu0 0.0
  %1597 = vmatprep.subr.mxu0 0.0
  %1598 = vmatpush1.msra.mxu0 0.0
  %1599 = vmatprep.subr.mxu0 0.0
  %1600 = vmatpush1.msra.mxu0 0.0
  %1601 = vmatprep.subr.mxu0 0.0
  %1602 = vmatpush1.msra.mxu0 0.0
  %1603 = vmatprep.subr.mxu0 0.0
  %1604 = vmatpush1.msra.mxu0 0.0
  %1605 = vmatprep.subr.mxu0 0.0
  %1606 = vmatpush1.msra.mxu0 0.0
  %1607 = vmatprep.subr.mxu0 0.0
  %1608 = vmatpush1.msra.mxu0 0.0
  %1609 = vmatprep.subr.mxu0 0.0
  %1610 = vmatpush1.msra.mxu0 0.0
  %1611 = vmatprep.subr.mxu0 0.0
  %1612 = vmatpush1.msra.mxu0 0.0
  %1613 = vmatprep.subr.mxu0 0.0
  %1614 = vmatpush1.msra.mxu0 0.0
  %1615 = vmatprep.subr.mxu0 0.0
  %1616 = vmatpush1.msra.mxu0 0.0
  %1617 = vmatprep.subr.mxu0 0.0
  %1618 = vmatpush1.msra.mxu0 0.0
  %1619 = vmatprep.subr.mxu0 0.0
  %1620 = vmatpush1.msra.mxu0 0.0
  %1621 = vmatprep.subr.mxu0 0.0
  %1622 = vmatpush1.msra.mxu0 0.0
  %1623 = vmatprep.subr.mxu0 0.0
  %1624 = vmatpush1.msra.mxu0 0.0
  %1625 = vmatprep.subr.mxu0 0.0
  %1626 = vmatpush1.msra.mxu0 0.0
  %1627 = vmatprep.subr.mxu0 0.0
  %1628 = vmatpush1.msra.mxu0 0.0
  %1629 = vmatprep.subr.mxu0 0.0
  %1630 = vmatpush1.msra.mxu0 0.0
  %1631 = vmatprep.subr.mxu0 0.0
  %1632 = vmatpush1.msra.mxu0 0.0
  %1633 = vmatprep.subr.mxu0 0.0
  %1634 = vmatpush1.msra.mxu0 0.0
  %1635 = vmatprep.mubr.f32.mxu0 0.0
  %v1636 = vand.u32 %v929, 4294901760
  %v1637 = vsub.f32 %v929, %v1636
  %v1638 = vand.u32 %v1637, 4294901760
  %1639 = vmatmul.mubr.f32.gmra.mrb[0].mxu0 %v1638
  %v1640 = vpop.f32.mrb[0].mxu0
  %v1641 = vadd.f32 %v1483, %v1640
  %v1642 = vpop.f32.mrb[0].mxu0
  %v1643 = vadd.f32 %v1485, %v1642
  %1644 = vmatprep.mubr.f32.mxu0 0.0
  %v1645 = vand.u32 %v932, 4294901760
  %v1646 = vsub.f32 %v932, %v1645
  %v1647 = vand.u32 %v1646, 4294901760
  %1648 = vmatmul.mubr.f32.gmra.mrb[0].mxu0 %v1647
  %v1649 = vpop.f32.mrb[0].mxu0
  %v1650 = vadd.f32 %v1491, %v1649
  %v1651 = vpop.f32.mrb[0].mxu0
  %v1652 = vadd.f32 %v1493, %v1651
  %1653 = vmatprep.mubr.f32.mxu0 0.0
  %v1654 = vand.u32 %v935, 4294901760
  %v1655 = vsub.f32 %v935, %v1654
  %v1656 = vand.u32 %v1655, 4294901760
  %1657 = vmatmul.mubr.f32.gmra.mrb[0].mxu0 %v1656
  %v1658 = vpop.f32.mrb[0].mxu0
  %v1659 = vadd.f32 %v1499, %v1658
  %v1660 = vpop.f32.mrb[0].mxu0
  %v1661 = vadd.f32 %v1501, %v1660
  %1662 = vmatprep.mubr.f32.mxu0 0.0
  %v1663 = vand.u32 %v938, 4294901760
  %v1664 = vsub.f32 %v938, %v1663
  %v1665 = vand.u32 %v1664, 4294901760
  %1666 = vmatmul.mubr.f32.gmra.mrb[0].mxu0 %v1665
  %v1667 = vpop.f32.mrb[0].mxu0
  %v1668 = vadd.f32 %v1507, %v1667
  %v1669 = vpop.f32.mrb[0].mxu0
  %v1670 = vadd.f32 %v1509, %v1669
  %1671 = vmatprep.mubr.f32.mxu0 0.0
  %v1672 = vand.u32 %v941, 4294901760
  %v1673 = vsub.f32 %v941, %v1672
  %v1674 = vand.u32 %v1673, 4294901760
  %1675 = vmatmul.mubr.f32.gmra.mrb[0].mxu0 %v1674
  %v1676 = vpop.f32.mrb[0].mxu0
  %v1677 = vadd.f32 %v1515, %v1676
  %v1678 = vpop.f32.mrb[0].mxu0
  %v1679 = vadd.f32 %v1517, %v1678
  %1680 = vmatprep.mubr.f32.mxu0 0.0
  %v1681 = vand.u32 %v944, 4294901760
  %v1682 = vsub.f32 %v944, %v1681
  %v1683 = vand.u32 %v1682, 4294901760
  %1684 = vmatmul.mubr.f32.gmra.mrb[0].mxu0 %v1683
  %v1685 = vpop.f32.mrb[0].mxu0
  %v1686 = vadd.f32 %v1523, %v1685
  %v1687 = vpop.f32.mrb[0].mxu0
  %v1688 = vadd.f32 %v1525, %v1687
  %1689 = vmatprep.mubr.f32.mxu0 0.0
  %v1690 = vand.u32 %v947, 4294901760
  %v1691 = vsub.f32 %v947, %v1690
  %v1692 = vand.u32 %v1691, 4294901760
  %1693 = vmatmul.mubr.f32.gmra.mrb[0].mxu0 %v1692
  %v1694 = vpop.f32.mrb[0].mxu0
  %v1695 = vadd.f32 %v1531, %v1694
  %v1696 = vpop.f32.mrb[0].mxu0
  %v1697 = vadd.f32 %v1533, %v1696
  %1698 = vmatprep.mubr.f32.mxu0 0.0
  %v1699 = vand.u32 %v950, 4294901760
  %v1700 = vsub.f32 %v950, %v1699
  %v1701 = vand.u32 %v1700, 4294901760
  %1702 = vmatmul.mubr.f32.gmra.mrb[0].mxu0 %v1701
  %v1703 = vpop.f32.mrb[0].mxu0
  %v1704 = vadd.f32 %v1539, %v1703
  %v1705 = vpop.f32.mrb[0].mxu0
  %v1706 = vadd.f32 %v1541, %v1705
  %1707 = vmatprep.mubr.f32.mxu0 0.0
  %v1708 = vand.u32 %v953, 4294901760
  %v1709 = vsub.f32 %v953, %v1708
  %v1710 = vand.u32 %v1709, 4294901760
  %1711 = vmatmul.mubr.f32.gmra.mrb[0].mxu0 %v1710
  %v1712 = vpop.f32.mrb[0].mxu0
  %v1713 = vadd.f32 %v1547, %v1712
  %v1714 = vpop.f32.mrb[0].mxu0
  %v1715 = vadd.f32 %v1549, %v1714
  %1716 = vdwg.mxu0
  %v1717 = vand.u32 %v908, 4294901760
  %v1718 = vsub.f32 %v908, %v1717
  %v1719 = vand.u32 %v1718, 4294901760
  %1720 = vmatprep.subr.mxu0 %v1719
  %v1721 = vand.u32 %v907, 4294901760
  %v1722 = vsub.f32 %v907, %v1721
  %v1723 = vand.u32 %v1722, 4294901760
  %1724 = vmatpush1.msra.mxu0 %v1723
  %v1725 = vand.u32 %v910, 4294901760
  %v1726 = vsub.f32 %v910, %v1725
  %v1727 = vand.u32 %v1726, 4294901760
  %1728 = vmatprep.subr.mxu0 %v1727
  %v1729 = vand.u32 %v909, 4294901760
  %v1730 = vsub.f32 %v909, %v1729
  %v1731 = vand.u32 %v1730, 4294901760
  %1732 = vmatpush1.msra.mxu0 %v1731
  %v1733 = vand.u32 %v912, 4294901760
  %v1734 = vsub.f32 %v912, %v1733
  %v1735 = vand.u32 %v1734, 4294901760
  %1736 = vmatprep.subr.mxu0 %v1735
  %v1737 = vand.u32 %v911, 4294901760
  %v1738 = vsub.f32 %v911, %v1737
  %v1739 = vand.u32 %v1738, 4294901760
  %1740 = vmatpush1.msra.mxu0 %v1739
  %v1741 = vand.u32 %v914, 4294901760
  %v1742 = vsub.f32 %v914, %v1741
  %v1743 = vand.u32 %v1742, 4294901760
  %1744 = vmatprep.subr.mxu0 %v1743
  %v1745 = vand.u32 %v913, 4294901760
  %v1746 = vsub.f32 %v913, %v1745
  %v1747 = vand.u32 %v1746, 4294901760
  %1748 = vmatpush1.msra.mxu0 %v1747
  %v1749 = vand.u32 %v916, 4294901760
  %v1750 = vsub.f32 %v916, %v1749
  %v1751 = vand.u32 %v1750, 4294901760
  %1752 = vmatprep.subr.mxu0 %v1751
  %v1753 = vand.u32 %v915, 4294901760
  %v1754 = vsub.f32 %v915, %v1753
  %v1755 = vand.u32 %v1754, 4294901760
  %1756 = vmatpush1.msra.mxu0 %v1755
  %v1757 = vand.u32 %v918, 4294901760
  %v1758 = vsub.f32 %v918, %v1757
  %v1759 = vand.u32 %v1758, 4294901760
  %1760 = vmatprep.subr.mxu0 %v1759
  %v1761 = vand.u32 %v917, 4294901760
  %v1762 = vsub.f32 %v917, %v1761
  %v1763 = vand.u32 %v1762, 4294901760
  %1764 = vmatpush1.msra.mxu0 %v1763
  %v1765 = vand.u32 %v920, 4294901760
  %v1766 = vsub.f32 %v920, %v1765
  %v1767 = vand.u32 %v1766, 4294901760
  %1768 = vmatprep.subr.mxu0 %v1767
  %v1769 = vand.u32 %v919, 4294901760
  %v1770 = vsub.f32 %v919, %v1769
  %v1771 = vand.u32 %v1770, 4294901760
  %1772 = vmatpush1.msra.mxu0 %v1771
  %v1773 = vand.u32 %v922, 4294901760
  %v1774 = vsub.f32 %v922, %v1773
  %v1775 = vand.u32 %v1774, 4294901760
  %1776 = vmatprep.subr.mxu0 %v1775
  %v1777 = vand.u32 %v921, 4294901760
  %v1778 = vsub.f32 %v921, %v1777
  %v1779 = vand.u32 %v1778, 4294901760
  %1780 = vmatpush1.msra.mxu0 %v1779
  %v1781 = vand.u32 %v924, 4294901760
  %v1782 = vsub.f32 %v924, %v1781
  %v1783 = vand.u32 %v1782, 4294901760
  %1784 = vmatprep.subr.mxu0 %v1783
  %v1785 = vand.u32 %v923, 4294901760
  %v1786 = vsub.f32 %v923, %v1785
  %v1787 = vand.u32 %v1786, 4294901760
  %1788 = vmatpush1.msra.mxu0 %v1787
  %v1789 = vand.u32 %v960, 4294901760
  %v1790 = vsub.f32 %v960, %v1789
  %v1791 = vand.u32 %v1790, 4294901760
  %1792 = vmatprep.subr.mxu0 %v1791
  %v1793 = vand.u32 %v957, 4294901760
  %v1794 = vsub.f32 %v957, %v1793
  %v1795 = vand.u32 %v1794, 4294901760
  %1796 = vmatpush1.msra.mxu0 %v1795
  %1797 = vmatprep.subr.mxu0 0.0
  %1798 = vmatpush1.msra.mxu0 0.0
  %1799 = vmatprep.subr.mxu0 0.0
  %1800 = vmatpush1.msra.mxu0 0.0
  %1801 = vmatprep.subr.mxu0 0.0
  %1802 = vmatpush1.msra.mxu0 0.0
  %1803 = vmatprep.subr.mxu0 0.0
  %1804 = vmatpush1.msra.mxu0 0.0
  %1805 = vmatprep.subr.mxu0 0.0
  %1806 = vmatpush1.msra.mxu0 0.0
  %1807 = vmatprep.subr.mxu0 0.0
  %1808 = vmatpush1.msra.mxu0 0.0
  %1809 = vmatprep.subr.mxu0 0.0
  %1810 = vmatpush1.msra.mxu0 0.0
  %1811 = vmatprep.subr.mxu0 0.0
  %1812 = vmatpush1.msra.mxu0 0.0
  %1813 = vmatprep.subr.mxu0 0.0
  %1814 = vmatpush1.msra.mxu0 0.0
  %1815 = vmatprep.subr.mxu0 0.0
  %1816 = vmatpush1.msra.mxu0 0.0
  %1817 = vmatprep.subr.mxu0 0.0
  %1818 = vmatpush1.msra.mxu0 0.0
  %1819 = vmatprep.subr.mxu0 0.0
  %1820 = vmatpush1.msra.mxu0 0.0
  %1821 = vmatprep.subr.mxu0 0.0
  %1822 = vmatpush1.msra.mxu0 0.0
  %1823 = vmatprep.subr.mxu0 0.0
  %1824 = vmatpush1.msra.mxu0 0.0
  %1825 = vmatprep.subr.mxu0 0.0
  %1826 = vmatpush1.msra.mxu0 0.0
  %1827 = vmatprep.subr.mxu0 0.0
  %1828 = vmatpush1.msra.mxu0 0.0
  %1829 = vmatprep.subr.mxu0 0.0
  %1830 = vmatpush1.msra.mxu0 0.0
  %1831 = vmatprep.subr.mxu0 0.0
  %1832 = vmatpush1.msra.mxu0 0.0
  %1833 = vmatprep.subr.mxu0 0.0
  %1834 = vmatpush1.msra.mxu0 0.0
  %1835 = vmatprep.subr.mxu0 0.0
  %1836 = vmatpush1.msra.mxu0 0.0
  %1837 = vmatprep.subr.mxu0 0.0
  %1838 = vmatpush1.msra.mxu0 0.0
  %1839 = vmatprep.subr.mxu0 0.0
  %1840 = vmatpush1.msra.mxu0 0.0
  %1841 = vmatprep.mubr.f32.mxu0 0.0
  %v1842 = vand.u32 %v929, 4294901760
  %1843 = vmatmul.mubr.f32.gmra.mrb[0].mxu0 %v1842
  %v1844 = vpop.f32.mrb[0].mxu0
  %v1845 = vadd.f32 %v1641, %v1844
  %v1846 = vpop.f32.mrb[0].mxu0
  %v1847 = vadd.f32 %v1643, %v1846
  %1848 = vmatprep.mubr.f32.mxu0 0.0
  %v1849 = vand.u32 %v932, 4294901760
  %1850 = vmatmul.mubr.f32.gmra.mrb[0].mxu0 %v1849
  %v1851 = vpop.f32.mrb[0].mxu0
  %v1852 = vadd.f32 %v1650, %v1851
  %v1853 = vpop.f32.mrb[0].mxu0
  %v1854 = vadd.f32 %v1652, %v1853
  %1855 = vmatprep.mubr.f32.mxu0 0.0
  %v1856 = vand.u32 %v935, 4294901760
  %1857 = vmatmul.mubr.f32.gmra.mrb[0].mxu0 %v1856
  %v1858 = vpop.f32.mrb[0].mxu0
  %v1859 = vadd.f32 %v1659, %v1858
  %v1860 = vpop.f32.mrb[0].mxu0
  %v1861 = vadd.f32 %v1661, %v1860
  %1862 = vmatprep.mubr.f32.mxu0 0.0
  %v1863 = vand.u32 %v938, 4294901760
  %1864 = vmatmul.mubr.f32.gmra.mrb[0].mxu0 %v1863
  %v1865 = vpop.f32.mrb[0].mxu0
  %v1866 = vadd.f32 %v1668, %v1865
  %v1867 = vpop.f32.mrb[0].mxu0
  %v1868 = vadd.f32 %v1670, %v1867
  %1869 = vmatprep.mubr.f32.mxu0 0.0
  %v1870 = vand.u32 %v941, 4294901760
  %1871 = vmatmul.mubr.f32.gmra.mrb[0].mxu0 %v1870
  %v1872 = vpop.f32.mrb[0].mxu0
  %v1873 = vadd.f32 %v1677, %v1872
  %v1874 = vpop.f32.mrb[0].mxu0
  %v1875 = vadd.f32 %v1679, %v1874
  %1876 = vmatprep.mubr.f32.mxu0 0.0
  %v1877 = vand.u32 %v944, 4294901760
  %1878 = vmatmul.mubr.f32.gmra.mrb[0].mxu0 %v1877
  %v1879 = vpop.f32.mrb[0].mxu0
  %v1880 = vadd.f32 %v1686, %v1879
  %v1881 = vpop.f32.mrb[0].mxu0
  %v1882 = vadd.f32 %v1688, %v1881
  %1883 = vmatprep.mubr.f32.mxu0 0.0
  %v1884 = vand.u32 %v947, 4294901760
  %1885 = vmatmul.mubr.f32.gmra.mrb[0].mxu0 %v1884
  %v1886 = vpop.f32.mrb[0].mxu0
  %v1887 = vadd.f32 %v1695, %v1886
  %v1888 = vpop.f32.mrb[0].mxu0
  %v1889 = vadd.f32 %v1697, %v1888
  %1890 = vmatprep.mubr.f32.mxu0 0.0
  %v1891 = vand.u32 %v950, 4294901760
  %1892 = vmatmul.mubr.f32.gmra.mrb[0].mxu0 %v1891
  %v1893 = vpop.f32.mrb[0].mxu0
  %v1894 = vadd.f32 %v1704, %v1893
  %v1895 = vpop.f32.mrb[0].mxu0
  %v1896 = vadd.f32 %v1706, %v1895
  %1897 = vmatprep.mubr.f32.mxu0 0.0
  %v1898 = vand.u32 %v953, 4294901760
  %1899 = vmatmul.mubr.f32.gmra.mrb[0].mxu0 %v1898
  %v1900 = vpop.f32.mrb[0].mxu0
  %v1901 = vadd.f32 %v1713, %v1900
  %v1902 = vpop.f32.mrb[0].mxu0
  %v1903 = vadd.f32 %v1715, %v1902
  %1904 = vdwg.mxu0
  %v1905 = vand.u32 %v908, 4294901760
  %1906 = vmatprep.subr.mxu0 %v1905
  %v1907 = vand.u32 %v907, 4294901760
  %1908 = vmatpush1.msra.mxu0 %v1907
  %v1909 = vand.u32 %v910, 4294901760
  %1910 = vmatprep.subr.mxu0 %v1909
  %v1911 = vand.u32 %v909, 4294901760
  %1912 = vmatpush1.msra.mxu0 %v1911
  %v1913 = vand.u32 %v912, 4294901760
  %1914 = vmatprep.subr.mxu0 %v1913
  %v1915 = vand.u32 %v911, 4294901760
  %1916 = vmatpush1.msra.mxu0 %v1915
  %v1917 = vand.u32 %v914, 4294901760
  %1918 = vmatprep.subr.mxu0 %v1917
  %v1919 = vand.u32 %v913, 4294901760
  %1920 = vmatpush1.msra.mxu0 %v1919
  %v1921 = vand.u32 %v916, 4294901760
  %1922 = vmatprep.subr.mxu0 %v1921
  %v1923 = vand.u32 %v915, 4294901760
  %1924 = vmatpush1.msra.mxu0 %v1923
  %v1925 = vand.u32 %v918, 4294901760
  %1926 = vmatprep.subr.mxu0 %v1925
  %v1927 = vand.u32 %v917, 4294901760
  %1928 = vmatpush1.msra.mxu0 %v1927
  %v1929 = vand.u32 %v920, 4294901760
  %1930 = vmatprep.subr.mxu0 %v1929
  %v1931 = vand.u32 %v919, 4294901760
  %1932 = vmatpush1.msra.mxu0 %v1931
  %v1933 = vand.u32 %v922, 4294901760
  %1934 = vmatprep.subr.mxu0 %v1933
  %v1935 = vand.u32 %v921, 4294901760
  %1936 = vmatpush1.msra.mxu0 %v1935
  %v1937 = vand.u32 %v924, 4294901760
  %1938 = vmatprep.subr.mxu0 %v1937
  %v1939 = vand.u32 %v923, 4294901760
  %1940 = vmatpush1.msra.mxu0 %v1939
  %v1941 = vand.u32 %v960, 4294901760
  %1942 = vmatprep.subr.mxu0 %v1941
  %v1943 = vand.u32 %v957, 4294901760
  %1944 = vmatpush1.msra.mxu0 %v1943
  %1945 = vmatprep.subr.mxu0 0.0
  %1946 = vmatpush1.msra.mxu0 0.0
  %1947 = vmatprep.subr.mxu0 0.0
  %1948 = vmatpush1.msra.mxu0 0.0
  %1949 = vmatprep.subr.mxu0 0.0
  %1950 = vmatpush1.msra.mxu0 0.0
  %1951 = vmatprep.subr.mxu0 0.0
  %1952 = vmatpush1.msra.mxu0 0.0
  %1953 = vmatprep.subr.mxu0 0.0
  %1954 = vmatpush1.msra.mxu0 0.0
  %1955 = vmatprep.subr.mxu0 0.0
  %1956 = vmatpush1.msra.mxu0 0.0
  %1957 = vmatprep.subr.mxu0 0.0
  %1958 = vmatpush1.msra.mxu0 0.0
  %1959 = vmatprep.subr.mxu0 0.0
  %1960 = vmatpush1.msra.mxu0 0.0
  %1961 = vmatprep.subr.mxu0 0.0
  %1962 = vmatpush1.msra.mxu0 0.0
  %1963 = vmatprep.subr.mxu0 0.0
  %1964 = vmatpush1.msra.mxu0 0.0
  %1965 = vmatprep.subr.mxu0 0.0
  %1966 = vmatpush1.msra.mxu0 0.0
  %1967 = vmatprep.subr.mxu0 0.0
  %1968 = vmatpush1.msra.mxu0 0.0
  %1969 = vmatprep.subr.mxu0 0.0
  %1970 = vmatpush1.msra.mxu0 0.0
  %1971 = vmatprep.subr.mxu0 0.0
  %1972 = vmatpush1.msra.mxu0 0.0
  %1973 = vmatprep.subr.mxu0 0.0
  %1974 = vmatpush1.msra.mxu0 0.0
  %1975 = vmatprep.subr.mxu0 0.0
  %1976 = vmatpush1.msra.mxu0 0.0
  %1977 = vmatprep.subr.mxu0 0.0
  %1978 = vmatpush1.msra.mxu0 0.0
  %1979 = vmatprep.subr.mxu0 0.0
  %1980 = vmatpush1.msra.mxu0 0.0
  %1981 = vmatprep.subr.mxu0 0.0
  %1982 = vmatpush1.msra.mxu0 0.0
  %1983 = vmatprep.subr.mxu0 0.0
  %1984 = vmatpush1.msra.mxu0 0.0
  %1985 = vmatprep.subr.mxu0 0.0
  %1986 = vmatpush1.msra.mxu0 0.0
  %1987 = vmatprep.subr.mxu0 0.0
  %1988 = vmatpush1.msra.mxu0 0.0
  %1989 = vmatprep.mubr.f32.mxu0 0.0
  %v1990 = vand.u32 %v929, 4294901760
  %1991 = vmatmul.mubr.f32.gmra.mrb[0].mxu0 %v1990
  %v1992 = vpop.f32.mrb[0].mxu0
  %v1993 = vadd.f32 %v1845, %v1992
  %v1994 = vpop.f32.mrb[0].mxu0
  %v1995 = vadd.f32 %v1847, %v1994
  %1996 = vmatprep.mubr.f32.mxu0 0.0
  %v1997 = vand.u32 %v932, 4294901760
  %1998 = vmatmul.mubr.f32.gmra.mrb[0].mxu0 %v1997
  %v1999 = vpop.f32.mrb[0].mxu0
  %v2000 = vadd.f32 %v1852, %v1999
  %v2001 = vpop.f32.mrb[0].mxu0
  %v2002 = vadd.f32 %v1854, %v2001
  %2003 = vmatprep.mubr.f32.mxu0 0.0
  %v2004 = vand.u32 %v935, 4294901760
  %2005 = vmatmul.mubr.f32.gmra.mrb[0].mxu0 %v2004
  %v2006 = vpop.f32.mrb[0].mxu0
  %v2007 = vadd.f32 %v1859, %v2006
  %v2008 = vpop.f32.mrb[0].mxu0
  %v2009 = vadd.f32 %v1861, %v2008
  %2010 = vmatprep.mubr.f32.mxu0 0.0
  %v2011 = vand.u32 %v938, 4294901760
  %2012 = vmatmul.mubr.f32.gmra.mrb[0].mxu0 %v2011
  %v2013 = vpop.f32.mrb[0].mxu0
  %v2014 = vadd.f32 %v1866, %v2013
  %v2015 = vpop.f32.mrb[0].mxu0
  %v2016 = vadd.f32 %v1868, %v2015
  %2017 = vmatprep.mubr.f32.mxu0 0.0
  %v2018 = vand.u32 %v941, 4294901760
  %2019 = vmatmul.mubr.f32.gmra.mrb[0].mxu0 %v2018
  %v2020 = vpop.f32.mrb[0].mxu0
  %v2021 = vadd.f32 %v1873, %v2020
  %v2022 = vpop.f32.mrb[0].mxu0
  %v2023 = vadd.f32 %v1875, %v2022
  %2024 = vmatprep.mubr.f32.mxu0 0.0
  %v2025 = vand.u32 %v944, 4294901760
  %2026 = vmatmul.mubr.f32.gmra.mrb[0].mxu0 %v2025
  %v2027 = vpop.f32.mrb[0].mxu0
  %v2028 = vadd.f32 %v1880, %v2027
  %v2029 = vpop.f32.mrb[0].mxu0
  %v2030 = vadd.f32 %v1882, %v2029
  %2031 = vmatprep.mubr.f32.mxu0 0.0
  %v2032 = vand.u32 %v947, 4294901760
  %2033 = vmatmul.mubr.f32.gmra.mrb[0].mxu0 %v2032
  %v2034 = vpop.f32.mrb[0].mxu0
  %v2035 = vadd.f32 %v1887, %v2034
  %v2036 = vpop.f32.mrb[0].mxu0
  %v2037 = vadd.f32 %v1889, %v2036
  %2038 = vmatprep.mubr.f32.mxu0 0.0
  %v2039 = vand.u32 %v950, 4294901760
  %2040 = vmatmul.mubr.f32.gmra.mrb[0].mxu0 %v2039
  %v2041 = vpop.f32.mrb[0].mxu0
  %v2042 = vadd.f32 %v1894, %v2041
  %v2043 = vpop.f32.mrb[0].mxu0
  %v2044 = vadd.f32 %v1896, %v2043
  %2045 = vmatprep.mubr.f32.mxu0 0.0
  %v2046 = vand.u32 %v953, 4294901760
  %2047 = vmatmul.mubr.f32.gmra.mrb[0].mxu0 %v2046
  %v2048 = vpop.f32.mrb[0].mxu0
  %v2049 = vadd.f32 %v1901, %v2048
  %v2050 = vpop.f32.mrb[0].mxu0
  %v2051 = vadd.f32 %v1903, %v2050
  %2052 = vdwg.mxu0
  %v2053 = vmax.f32 %v2000, %v2002
  %2054 = vmax.xlane.f32.xlu0 %v2053
  %v2055 = vpop.xlane.xlu0 %2054
  %v2056 = vmax.f32 %v2007, %v2009
  %2057 = vmax.xlane.f32.xlu0 %v2056
  %v2058 = vpop.xlane.xlu0 %2057
  %v2059 = vmax.f32 %v2014, %v2016
  %2060 = vmax.xlane.f32.xlu0 %v2059
  %v2061 = vpop.xlane.xlu0 %2060
  %v2062 = vmax.f32 %v2021, %v2023
  %2063 = vmax.xlane.f32.xlu0 %v2062
  %v2064 = vpop.xlane.xlu0 %2063
  %v2065 = vmax.f32 %v2028, %v2030
  %2066 = vmax.xlane.f32.xlu0 %v2065
  %v2067 = vpop.xlane.xlu0 %2066
  %v2068 = vmax.f32 %v2035, %v2037
  %2069 = vmax.xlane.f32.xlu0 %v2068
  %v2070 = vpop.xlane.xlu0 %2069
  %v2071 = vmax.f32 %v2042, %v2044
  %2072 = vmax.xlane.f32.xlu0 %v2071
  %v2073 = vpop.xlane.xlu0 %2072
  %v2074 = vmax.f32 %v2049, %v2051
  %2075 = vmax.xlane.f32.xlu0 %v2074
  %v2076 = vpop.xlane.xlu0 %2075
  %v2077 = vsub.f32 %v2000, %v2055
  %v2078 = vsub.f32 %v2002, %v2055
  %v2079 = vsub.f32 %v2007, %v2058
  %v2080 = vsub.f32 %v2009, %v2058
  %v2081 = vsub.f32 %v2014, %v2061
  %v2082 = vsub.f32 %v2016, %v2061
  %v2083 = vsub.f32 %v2021, %v2064
  %v2084 = vsub.f32 %v2023, %v2064
  %v2085 = vsub.f32 %v2028, %v2067
  %v2086 = vsub.f32 %v2030, %v2067
  %v2087 = vsub.f32 %v2035, %v2070
  %v2088 = vsub.f32 %v2037, %v2070
  %v2089 = vsub.f32 %v2042, %v2073
  %v2090 = vsub.f32 %v2044, %v2073
  %v2091 = vsub.f32 %v2049, %v2076
  %v2092 = vsub.f32 %v2051, %v2076
  %v2093 = vmul.f32 %v2077, 1.442695
  %v2094 = vpow.pop %v2093
  %v2095 = vmul.f32 %v2078, 1.442695
  %v2096 = vpow.pop %v2095
  %v2097 = vmul.f32 %v2079, 1.442695
  %v2098 = vpow.pop %v2097
  %v2099 = vmul.f32 %v2080, 1.442695
  %v2100 = vpow.pop %v2099
  %v2101 = vmul.f32 %v2081, 1.442695
  %v2102 = vpow.pop %v2101
  %v2103 = vmul.f32 %v2082, 1.442695
  %v2104 = vpow.pop %v2103
  %v2105 = vmul.f32 %v2083, 1.442695
  %v2106 = vpow.pop %v2105
  %v2107 = vmul.f32 %v2084, 1.442695
  %v2108 = vpow.pop %v2107
  %v2109 = vmul.f32 %v2085, 1.442695
  %v2110 = vpow.pop %v2109
  %v2111 = vmul.f32 %v2086, 1.442695
  %v2112 = vpow.pop %v2111
  %v2113 = vmul.f32 %v2087, 1.442695
  %v2114 = vpow.pop %v2113
  %v2115 = vmul.f32 %v2088, 1.442695
  %v2116 = vpow.pop %v2115
  %v2117 = vmul.f32 %v2089, 1.442695
  %v2118 = vpow.pop %v2117
  %v2119 = vmul.f32 %v2090, 1.442695
  %v2120 = vpow.pop %v2119
  %v2121 = vmul.f32 %v2091, 1.442695
  %v2122 = vpow.pop %v2121
  %v2123 = vmul.f32 %v2092, 1.442695
  %v2124 = vpow.pop %v2123
  %v2125 = vadd.f32 %v2094, %v2096
  %2126 = vadd.xlane.f32.xlu0 %v2125
  %v2127 = vpop.xlane.xlu0 %2126
  %v2128 = vadd.f32 %v2098, %v2100
  %2129 = vadd.xlane.f32.xlu0 %v2128
  %v2130 = vpop.xlane.xlu0 %2129
  %v2131 = vadd.f32 %v2102, %v2104
  %2132 = vadd.xlane.f32.xlu0 %v2131
  %v2133 = vpop.xlane.xlu0 %2132
  %v2134 = vadd.f32 %v2106, %v2108
  %2135 = vadd.xlane.f32.xlu0 %v2134
  %v2136 = vpop.xlane.xlu0 %2135
  %v2137 = vadd.f32 %v2110, %v2112
  %2138 = vadd.xlane.f32.xlu0 %v2137
  %v2139 = vpop.xlane.xlu0 %2138
  %v2140 = vadd.f32 %v2114, %v2116
  %2141 = vadd.xlane.f32.xlu0 %v2140
  %v2142 = vpop.xlane.xlu0 %2141
  %v2143 = vadd.f32 %v2118, %v2120
  %2144 = vadd.xlane.f32.xlu0 %v2143
  %v2145 = vpop.xlane.xlu0 %2144
  %v2146 = vadd.f32 %v2122, %v2124
  %2147 = vadd.xlane.f32.xlu0 %v2146
  %v2148 = vpop.xlane.xlu0 %2147
  %v2149 = vrcp.pop %v2127
  %v2150 = vmul.f32 1.0, %v2149
  %v2151 = vrcp.pop %v2130
  %v2152 = vmul.f32 1.0, %v2151
  %v2153 = vrcp.pop %v2133
  %v2154 = vmul.f32 1.0, %v2153
  %v2155 = vrcp.pop %v2136
  %v2156 = vmul.f32 1.0, %v2155
  %v2157 = vrcp.pop %v2139
  %v2158 = vmul.f32 1.0, %v2157
  %v2159 = vrcp.pop %v2142
  %v2160 = vmul.f32 1.0, %v2159
  %v2161 = vrcp.pop %v2145
  %v2162 = vmul.f32 1.0, %v2161
  %v2163 = vrcp.pop %v2148
  %v2164 = vmul.f32 1.0, %v2163
  %v2165 = vmul.f32 %v2094, %v2150
  %v2166 = vmul.f32 %v2096, %v2150
  %v2167 = vmul.f32 %v2098, %v2152
  %v2168 = vmul.f32 %v2100, %v2152
  %v2169 = vmul.f32 %v2102, %v2154
  %v2170 = vmul.f32 %v2104, %v2154
  %v2171 = vmul.f32 %v2106, %v2156
  %v2172 = vmul.f32 %v2108, %v2156
  %v2173 = vmul.f32 %v2110, %v2158
  %v2174 = vmul.f32 %v2112, %v2158
  %v2175 = vmul.f32 %v2114, %v2160
  %v2176 = vmul.f32 %v2116, %v2160
  %v2177 = vmul.f32 %v2118, %v2162
  %v2178 = vmul.f32 %v2120, %v2162
  %v2179 = vmul.f32 %v2122, %v2164
  %v2180 = vmul.f32 %v2124, %v2164
  %v2181 = vadd.f32 %v2165, %v2167
  %v2182 = vadd.f32 %v2181, %v2169
  %v2183 = vadd.f32 %v2182, %v2171
  %v2184 = vadd.f32 %v2183, %v2173
  %v2185 = vadd.f32 %v2184, %v2175
  %v2186 = vadd.f32 %v2185, %v2177
  %v2187 = vadd.f32 %v2186, %v2179
  %v2188 = vrot.slane %v2187, 4
  %v2189 = vadd.f32 %v2187, %v2188
  %v2190 = vrot.slane %v2189, 2
  %v2191 = vadd.f32 %v2189, %v2190
  %v2192 = vrot.slane %v2191, 1
  %v2193 = vadd.f32 %v2191, %v2192
  %v2194 = vadd.f32 %v2166, %v2168
  %v2195 = vadd.f32 %v2194, %v2170
  %v2196 = vadd.f32 %v2195, %v2172
  %v2197 = vadd.f32 %v2196, %v2174
  %v2198 = vadd.f32 %v2197, %v2176
  %v2199 = vadd.f32 %v2198, %v2178
  %v2200 = vadd.f32 %v2199, %v2180
  %v2201 = vrot.slane %v2200, 4
  %v2202 = vadd.f32 %v2200, %v2201
  %v2203 = vrot.slane %v2202, 2
  %v2204 = vadd.f32 %v2202, %v2203
  %v2205 = vrot.slane %v2204, 1
  %v2206 = vadd.f32 %v2204, %v2205
  %v2207 = vadd.f32 %v2193, 1e-09
  %v2208 = vadd.f32 %v2206, 1e-09
  %v2209 = vrcp.pop %v2207
  %v2210 = vmul.f32 1.0, %v2209
  %v2211 = vrcp.pop %v2208
  %v2212 = vmul.f32 1.0, %v2211
  %vm2213 = vcmask 523264
  %v2215 = vsel %vm2213, %v37, 0
  %v2217 = vand.u32 %v2166, 4294901760
  %2218 = vmatprep.subr.mxu0 %v2217
  %v2219 = vand.u32 %v2165, 4294901760
  %2220 = vmatpush1.msra.mxu0 %v2219
  %v2221 = vand.u32 %v2168, 4294901760
  %2222 = vmatprep.subr.mxu0 %v2221
  %v2223 = vand.u32 %v2167, 4294901760
  %2224 = vmatpush1.msra.mxu0 %v2223
  %v2225 = vand.u32 %v2170, 4294901760
  %2226 = vmatprep.subr.mxu0 %v2225
  %v2227 = vand.u32 %v2169, 4294901760
  %2228 = vmatpush1.msra.mxu0 %v2227
  %v2229 = vand.u32 %v2172, 4294901760
  %2230 = vmatprep.subr.mxu0 %v2229
  %v2231 = vand.u32 %v2171, 4294901760
  %2232 = vmatpush1.msra.mxu0 %v2231
  %v2233 = vand.u32 %v2174, 4294901760
  %2234 = vmatprep.subr.mxu0 %v2233
  %v2235 = vand.u32 %v2173, 4294901760
  %2236 = vmatpush1.msra.mxu0 %v2235
  %v2237 = vand.u32 %v2176, 4294901760
  %2238 = vmatprep.subr.mxu0 %v2237
  %v2239 = vand.u32 %v2175, 4294901760
  %2240 = vmatpush1.msra.mxu0 %v2239
  %v2241 = vand.u32 %v2178, 4294901760
  %2242 = vmatprep.subr.mxu0 %v2241
  %v2243 = vand.u32 %v2177, 4294901760
  %2244 = vmatpush1.msra.mxu0 %v2243
  %v2245 = vand.u32 %v2180, 4294901760
  %2246 = vmatprep.subr.mxu0 %v2245
  %v2247 = vand.u32 %v2179, 4294901760
  %2248 = vmatpush1.msra.mxu0 %v2247
  %2249 = vmatprep.subr.mxu0 0.0
  %2250 = vmatpush1.msra.mxu0 0.0
  %2251 = vmatprep.subr.mxu0 0.0
  %2252 = vmatpush1.msra.mxu0 0.0
  %2253 = vmatprep.subr.mxu0 0.0
  %2254 = vmatpush1.msra.mxu0 0.0
  %2255 = vmatprep.subr.mxu0 0.0
  %2256 = vmatpush1.msra.mxu0 0.0
  %2257 = vmatprep.subr.mxu0 0.0
  %2258 = vmatpush1.msra.mxu0 0.0
  %2259 = vmatprep.subr.mxu0 0.0
  %2260 = vmatpush1.msra.mxu0 0.0
  %2261 = vmatprep.subr.mxu0 0.0
  %2262 = vmatpush1.msra.mxu0 0.0
  %2263 = vmatprep.subr.mxu0 0.0
  %2264 = vmatpush1.msra.mxu0 0.0
  %2265 = vmatprep.subr.mxu0 0.0
  %2266 = vmatpush1.msra.mxu0 0.0
  %2267 = vmatprep.subr.mxu0 0.0
  %2268 = vmatpush1.msra.mxu0 0.0
  %2269 = vmatprep.subr.mxu0 0.0
  %2270 = vmatpush1.msra.mxu0 0.0
  %2271 = vmatprep.subr.mxu0 0.0
  %2272 = vmatpush1.msra.mxu0 0.0
  %2273 = vmatprep.subr.mxu0 0.0
  %2274 = vmatpush1.msra.mxu0 0.0
  %2275 = vmatprep.subr.mxu0 0.0
  %2276 = vmatpush1.msra.mxu0 0.0
  %2277 = vmatprep.subr.mxu0 0.0
  %2278 = vmatpush1.msra.mxu0 0.0
  %2279 = vmatprep.subr.mxu0 0.0
  %2280 = vmatpush1.msra.mxu0 0.0
  %2281 = vmatprep.subr.mxu0 0.0
  %2282 = vmatpush1.msra.mxu0 0.0
  %2283 = vmatprep.subr.mxu0 0.0
  %2284 = vmatpush1.msra.mxu0 0.0
  %2285 = vmatprep.subr.mxu0 0.0
  %2286 = vmatpush1.msra.mxu0 0.0
  %2287 = vmatprep.subr.mxu0 0.0
  %2288 = vmatpush1.msra.mxu0 0.0
  %2289 = vmatprep.subr.mxu0 0.0
  %2290 = vmatpush1.msra.mxu0 0.0
  %2291 = vmatprep.subr.mxu0 0.0
  %2292 = vmatpush1.msra.mxu0 0.0
  %2293 = vmatprep.subr.mxu0 0.0
  %2294 = vmatpush1.msra.mxu0 0.0
  %2295 = vmatprep.subr.mxu0 0.0
  %2296 = vmatpush1.msra.mxu0 0.0
  %2297 = vmatprep.mubr.f32.mxu0 0.0
  %v2298 = vand.u32 %v2215, 4294901760
  %v2299 = vsub.f32 %v2215, %v2298
  %v2300 = vand.u32 %v2299, 4294901760
  %v2301 = vsub.f32 %v2299, %v2300
  %v2302 = vand.u32 %v2301, 4294901760
  %2303 = vmatmul.mubr.f32.gmra.mrb[0].mxu0 %v2302
  %v2304 = vpop.f32.mrb[0].mxu0
  %v2305 = vadd.f32 0.0, %v2304
  %v2306 = vpop.f32.mrb[0].mxu0
  %v2307 = vadd.f32 0.0, %v2306
  %2308 = vdwg.mxu0
  %v2309 = vand.u32 %v2166, 4294901760
  %v2310 = vsub.f32 %v2166, %v2309
  %v2311 = vand.u32 %v2310, 4294901760
  %v2312 = vsub.f32 %v2310, %v2311
  %v2313 = vand.u32 %v2312, 4294901760
  %2314 = vmatprep.subr.mxu0 %v2313
  %v2315 = vand.u32 %v2165, 4294901760
  %v2316 = vsub.f32 %v2165, %v2315
  %v2317 = vand.u32 %v2316, 4294901760
  %v2318 = vsub.f32 %v2316, %v2317
  %v2319 = vand.u32 %v2318, 4294901760
  %2320 = vmatpush1.msra.mxu0 %v2319
  %v2321 = vand.u32 %v2168, 4294901760
  %v2322 = vsub.f32 %v2168, %v2321
  %v2323 = vand.u32 %v2322, 4294901760
  %v2324 = vsub.f32 %v2322, %v2323
  %v2325 = vand.u32 %v2324, 4294901760
  %2326 = vmatprep.subr.mxu0 %v2325
  %v2327 = vand.u32 %v2167, 4294901760
  %v2328 = vsub.f32 %v2167, %v2327
  %v2329 = vand.u32 %v2328, 4294901760
  %v2330 = vsub.f32 %v2328, %v2329
  %v2331 = vand.u32 %v2330, 4294901760
  %2332 = vmatpush1.msra.mxu0 %v2331
  %v2333 = vand.u32 %v2170, 4294901760
  %v2334 = vsub.f32 %v2170, %v2333
  %v2335 = vand.u32 %v2334, 4294901760
  %v2336 = vsub.f32 %v2334, %v2335
  %v2337 = vand.u32 %v2336, 4294901760
  %2338 = vmatprep.subr.mxu0 %v2337
  %v2339 = vand.u32 %v2169, 4294901760
  %v2340 = vsub.f32 %v2169, %v2339
  %v2341 = vand.u32 %v2340, 4294901760
  %v2342 = vsub.f32 %v2340, %v2341
  %v2343 = vand.u32 %v2342, 4294901760
  %2344 = vmatpush1.msra.mxu0 %v2343
  %v2345 = vand.u32 %v2172, 4294901760
  %v2346 = vsub.f32 %v2172, %v2345
  %v2347 = vand.u32 %v2346, 4294901760
  %v2348 = vsub.f32 %v2346, %v2347
  %v2349 = vand.u32 %v2348, 4294901760
  %2350 = vmatprep.subr.mxu0 %v2349
  %v2351 = vand.u32 %v2171, 4294901760
  %v2352 = vsub.f32 %v2171, %v2351
  %v2353 = vand.u32 %v2352, 4294901760
  %v2354 = vsub.f32 %v2352, %v2353
  %v2355 = vand.u32 %v2354, 4294901760
  %2356 = vmatpush1.msra.mxu0 %v2355
  %v2357 = vand.u32 %v2174, 4294901760
  %v2358 = vsub.f32 %v2174, %v2357
  %v2359 = vand.u32 %v2358, 4294901760
  %v2360 = vsub.f32 %v2358, %v2359
  %v2361 = vand.u32 %v2360, 4294901760
  %2362 = vmatprep.subr.mxu0 %v2361
  %v2363 = vand.u32 %v2173, 4294901760
  %v2364 = vsub.f32 %v2173, %v2363
  %v2365 = vand.u32 %v2364, 4294901760
  %v2366 = vsub.f32 %v2364, %v2365
  %v2367 = vand.u32 %v2366, 4294901760
  %2368 = vmatpush1.msra.mxu0 %v2367
  %v2369 = vand.u32 %v2176, 4294901760
  %v2370 = vsub.f32 %v2176, %v2369
  %v2371 = vand.u32 %v2370, 4294901760
  %v2372 = vsub.f32 %v2370, %v2371
  %v2373 = vand.u32 %v2372, 4294901760
  %2374 = vmatprep.subr.mxu0 %v2373
  %v2375 = vand.u32 %v2175, 4294901760
  %v2376 = vsub.f32 %v2175, %v2375
  %v2377 = vand.u32 %v2376, 4294901760
  %v2378 = vsub.f32 %v2376, %v2377
  %v2379 = vand.u32 %v2378, 4294901760
  %2380 = vmatpush1.msra.mxu0 %v2379
  %v2381 = vand.u32 %v2178, 4294901760
  %v2382 = vsub.f32 %v2178, %v2381
  %v2383 = vand.u32 %v2382, 4294901760
  %v2384 = vsub.f32 %v2382, %v2383
  %v2385 = vand.u32 %v2384, 4294901760
  %2386 = vmatprep.subr.mxu0 %v2385
  %v2387 = vand.u32 %v2177, 4294901760
  %v2388 = vsub.f32 %v2177, %v2387
  %v2389 = vand.u32 %v2388, 4294901760
  %v2390 = vsub.f32 %v2388, %v2389
  %v2391 = vand.u32 %v2390, 4294901760
  %2392 = vmatpush1.msra.mxu0 %v2391
  %v2393 = vand.u32 %v2180, 4294901760
  %v2394 = vsub.f32 %v2180, %v2393
  %v2395 = vand.u32 %v2394, 4294901760
  %v2396 = vsub.f32 %v2394, %v2395
  %v2397 = vand.u32 %v2396, 4294901760
  %2398 = vmatprep.subr.mxu0 %v2397
  %v2399 = vand.u32 %v2179, 4294901760
  %v2400 = vsub.f32 %v2179, %v2399
  %v2401 = vand.u32 %v2400, 4294901760
  %v2402 = vsub.f32 %v2400, %v2401
  %v2403 = vand.u32 %v2402, 4294901760
  %2404 = vmatpush1.msra.mxu0 %v2403
  %2405 = vmatprep.subr.mxu0 0.0
  %2406 = vmatpush1.msra.mxu0 0.0
  %2407 = vmatprep.subr.mxu0 0.0
  %2408 = vmatpush1.msra.mxu0 0.0
  %2409 = vmatprep.subr.mxu0 0.0
  %2410 = vmatpush1.msra.mxu0 0.0
  %2411 = vmatprep.subr.mxu0 0.0
  %2412 = vmatpush1.msra.mxu0 0.0
  %2413 = vmatprep.subr.mxu0 0.0
  %2414 = vmatpush1.msra.mxu0 0.0
  %2415 = vmatprep.subr.mxu0 0.0
  %2416 = vmatpush1.msra.mxu0 0.0
  %2417 = vmatprep.subr.mxu0 0.0
  %2418 = vmatpush1.msra.mxu0 0.0
  %2419 = vmatprep.subr.mxu0 0.0
  %2420 = vmatpush1.msra.mxu0 0.0
  %2421 = vmatprep.subr.mxu0 0.0
  %2422 = vmatpush1.msra.mxu0 0.0
  %2423 = vmatprep.subr.mxu0 0.0
  %2424 = vmatpush1.msra.mxu0 0.0
  %2425 = vmatprep.subr.mxu0 0.0
  %2426 = vmatpush1.msra.mxu0 0.0
  %2427 = vmatprep.subr.mxu0 0.0
  %2428 = vmatpush1.msra.mxu0 0.0
  %2429 = vmatprep.subr.mxu0 0.0
  %2430 = vmatpush1.msra.mxu0 0.0
  %2431 = vmatprep.subr.mxu0 0.0
  %2432 = vmatpush1.msra.mxu0 0.0
  %2433 = vmatprep.subr.mxu0 0.0
  %2434 = vmatpush1.msra.mxu0 0.0
  %2435 = vmatprep.subr.mxu0 0.0
  %2436 = vmatpush1.msra.mxu0 0.0
  %2437 = vmatprep.subr.mxu0 0.0
  %2438 = vmatpush1.msra.mxu0 0.0
  %2439 = vmatprep.subr.mxu0 0.0
  %2440 = vmatpush1.msra.mxu0 0.0
  %2441 = vmatprep.subr.mxu0 0.0
  %2442 = vmatpush1.msra.mxu0 0.0
  %2443 = vmatprep.subr.mxu0 0.0
  %2444 = vmatpush1.msra.mxu0 0.0
  %2445 = vmatprep.subr.mxu0 0.0
  %2446 = vmatpush1.msra.mxu0 0.0
  %2447 = vmatprep.subr.mxu0 0.0
  %2448 = vmatpush1.msra.mxu0 0.0
  %2449 = vmatprep.subr.mxu0 0.0
  %2450 = vmatpush1.msra.mxu0 0.0
  %2451 = vmatprep.subr.mxu0 0.0
  %2452 = vmatpush1.msra.mxu0 0.0
  %2453 = vmatprep.mubr.f32.mxu0 0.0
  %v2454 = vand.u32 %v2215, 4294901760
  %2455 = vmatmul.mubr.f32.gmra.mrb[0].mxu0 %v2454
  %v2456 = vpop.f32.mrb[0].mxu0
  %v2457 = vadd.f32 %v2305, %v2456
  %v2458 = vpop.f32.mrb[0].mxu0
  %v2459 = vadd.f32 %v2307, %v2458
  %2460 = vdwg.mxu0
  %v2461 = vand.u32 %v2166, 4294901760
  %v2462 = vsub.f32 %v2166, %v2461
  %2463 = vmatprep.subr.mxu0 %v2462
  %v2464 = vand.u32 %v2165, 4294901760
  %v2465 = vsub.f32 %v2165, %v2464
  %2466 = vmatpush1.msra.mxu0 %v2465
  %v2467 = vand.u32 %v2168, 4294901760
  %v2468 = vsub.f32 %v2168, %v2467
  %2469 = vmatprep.subr.mxu0 %v2468
  %v2470 = vand.u32 %v2167, 4294901760
  %v2471 = vsub.f32 %v2167, %v2470
  %2472 = vmatpush1.msra.mxu0 %v2471
  %v2473 = vand.u32 %v2170, 4294901760
  %v2474 = vsub.f32 %v2170, %v2473
  %2475 = vmatprep.subr.mxu0 %v2474
  %v2476 = vand.u32 %v2169, 4294901760
  %v2477 = vsub.f32 %v2169, %v2476
  %2478 = vmatpush1.msra.mxu0 %v2477
  %v2479 = vand.u32 %v2172, 4294901760
  %v2480 = vsub.f32 %v2172, %v2479
  %2481 = vmatprep.subr.mxu0 %v2480
  %v2482 = vand.u32 %v2171, 4294901760
  %v2483 = vsub.f32 %v2171, %v2482
  %2484 = vmatpush1.msra.mxu0 %v2483
  %v2485 = vand.u32 %v2174, 4294901760
  %v2486 = vsub.f32 %v2174, %v2485
  %2487 = vmatprep.subr.mxu0 %v2486
  %v2488 = vand.u32 %v2173, 4294901760
  %v2489 = vsub.f32 %v2173, %v2488
  %2490 = vmatpush1.msra.mxu0 %v2489
  %v2491 = vand.u32 %v2176, 4294901760
  %v2492 = vsub.f32 %v2176, %v2491
  %2493 = vmatprep.subr.mxu0 %v2492
  %v2494 = vand.u32 %v2175, 4294901760
  %v2495 = vsub.f32 %v2175, %v2494
  %2496 = vmatpush1.msra.mxu0 %v2495
  %v2497 = vand.u32 %v2178, 4294901760
  %v2498 = vsub.f32 %v2178, %v2497
  %2499 = vmatprep.subr.mxu0 %v2498
  %v2500 = vand.u32 %v2177, 4294901760
  %v2501 = vsub.f32 %v2177, %v2500
  %2502 = vmatpush1.msra.mxu0 %v2501
  %v2503 = vand.u32 %v2180, 4294901760
  %v2504 = vsub.f32 %v2180, %v2503
  %2505 = vmatprep.subr.mxu0 %v2504
  %v2506 = vand.u32 %v2179, 4294901760
  %v2507 = vsub.f32 %v2179, %v2506
  %2508 = vmatpush1.msra.mxu0 %v2507
  %2509 = vmatprep.subr.mxu0 0.0
  %2510 = vmatpush1.msra.mxu0 0.0
  %2511 = vmatprep.subr.mxu0 0.0
  %2512 = vmatpush1.msra.mxu0 0.0
  %2513 = vmatprep.subr.mxu0 0.0
  %2514 = vmatpush1.msra.mxu0 0.0
  %2515 = vmatprep.subr.mxu0 0.0
  %2516 = vmatpush1.msra.mxu0 0.0
  %2517 = vmatprep.subr.mxu0 0.0
  %2518 = vmatpush1.msra.mxu0 0.0
  %2519 = vmatprep.subr.mxu0 0.0
  %2520 = vmatpush1.msra.mxu0 0.0
  %2521 = vmatprep.subr.mxu0 0.0
  %2522 = vmatpush1.msra.mxu0 0.0
  %2523 = vmatprep.subr.mxu0 0.0
  %2524 = vmatpush1.msra.mxu0 0.0
  %2525 = vmatprep.subr.mxu0 0.0
  %2526 = vmatpush1.msra.mxu0 0.0
  %2527 = vmatprep.subr.mxu0 0.0
  %2528 = vmatpush1.msra.mxu0 0.0
  %2529 = vmatprep.subr.mxu0 0.0
  %2530 = vmatpush1.msra.mxu0 0.0
  %2531 = vmatprep.subr.mxu0 0.0
  %2532 = vmatpush1.msra.mxu0 0.0
  %2533 = vmatprep.subr.mxu0 0.0
  %2534 = vmatpush1.msra.mxu0 0.0
  %2535 = vmatprep.subr.mxu0 0.0
  %2536 = vmatpush1.msra.mxu0 0.0
  %2537 = vmatprep.subr.mxu0 0.0
  %2538 = vmatpush1.msra.mxu0 0.0
  %2539 = vmatprep.subr.mxu0 0.0
  %2540 = vmatpush1.msra.mxu0 0.0
  %2541 = vmatprep.subr.mxu0 0.0
  %2542 = vmatpush1.msra.mxu0 0.0
  %2543 = vmatprep.subr.mxu0 0.0
  %2544 = vmatpush1.msra.mxu0 0.0
  %2545 = vmatprep.subr.mxu0 0.0
  %2546 = vmatpush1.msra.mxu0 0.0
  %2547 = vmatprep.subr.mxu0 0.0
  %2548 = vmatpush1.msra.mxu0 0.0
  %2549 = vmatprep.subr.mxu0 0.0
  %2550 = vmatpush1.msra.mxu0 0.0
  %2551 = vmatprep.subr.mxu0 0.0
  %2552 = vmatpush1.msra.mxu0 0.0
  %2553 = vmatprep.subr.mxu0 0.0
  %2554 = vmatpush1.msra.mxu0 0.0
  %2555 = vmatprep.subr.mxu0 0.0
  %2556 = vmatpush1.msra.mxu0 0.0
  %2557 = vmatprep.mubr.f32.mxu0 0.0
  %v2558 = vand.u32 %v2215, 4294901760
  %v2559 = vsub.f32 %v2215, %v2558
  %2560 = vmatmul.mubr.f32.gmra.mrb[0].mxu0 %v2559
  %v2561 = vpop.f32.mrb[0].mxu0
  %v2562 = vadd.f32 %v2457, %v2561
  %v2563 = vpop.f32.mrb[0].mxu0
  %v2564 = vadd.f32 %v2459, %v2563
  %2565 = vdwg.mxu0
  %v2566 = vand.u32 %v2166, 4294901760
  %2567 = vmatprep.subr.mxu0 %v2566
  %v2568 = vand.u32 %v2165, 4294901760
  %2569 = vmatpush1.msra.mxu0 %v2568
  %v2570 = vand.u32 %v2168, 4294901760
  %2571 = vmatprep.subr.mxu0 %v2570
  %v2572 = vand.u32 %v2167, 4294901760
  %2573 = vmatpush1.msra.mxu0 %v2572
  %v2574 = vand.u32 %v2170, 4294901760
  %2575 = vmatprep.subr.mxu0 %v2574
  %v2576 = vand.u32 %v2169, 4294901760
  %2577 = vmatpush1.msra.mxu0 %v2576
  %v2578 = vand.u32 %v2172, 4294901760
  %2579 = vmatprep.subr.mxu0 %v2578
  %v2580 = vand.u32 %v2171, 4294901760
  %2581 = vmatpush1.msra.mxu0 %v2580
  %v2582 = vand.u32 %v2174, 4294901760
  %2583 = vmatprep.subr.mxu0 %v2582
  %v2584 = vand.u32 %v2173, 4294901760
  %2585 = vmatpush1.msra.mxu0 %v2584
  %v2586 = vand.u32 %v2176, 4294901760
  %2587 = vmatprep.subr.mxu0 %v2586
  %v2588 = vand.u32 %v2175, 4294901760
  %2589 = vmatpush1.msra.mxu0 %v2588
  %v2590 = vand.u32 %v2178, 4294901760
  %2591 = vmatprep.subr.mxu0 %v2590
  %v2592 = vand.u32 %v2177, 4294901760
  %2593 = vmatpush1.msra.mxu0 %v2592
  %v2594 = vand.u32 %v2180, 4294901760
  %2595 = vmatprep.subr.mxu0 %v2594
  %v2596 = vand.u32 %v2179, 4294901760
  %2597 = vmatpush1.msra.mxu0 %v2596
  %2598 = vmatprep.subr.mxu0 0.0
  %2599 = vmatpush1.msra.mxu0 0.0
  %2600 = vmatprep.subr.mxu0 0.0
  %2601 = vmatpush1.msra.mxu0 0.0
  %2602 = vmatprep.subr.mxu0 0.0
  %2603 = vmatpush1.msra.mxu0 0.0
  %2604 = vmatprep.subr.mxu0 0.0
  %2605 = vmatpush1.msra.mxu0 0.0
  %2606 = vmatprep.subr.mxu0 0.0
  %2607 = vmatpush1.msra.mxu0 0.0
  %2608 = vmatprep.subr.mxu0 0.0
  %2609 = vmatpush1.msra.mxu0 0.0
  %2610 = vmatprep.subr.mxu0 0.0
  %2611 = vmatpush1.msra.mxu0 0.0
  %2612 = vmatprep.subr.mxu0 0.0
  %2613 = vmatpush1.msra.mxu0 0.0
  %2614 = vmatprep.subr.mxu0 0.0
  %2615 = vmatpush1.msra.mxu0 0.0
  %2616 = vmatprep.subr.mxu0 0.0
  %2617 = vmatpush1.msra.mxu0 0.0
  %2618 = vmatprep.subr.mxu0 0.0
  %2619 = vmatpush1.msra.mxu0 0.0
  %2620 = vmatprep.subr.mxu0 0.0
  %2621 = vmatpush1.msra.mxu0 0.0
  %2622 = vmatprep.subr.mxu0 0.0
  %2623 = vmatpush1.msra.mxu0 0.0
  %2624 = vmatprep.subr.mxu0 0.0
  %2625 = vmatpush1.msra.mxu0 0.0
  %2626 = vmatprep.subr.mxu0 0.0
  %2627 = vmatpush1.msra.mxu0 0.0
  %2628 = vmatprep.subr.mxu0 0.0
  %2629 = vmatpush1.msra.mxu0 0.0
  %2630 = vmatprep.subr.mxu0 0.0
  %2631 = vmatpush1.msra.mxu0 0.0
  %2632 = vmatprep.subr.mxu0 0.0
  %2633 = vmatpush1.msra.mxu0 0.0
  %2634 = vmatprep.subr.mxu0 0.0
  %2635 = vmatpush1.msra.mxu0 0.0
  %2636 = vmatprep.subr.mxu0 0.0
  %2637 = vmatpush1.msra.mxu0 0.0
  %2638 = vmatprep.subr.mxu0 0.0
  %2639 = vmatpush1.msra.mxu0 0.0
  %2640 = vmatprep.subr.mxu0 0.0
  %2641 = vmatpush1.msra.mxu0 0.0
  %2642 = vmatprep.subr.mxu0 0.0
  %2643 = vmatpush1.msra.mxu0 0.0
  %2644 = vmatprep.subr.mxu0 0.0
  %2645 = vmatpush1.msra.mxu0 0.0
  %2646 = vmatprep.mubr.f32.mxu0 0.0
  %v2647 = vand.u32 %v2215, 4294901760
  %v2648 = vsub.f32 %v2215, %v2647
  %v2649 = vand.u32 %v2648, 4294901760
  %2650 = vmatmul.mubr.f32.gmra.mrb[0].mxu0 %v2649
  %v2651 = vpop.f32.mrb[0].mxu0
  %v2652 = vadd.f32 %v2562, %v2651
  %v2653 = vpop.f32.mrb[0].mxu0
  %v2654 = vadd.f32 %v2564, %v2653
  %2655 = vdwg.mxu0
  %v2656 = vand.u32 %v2166, 4294901760
  %v2657 = vsub.f32 %v2166, %v2656
  %v2658 = vand.u32 %v2657, 4294901760
  %2659 = vmatprep.subr.mxu0 %v2658
  %v2660 = vand.u32 %v2165, 4294901760
  %v2661 = vsub.f32 %v2165, %v2660
  %v2662 = vand.u32 %v2661, 4294901760
  %2663 = vmatpush1.msra.mxu0 %v2662
  %v2664 = vand.u32 %v2168, 4294901760
  %v2665 = vsub.f32 %v2168, %v2664
  %v2666 = vand.u32 %v2665, 4294901760
  %2667 = vmatprep.subr.mxu0 %v2666
  %v2668 = vand.u32 %v2167, 4294901760
  %v2669 = vsub.f32 %v2167, %v2668
  %v2670 = vand.u32 %v2669, 4294901760
  %2671 = vmatpush1.msra.mxu0 %v2670
  %v2672 = vand.u32 %v2170, 4294901760
  %v2673 = vsub.f32 %v2170, %v2672
  %v2674 = vand.u32 %v2673, 4294901760
  %2675 = vmatprep.subr.mxu0 %v2674
  %v2676 = vand.u32 %v2169, 4294901760
  %v2677 = vsub.f32 %v2169, %v2676
  %v2678 = vand.u32 %v2677, 4294901760
  %2679 = vmatpush1.msra.mxu0 %v2678
  %v2680 = vand.u32 %v2172, 4294901760
  %v2681 = vsub.f32 %v2172, %v2680
  %v2682 = vand.u32 %v2681, 4294901760
  %2683 = vmatprep.subr.mxu0 %v2682
  %v2684 = vand.u32 %v2171, 4294901760
  %v2685 = vsub.f32 %v2171, %v2684
  %v2686 = vand.u32 %v2685, 4294901760
  %2687 = vmatpush1.msra.mxu0 %v2686
  %v2688 = vand.u32 %v2174, 4294901760
  %v2689 = vsub.f32 %v2174, %v2688
  %v2690 = vand.u32 %v2689, 4294901760
  %2691 = vmatprep.subr.mxu0 %v2690
  %v2692 = vand.u32 %v2173, 4294901760
  %v2693 = vsub.f32 %v2173, %v2692
  %v2694 = vand.u32 %v2693, 4294901760
  %2695 = vmatpush1.msra.mxu0 %v2694
  %v2696 = vand.u32 %v2176, 4294901760
  %v2697 = vsub.f32 %v2176, %v2696
  %v2698 = vand.u32 %v2697, 4294901760
  %2699 = vmatprep.subr.mxu0 %v2698
  %v2700 = vand.u32 %v2175, 4294901760
  %v2701 = vsub.f32 %v2175, %v2700
  %v2702 = vand.u32 %v2701, 4294901760
  %2703 = vmatpush1.msra.mxu0 %v2702
  %v2704 = vand.u32 %v2178, 4294901760
  %v2705 = vsub.f32 %v2178, %v2704
  %v2706 = vand.u32 %v2705, 4294901760
  %2707 = vmatprep.subr.mxu0 %v2706
  %v2708 = vand.u32 %v2177, 4294901760
  %v2709 = vsub.f32 %v2177, %v2708
  %v2710 = vand.u32 %v2709, 4294901760
  %2711 = vmatpush1.msra.mxu0 %v2710
  %v2712 = vand.u32 %v2180, 4294901760
  %v2713 = vsub.f32 %v2180, %v2712
  %v2714 = vand.u32 %v2713, 4294901760
  %2715 = vmatprep.subr.mxu0 %v2714
  %v2716 = vand.u32 %v2179, 4294901760
  %v2717 = vsub.f32 %v2179, %v2716
  %v2718 = vand.u32 %v2717, 4294901760
  %2719 = vmatpush1.msra.mxu0 %v2718
  %2720 = vmatprep.subr.mxu0 0.0
  %2721 = vmatpush1.msra.mxu0 0.0
  %2722 = vmatprep.subr.mxu0 0.0
  %2723 = vmatpush1.msra.mxu0 0.0
  %2724 = vmatprep.subr.mxu0 0.0
  %2725 = vmatpush1.msra.mxu0 0.0
  %2726 = vmatprep.subr.mxu0 0.0
  %2727 = vmatpush1.msra.mxu0 0.0
  %2728 = vmatprep.subr.mxu0 0.0
  %2729 = vmatpush1.msra.mxu0 0.0
  %2730 = vmatprep.subr.mxu0 0.0
  %2731 = vmatpush1.msra.mxu0 0.0
  %2732 = vmatprep.subr.mxu0 0.0
  %2733 = vmatpush1.msra.mxu0 0.0
  %2734 = vmatprep.subr.mxu0 0.0
  %2735 = vmatpush1.msra.mxu0 0.0
  %2736 = vmatprep.subr.mxu0 0.0
  %2737 = vmatpush1.msra.mxu0 0.0
  %2738 = vmatprep.subr.mxu0 0.0
  %2739 = vmatpush1.msra.mxu0 0.0
  %2740 = vmatprep.subr.mxu0 0.0
  %2741 = vmatpush1.msra.mxu0 0.0
  %2742 = vmatprep.subr.mxu0 0.0
  %2743 = vmatpush1.msra.mxu0 0.0
  %2744 = vmatprep.subr.mxu0 0.0
  %2745 = vmatpush1.msra.mxu0 0.0
  %2746 = vmatprep.subr.mxu0 0.0
  %2747 = vmatpush1.msra.mxu0 0.0
  %2748 = vmatprep.subr.mxu0 0.0
  %2749 = vmatpush1.msra.mxu0 0.0
  %2750 = vmatprep.subr.mxu0 0.0
  %2751 = vmatpush1.msra.mxu0 0.0
  %2752 = vmatprep.subr.mxu0 0.0
  %2753 = vmatpush1.msra.mxu0 0.0
  %2754 = vmatprep.subr.mxu0 0.0
  %2755 = vmatpush1.msra.mxu0 0.0
  %2756 = vmatprep.subr.mxu0 0.0
  %2757 = vmatpush1.msra.mxu0 0.0
  %2758 = vmatprep.subr.mxu0 0.0
  %2759 = vmatpush1.msra.mxu0 0.0
  %2760 = vmatprep.subr.mxu0 0.0
  %2761 = vmatpush1.msra.mxu0 0.0
  %2762 = vmatprep.subr.mxu0 0.0
  %2763 = vmatpush1.msra.mxu0 0.0
  %2764 = vmatprep.subr.mxu0 0.0
  %2765 = vmatpush1.msra.mxu0 0.0
  %2766 = vmatprep.subr.mxu0 0.0
  %2767 = vmatpush1.msra.mxu0 0.0
  %2768 = vmatprep.mubr.f32.mxu0 0.0
  %v2769 = vand.u32 %v2215, 4294901760
  %2770 = vmatmul.mubr.f32.gmra.mrb[0].mxu0 %v2769
  %v2771 = vpop.f32.mrb[0].mxu0
  %v2772 = vadd.f32 %v2652, %v2771
  %v2773 = vpop.f32.mrb[0].mxu0
  %v2774 = vadd.f32 %v2654, %v2773
  %2775 = vdwg.mxu0
  %v2776 = vand.u32 %v2166, 4294901760
  %2777 = vmatprep.subr.mxu0 %v2776
  %v2778 = vand.u32 %v2165, 4294901760
  %2779 = vmatpush1.msra.mxu0 %v2778
  %v2780 = vand.u32 %v2168, 4294901760
  %2781 = vmatprep.subr.mxu0 %v2780
  %v2782 = vand.u32 %v2167, 4294901760
  %2783 = vmatpush1.msra.mxu0 %v2782
  %v2784 = vand.u32 %v2170, 4294901760
  %2785 = vmatprep.subr.mxu0 %v2784
  %v2786 = vand.u32 %v2169, 4294901760
  %2787 = vmatpush1.msra.mxu0 %v2786
  %v2788 = vand.u32 %v2172, 4294901760
  %2789 = vmatprep.subr.mxu0 %v2788
  %v2790 = vand.u32 %v2171, 4294901760
  %2791 = vmatpush1.msra.mxu0 %v2790
  %v2792 = vand.u32 %v2174, 4294901760
  %2793 = vmatprep.subr.mxu0 %v2792
  %v2794 = vand.u32 %v2173, 4294901760
  %2795 = vmatpush1.msra.mxu0 %v2794
  %v2796 = vand.u32 %v2176, 4294901760
  %2797 = vmatprep.subr.mxu0 %v2796
  %v2798 = vand.u32 %v2175, 4294901760
  %2799 = vmatpush1.msra.mxu0 %v2798
  %v2800 = vand.u32 %v2178, 4294901760
  %2801 = vmatprep.subr.mxu0 %v2800
  %v2802 = vand.u32 %v2177, 4294901760
  %2803 = vmatpush1.msra.mxu0 %v2802
  %v2804 = vand.u32 %v2180, 4294901760
  %2805 = vmatprep.subr.mxu0 %v2804
  %v2806 = vand.u32 %v2179, 4294901760
  %2807 = vmatpush1.msra.mxu0 %v2806
  %2808 = vmatprep.subr.mxu0 0.0
  %2809 = vmatpush1.msra.mxu0 0.0
  %2810 = vmatprep.subr.mxu0 0.0
  %2811 = vmatpush1.msra.mxu0 0.0
  %2812 = vmatprep.subr.mxu0 0.0
  %2813 = vmatpush1.msra.mxu0 0.0
  %2814 = vmatprep.subr.mxu0 0.0
  %2815 = vmatpush1.msra.mxu0 0.0
  %2816 = vmatprep.subr.mxu0 0.0
  %2817 = vmatpush1.msra.mxu0 0.0
  %2818 = vmatprep.subr.mxu0 0.0
  %2819 = vmatpush1.msra.mxu0 0.0
  %2820 = vmatprep.subr.mxu0 0.0
  %2821 = vmatpush1.msra.mxu0 0.0
  %2822 = vmatprep.subr.mxu0 0.0
  %2823 = vmatpush1.msra.mxu0 0.0
  %2824 = vmatprep.subr.mxu0 0.0
  %2825 = vmatpush1.msra.mxu0 0.0
  %2826 = vmatprep.subr.mxu0 0.0
  %2827 = vmatpush1.msra.mxu0 0.0
  %2828 = vmatprep.subr.mxu0 0.0
  %2829 = vmatpush1.msra.mxu0 0.0
  %2830 = vmatprep.subr.mxu0 0.0
  %2831 = vmatpush1.msra.mxu0 0.0
  %2832 = vmatprep.subr.mxu0 0.0
  %2833 = vmatpush1.msra.mxu0 0.0
  %2834 = vmatprep.subr.mxu0 0.0
  %2835 = vmatpush1.msra.mxu0 0.0
  %2836 = vmatprep.subr.mxu0 0.0
  %2837 = vmatpush1.msra.mxu0 0.0
  %2838 = vmatprep.subr.mxu0 0.0
  %2839 = vmatpush1.msra.mxu0 0.0
  %2840 = vmatprep.subr.mxu0 0.0
  %2841 = vmatpush1.msra.mxu0 0.0
  %2842 = vmatprep.subr.mxu0 0.0
  %2843 = vmatpush1.msra.mxu0 0.0
  %2844 = vmatprep.subr.mxu0 0.0
  %2845 = vmatpush1.msra.mxu0 0.0
  %2846 = vmatprep.subr.mxu0 0.0
  %2847 = vmatpush1.msra.mxu0 0.0
  %2848 = vmatprep.subr.mxu0 0.0
  %2849 = vmatpush1.msra.mxu0 0.0
  %2850 = vmatprep.subr.mxu0 0.0
  %2851 = vmatpush1.msra.mxu0 0.0
  %2852 = vmatprep.subr.mxu0 0.0
  %2853 = vmatpush1.msra.mxu0 0.0
  %2854 = vmatprep.subr.mxu0 0.0
  %2855 = vmatpush1.msra.mxu0 0.0
  %2856 = vmatprep.mubr.f32.mxu0 0.0
  %v2857 = vand.u32 %v2215, 4294901760
  %2858 = vmatmul.mubr.f32.gmra.mrb[0].mxu0 %v2857
  %v2859 = vpop.f32.mrb[0].mxu0
  %v2860 = vadd.f32 %v2772, %v2859
  %v2861 = vpop.f32.mrb[0].mxu0
  %v2862 = vadd.f32 %v2774, %v2861
  %2863 = vdwg.mxu0
  %v2864 = vmul.f32 %v2860, %v2210
  %v2865 = vmul.f32 %v2862, %v2212
  %2867 = vset.pattern.permute.xlu0 0
  %2868 = vperm.xlu0 %2867, %v38
  %v2869 = vpop.permute.xlu0 %2868
  %v2871 = vadd.f32 %v2864, %v2869
  %v2872 = vadd.f32 %v2865, %v2869
  %v2873 = vadd.f32 %v2871, %v1993
  %v2874 = vadd.f32 %v2872, %v1995
  %v2875 = vmax.f32 %v2873, 0.0
  %v2876 = vmax.f32 %v2874, 0.0
  %v2879 = vrot.slane %v2875, 4
  %v2880 = vrot.slane %v2876, 4
  %vm2883 = vcmask 1043456
  %v2884 = vsel %vm2883, %v39, %v2879
  %v2885 = vsel %vm2883, %v41, %v2880
  %2886 = vst [vmem:[%s6] sm:$0xff] %v2884
  %2887 = vst [vmem:[%s6 + $0x8] sm:$0xff] %v2885
  %2888 = vst [vmem:[%s6 + $0x10] sm:$0xf] %v2879
  %2889 = vst [vmem:[%s6 + $0x18] sm:$0xf] %v2880
  %s2890 = scalar_lea.vmem %s0, 8
  %v2891 = vld [vmem:[%s2890] sm:$0xff]
  %v2893 = vcombine.high %v2891, %v2891
  %2895 = vrot.lane.b32.xlu0 %v2891, 34
  %v2896 = vpop.permute.xlu0 %2895
  %2897 = vrot.lane.b32.xlu0 %v2893, 34
  %v2898 = vpop.permute.xlu0 %2897
  %v2899 = vsel %vm49, %v2896, %v2898
  %v2900 = vsel %vm49, %v2898, %v2896
  %v2901 = vmul.f32 %v2900, %v55
  %v2902 = vmul.f32 %v2899, %v59
  %2903 = vst [vmem:[#allocation2] sm:$0xf] %v2901
  %2904 = vst [vmem:[#allocation2 + $0x8] sm:$0xf] %v2902
  %2905 = vrot.lane.b32.xlu0 %v2891, 32
  %v2906 = vpop.permute.xlu0 %2905
  %2907 = vrot.lane.b32.xlu0 %v2893, 32
  %v2908 = vpop.permute.xlu0 %2907
  %v2909 = vsel %vm68, %v2906, %v2908
  %v2910 = vsel %vm68, %v2908, %v2906
  %v2911 = vmul.f32 %v2910, %v74
  %v2912 = vmul.f32 %v2909, %v78
  %v2915 = vrot.slane %v2911, 4
  %v2916 = vrot.slane %v2912, 4
  %2919 = vst [vmem:[#allocation2] sm:$0xf0] %v2915
  %2920 = vst [vmem:[#allocation2 + $0x8] sm:$0xf0] %v2916
  %2921 = vrot.lane.b32.xlu0 %v2891, 30
  %v2922 = vpop.permute.xlu0 %2921
  %2923 = vrot.lane.b32.xlu0 %v2893, 30
  %v2924 = vpop.permute.xlu0 %2923
  %v2925 = vsel %vm93, %v2922, %v2924
  %v2926 = vsel %vm93, %v2924, %v2922
  %v2927 = vmul.f32 %v2926, %v99
  %v2928 = vmul.f32 %v2925, %v103
  %2929 = vst [vmem:[#allocation2 + $0x10] sm:$0xf] %v2927
  %2930 = vst [vmem:[#allocation2 + $0x18] sm:$0xf] %v2928
  %2931 = vrot.lane.b32.xlu0 %v2891, 2
  %v2932 = vpop.permute.xlu0 %2931
  %2933 = vrot.lane.b32.xlu0 %v2893, 2
  %v2934 = vpop.permute.xlu0 %2933
  %v2935 = vsel %vm112, %v2932, %v2934
  %v2936 = vsel %vm112, %v2934, %v2932
  %v2937 = vmul.f32 %v2936, %v118
  %v2938 = vmul.f32 %v2935, %v122
  %v2941 = vrot.slane %v2937, 4
  %v2942 = vrot.slane %v2938, 4
  %2945 = vst [vmem:[#allocation2 + $0x10] sm:$0xf0] %v2941
  %2946 = vst [vmem:[#allocation2 + $0x18] sm:$0xf0] %v2942
  %2947 = vst [vmem:[#allocation2 + $0x20] sm:$0xf] %v2891
  %2948 = vst [vmem:[#allocation2 + $0x28] sm:$0xf] %v2893
  %2949 = vrot.lane.b32.xlu0 %v2891, 126
  %v2950 = vpop.permute.xlu0 %2949
  %2951 = vrot.lane.b32.xlu0 %v2893, 126
  %v2952 = vpop.permute.xlu0 %2951
  %v2953 = vsel %vm139, %v2950, %v2952
  %v2954 = vsel %vm139, %v2952, %v2950
  %v2955 = vmul.f32 %v2953, %v145
  %v2956 = vmul.f32 %v2954, %v149
  %v2959 = vrot.slane %v2955, 4
  %v2960 = vrot.slane %v2956, 4
  %2963 = vst [vmem:[#allocation2 + $0x20] sm:$0xf0] %v2959
  %2964 = vst [vmem:[#allocation2 + $0x28] sm:$0xf0] %v2960
  %2965 = vrot.lane.b32.xlu0 %v2891, 98
  %v2966 = vpop.permute.xlu0 %2965
  %2967 = vrot.lane.b32.xlu0 %v2893, 98
  %v2968 = vpop.permute.xlu0 %2967
  %v2969 = vsel %vm164, %v2966, %v2968
  %v2970 = vsel %vm164, %v2968, %v2966
  %v2971 = vmul.f32 %v2969, %v170
  %v2972 = vmul.f32 %v2970, %v174
  %2973 = vst [vmem:[#allocation2 + $0x30] sm:$0xf] %v2971
  %2974 = vst [vmem:[#allocation2 + $0x38] sm:$0xf] %v2972
  %2975 = vrot.lane.b32.xlu0 %v2891, 96
  %v2976 = vpop.permute.xlu0 %2975
  %2977 = vrot.lane.b32.xlu0 %v2893, 96
  %v2978 = vpop.permute.xlu0 %2977
  %v2979 = vsel %vm183, %v2976, %v2978
  %v2980 = vsel %vm183, %v2978, %v2976
  %v2981 = vmul.f32 %v2979, %v189
  %v2982 = vmul.f32 %v2980, %v193
  %v2985 = vrot.slane %v2981, 4
  %v2986 = vrot.slane %v2982, 4
  %2989 = vst [vmem:[#allocation2 + $0x30] sm:$0xf0] %v2985
  %2990 = vst [vmem:[#allocation2 + $0x38] sm:$0xf0] %v2986
  %2991 = vrot.lane.b32.xlu0 %v2891, 94
  %v2992 = vpop.permute.xlu0 %2991
  %2993 = vrot.lane.b32.xlu0 %v2893, 94
  %v2994 = vpop.permute.xlu0 %2993
  %v2995 = vsel %vm208, %v2992, %v2994
  %v2996 = vsel %vm208, %v2994, %v2992
  %v2997 = vmul.f32 %v2995, %v214
  %v2998 = vmul.f32 %v2996, %v218
  %2999 = vst [vmem:[#allocation2 + $0x40] sm:$0xf] %v2997
  %3000 = vst [vmem:[#allocation2 + $0x48] sm:$0xf] %v2998
  %3001 = vst.msk [vmem:[%s227] ss:$8 sm:$0x3] %vm226, 1.0
  %3002 = vst.msk [vmem:[%s227] ss:$8 sm:$0x0] %vm226, 1.0
  %v3003 = vld [vmem:[#allocation2] sm:$0xff]
  %v3004 = vld [vmem:[#allocation2 + $0x8] sm:$0xff]
  %v3005 = vld [vmem:[#allocation2 + $0x10] sm:$0xff]
  %v3006 = vld [vmem:[#allocation2 + $0x18] sm:$0xff]
  %v3007 = vld [vmem:[#allocation2 + $0x20] sm:$0xff]
  %v3008 = vld [vmem:[#allocation2 + $0x28] sm:$0xff]
  %v3009 = vld [vmem:[#allocation2 + $0x30] sm:$0xff]
  %v3010 = vld [vmem:[#allocation2 + $0x38] sm:$0xff]
  %v3011 = vld [vmem:[#allocation2 + $0x40] sm:$0x1f]
  %v3012 = vld [vmem:[#allocation2 + $0x48] sm:$0x1f]
  %v3014 = vsel %vm244, %v3011, 0
  %v3017 = vsel %vm244, %v3012, 0
  %v3019 = vand.u32 %v3004, 4294901760
  %3020 = vmatprep.subr.mxu0 %v3019
  %v3021 = vand.u32 %v3003, 4294901760
  %3022 = vmatpush1.msra.mxu0 %v3021
  %v3023 = vand.u32 %v3006, 4294901760
  %3024 = vmatprep.subr.mxu0 %v3023
  %v3025 = vand.u32 %v3005, 4294901760
  %3026 = vmatpush1.msra.mxu0 %v3025
  %v3027 = vand.u32 %v3008, 4294901760
  %3028 = vmatprep.subr.mxu0 %v3027
  %v3029 = vand.u32 %v3007, 4294901760
  %3030 = vmatpush1.msra.mxu0 %v3029
  %v3031 = vand.u32 %v3010, 4294901760
  %3032 = vmatprep.subr.mxu0 %v3031
  %v3033 = vand.u32 %v3009, 4294901760
  %3034 = vmatpush1.msra.mxu0 %v3033
  %v3035 = vand.u32 %v3017, 4294901760
  %3036 = vmatprep.subr.mxu0 %v3035
  %v3037 = vand.u32 %v3014, 4294901760
  %3038 = vmatpush1.msra.mxu0 %v3037
  %3039 = vmatprep.subr.mxu0 0.0
  %3040 = vmatpush1.msra.mxu0 0.0
  %3041 = vmatprep.subr.mxu0 0.0
  %3042 = vmatpush1.msra.mxu0 0.0
  %3043 = vmatprep.subr.mxu0 0.0
  %3044 = vmatpush1.msra.mxu0 0.0
  %3045 = vmatprep.subr.mxu0 0.0
  %3046 = vmatpush1.msra.mxu0 0.0
  %3047 = vmatprep.subr.mxu0 0.0
  %3048 = vmatpush1.msra.mxu0 0.0
  %3049 = vmatprep.subr.mxu0 0.0
  %3050 = vmatpush1.msra.mxu0 0.0
  %3051 = vmatprep.subr.mxu0 0.0
  %3052 = vmatpush1.msra.mxu0 0.0
  %3053 = vmatprep.subr.mxu0 0.0
  %3054 = vmatpush1.msra.mxu0 0.0
  %3055 = vmatprep.subr.mxu0 0.0
  %3056 = vmatpush1.msra.mxu0 0.0
  %3057 = vmatprep.subr.mxu0 0.0
  %3058 = vmatpush1.msra.mxu0 0.0
  %3059 = vmatprep.subr.mxu0 0.0
  %3060 = vmatpush1.msra.mxu0 0.0
  %3061 = vmatprep.subr.mxu0 0.0
  %3062 = vmatpush1.msra.mxu0 0.0
  %3063 = vmatprep.subr.mxu0 0.0
  %3064 = vmatpush1.msra.mxu0 0.0
  %3065 = vmatprep.subr.mxu0 0.0
  %3066 = vmatpush1.msra.mxu0 0.0
  %3067 = vmatprep.subr.mxu0 0.0
  %3068 = vmatpush1.msra.mxu0 0.0
  %3069 = vmatprep.subr.mxu0 0.0
  %3070 = vmatpush1.msra.mxu0 0.0
  %3071 = vmatprep.subr.mxu0 0.0
  %3072 = vmatpush1.msra.mxu0 0.0
  %3073 = vmatprep.subr.mxu0 0.0
  %3074 = vmatpush1.msra.mxu0 0.0
  %3075 = vmatprep.subr.mxu0 0.0
  %3076 = vmatpush1.msra.mxu0 0.0
  %3077 = vmatprep.subr.mxu0 0.0
  %3078 = vmatpush1.msra.mxu0 0.0
  %3079 = vmatprep.subr.mxu0 0.0
  %3080 = vmatpush1.msra.mxu0 0.0
  %3081 = vmatprep.subr.mxu0 0.0
  %3082 = vmatpush1.msra.mxu0 0.0
  %3083 = vmatprep.subr.mxu0 0.0
  %3084 = vmatpush1.msra.mxu0 0.0
  %3085 = vmatprep.subr.mxu0 0.0
  %3086 = vmatpush1.msra.mxu0 0.0
  %3087 = vmatprep.subr.mxu0 0.0
  %3088 = vmatpush1.msra.mxu0 0.0
  %3089 = vmatprep.subr.mxu0 0.0
  %3090 = vmatpush1.msra.mxu0 0.0
  %3091 = vmatprep.subr.mxu0 0.0
  %3092 = vmatpush1.msra.mxu0 0.0
  %3093 = vmatprep.mubr.f32.mxu0 0.0
  %v3094 = vand.u32 %v242, 4294901760
  %v3095 = vsub.f32 %v242, %v3094
  %v3096 = vand.u32 %v3095, 4294901760
  %v3097 = vsub.f32 %v3095, %v3096
  %v3098 = vand.u32 %v3097, 4294901760
  %3099 = vmatmul.mubr.f32.gmra.mrb[0].mxu0 %v3098
  %v3100 = vpop.f32.mrb[0].mxu0
  %v3101 = vadd.f32 0.0, %v3100
  %v3102 = vpop.f32.mrb[0].mxu0
  %v3103 = vadd.f32 0.0, %v3102
  %3104 = vdwg.mxu0
  %v3105 = vand.u32 %v3004, 4294901760
  %v3106 = vsub.f32 %v3004, %v3105
  %v3107 = vand.u32 %v3106, 4294901760
  %v3108 = vsub.f32 %v3106, %v3107
  %v3109 = vand.u32 %v3108, 4294901760
  %3110 = vmatprep.subr.mxu0 %v3109
  %v3111 = vand.u32 %v3003, 4294901760
  %v3112 = vsub.f32 %v3003, %v3111
  %v3113 = vand.u32 %v3112, 4294901760
  %v3114 = vsub.f32 %v3112, %v3113
  %v3115 = vand.u32 %v3114, 4294901760
  %3116 = vmatpush1.msra.mxu0 %v3115
  %v3117 = vand.u32 %v3006, 4294901760
  %v3118 = vsub.f32 %v3006, %v3117
  %v3119 = vand.u32 %v3118, 4294901760
  %v3120 = vsub.f32 %v3118, %v3119
  %v3121 = vand.u32 %v3120, 4294901760
  %3122 = vmatprep.subr.mxu0 %v3121
  %v3123 = vand.u32 %v3005, 4294901760
  %v3124 = vsub.f32 %v3005, %v3123
  %v3125 = vand.u32 %v3124, 4294901760
  %v3126 = vsub.f32 %v3124, %v3125
  %v3127 = vand.u32 %v3126, 4294901760
  %3128 = vmatpush1.msra.mxu0 %v3127
  %v3129 = vand.u32 %v3008, 4294901760
  %v3130 = vsub.f32 %v3008, %v3129
  %v3131 = vand.u32 %v3130, 4294901760
  %v3132 = vsub.f32 %v3130, %v3131
  %v3133 = vand.u32 %v3132, 4294901760
  %3134 = vmatprep.subr.mxu0 %v3133
  %v3135 = vand.u32 %v3007, 4294901760
  %v3136 = vsub.f32 %v3007, %v3135
  %v3137 = vand.u32 %v3136, 4294901760
  %v3138 = vsub.f32 %v3136, %v3137
  %v3139 = vand.u32 %v3138, 4294901760
  %3140 = vmatpush1.msra.mxu0 %v3139
  %v3141 = vand.u32 %v3010, 4294901760
  %v3142 = vsub.f32 %v3010, %v3141
  %v3143 = vand.u32 %v3142, 4294901760
  %v3144 = vsub.f32 %v3142, %v3143
  %v3145 = vand.u32 %v3144, 4294901760
  %3146 = vmatprep.subr.mxu0 %v3145
  %v3147 = vand.u32 %v3009, 4294901760
  %v3148 = vsub.f32 %v3009, %v3147
  %v3149 = vand.u32 %v3148, 4294901760
  %v3150 = vsub.f32 %v3148, %v3149
  %v3151 = vand.u32 %v3150, 4294901760
  %3152 = vmatpush1.msra.mxu0 %v3151
  %v3153 = vand.u32 %v3017, 4294901760
  %v3154 = vsub.f32 %v3017, %v3153
  %v3155 = vand.u32 %v3154, 4294901760
  %v3156 = vsub.f32 %v3154, %v3155
  %v3157 = vand.u32 %v3156, 4294901760
  %3158 = vmatprep.subr.mxu0 %v3157
  %v3159 = vand.u32 %v3014, 4294901760
  %v3160 = vsub.f32 %v3014, %v3159
  %v3161 = vand.u32 %v3160, 4294901760
  %v3162 = vsub.f32 %v3160, %v3161
  %v3163 = vand.u32 %v3162, 4294901760
  %3164 = vmatpush1.msra.mxu0 %v3163
  %3165 = vmatprep.subr.mxu0 0.0
  %3166 = vmatpush1.msra.mxu0 0.0
  %3167 = vmatprep.subr.mxu0 0.0
  %3168 = vmatpush1.msra.mxu0 0.0
  %3169 = vmatprep.subr.mxu0 0.0
  %3170 = vmatpush1.msra.mxu0 0.0
  %3171 = vmatprep.subr.mxu0 0.0
  %3172 = vmatpush1.msra.mxu0 0.0
  %3173 = vmatprep.subr.mxu0 0.0
  %3174 = vmatpush1.msra.mxu0 0.0
  %3175 = vmatprep.subr.mxu0 0.0
  %3176 = vmatpush1.msra.mxu0 0.0
  %3177 = vmatprep.subr.mxu0 0.0
  %3178 = vmatpush1.msra.mxu0 0.0
  %3179 = vmatprep.subr.mxu0 0.0
  %3180 = vmatpush1.msra.mxu0 0.0
  %3181 = vmatprep.subr.mxu0 0.0
  %3182 = vmatpush1.msra.mxu0 0.0
  %3183 = vmatprep.subr.mxu0 0.0
  %3184 = vmatpush1.msra.mxu0 0.0
  %3185 = vmatprep.subr.mxu0 0.0
  %3186 = vmatpush1.msra.mxu0 0.0
  %3187 = vmatprep.subr.mxu0 0.0
  %3188 = vmatpush1.msra.mxu0 0.0
  %3189 = vmatprep.subr.mxu0 0.0
  %3190 = vmatpush1.msra.mxu0 0.0
  %3191 = vmatprep.subr.mxu0 0.0
  %3192 = vmatpush1.msra.mxu0 0.0
  %3193 = vmatprep.subr.mxu0 0.0
  %3194 = vmatpush1.msra.mxu0 0.0
  %3195 = vmatprep.subr.mxu0 0.0
  %3196 = vmatpush1.msra.mxu0 0.0
  %3197 = vmatprep.subr.mxu0 0.0
  %3198 = vmatpush1.msra.mxu0 0.0
  %3199 = vmatprep.subr.mxu0 0.0
  %3200 = vmatpush1.msra.mxu0 0.0
  %3201 = vmatprep.subr.mxu0 0.0
  %3202 = vmatpush1.msra.mxu0 0.0
  %3203 = vmatprep.subr.mxu0 0.0
  %3204 = vmatpush1.msra.mxu0 0.0
  %3205 = vmatprep.subr.mxu0 0.0
  %3206 = vmatpush1.msra.mxu0 0.0
  %3207 = vmatprep.subr.mxu0 0.0
  %3208 = vmatpush1.msra.mxu0 0.0
  %3209 = vmatprep.subr.mxu0 0.0
  %3210 = vmatpush1.msra.mxu0 0.0
  %3211 = vmatprep.subr.mxu0 0.0
  %3212 = vmatpush1.msra.mxu0 0.0
  %3213 = vmatprep.subr.mxu0 0.0
  %3214 = vmatpush1.msra.mxu0 0.0
  %3215 = vmatprep.subr.mxu0 0.0
  %3216 = vmatpush1.msra.mxu0 0.0
  %3217 = vmatprep.subr.mxu0 0.0
  %3218 = vmatpush1.msra.mxu0 0.0
  %3219 = vmatprep.mubr.f32.mxu0 0.0
  %v3220 = vand.u32 %v242, 4294901760
  %3221 = vmatmul.mubr.f32.gmra.mrb[0].mxu0 %v3220
  %v3222 = vpop.f32.mrb[0].mxu0
  %v3223 = vadd.f32 %v3101, %v3222
  %v3224 = vpop.f32.mrb[0].mxu0
  %v3225 = vadd.f32 %v3103, %v3224
  %3226 = vdwg.mxu0
  %v3227 = vand.u32 %v3004, 4294901760
  %v3228 = vsub.f32 %v3004, %v3227
  %3229 = vmatprep.subr.mxu0 %v3228
  %v3230 = vand.u32 %v3003, 4294901760
  %v3231 = vsub.f32 %v3003, %v3230
  %3232 = vmatpush1.msra.mxu0 %v3231
  %v3233 = vand.u32 %v3006, 4294901760
  %v3234 = vsub.f32 %v3006, %v3233
  %3235 = vmatprep.subr.mxu0 %v3234
  %v3236 = vand.u32 %v3005, 4294901760
  %v3237 = vsub.f32 %v3005, %v3236
  %3238 = vmatpush1.msra.mxu0 %v3237
  %v3239 = vand.u32 %v3008, 4294901760
  %v3240 = vsub.f32 %v3008, %v3239
  %3241 = vmatprep.subr.mxu0 %v3240
  %v3242 = vand.u32 %v3007, 4294901760
  %v3243 = vsub.f32 %v3007, %v3242
  %3244 = vmatpush1.msra.mxu0 %v3243
  %v3245 = vand.u32 %v3010, 4294901760
  %v3246 = vsub.f32 %v3010, %v3245
  %3247 = vmatprep.subr.mxu0 %v3246
  %v3248 = vand.u32 %v3009, 4294901760
  %v3249 = vsub.f32 %v3009, %v3248
  %3250 = vmatpush1.msra.mxu0 %v3249
  %v3251 = vand.u32 %v3017, 4294901760
  %v3252 = vsub.f32 %v3017, %v3251
  %3253 = vmatprep.subr.mxu0 %v3252
  %v3254 = vand.u32 %v3014, 4294901760
  %v3255 = vsub.f32 %v3014, %v3254
  %3256 = vmatpush1.msra.mxu0 %v3255
  %3257 = vmatprep.subr.mxu0 0.0
  %3258 = vmatpush1.msra.mxu0 0.0
  %3259 = vmatprep.subr.mxu0 0.0
  %3260 = vmatpush1.msra.mxu0 0.0
  %3261 = vmatprep.subr.mxu0 0.0
  %3262 = vmatpush1.msra.mxu0 0.0
  %3263 = vmatprep.subr.mxu0 0.0
  %3264 = vmatpush1.msra.mxu0 0.0
  %3265 = vmatprep.subr.mxu0 0.0
  %3266 = vmatpush1.msra.mxu0 0.0
  %3267 = vmatprep.subr.mxu0 0.0
  %3268 = vmatpush1.msra.mxu0 0.0
  %3269 = vmatprep.subr.mxu0 0.0
  %3270 = vmatpush1.msra.mxu0 0.0
  %3271 = vmatprep.subr.mxu0 0.0
  %3272 = vmatpush1.msra.mxu0 0.0
  %3273 = vmatprep.subr.mxu0 0.0
  %3274 = vmatpush1.msra.mxu0 0.0
  %3275 = vmatprep.subr.mxu0 0.0
  %3276 = vmatpush1.msra.mxu0 0.0
  %3277 = vmatprep.subr.mxu0 0.0
  %3278 = vmatpush1.msra.mxu0 0.0
  %3279 = vmatprep.subr.mxu0 0.0
  %3280 = vmatpush1.msra.mxu0 0.0
  %3281 = vmatprep.subr.mxu0 0.0
  %3282 = vmatpush1.msra.mxu0 0.0
  %3283 = vmatprep.subr.mxu0 0.0
  %3284 = vmatpush1.msra.mxu0 0.0
  %3285 = vmatprep.subr.mxu0 0.0
  %3286 = vmatpush1.msra.mxu0 0.0
  %3287 = vmatprep.subr.mxu0 0.0
  %3288 = vmatpush1.msra.mxu0 0.0
  %3289 = vmatprep.subr.mxu0 0.0
  %3290 = vmatpush1.msra.mxu0 0.0
  %3291 = vmatprep.subr.mxu0 0.0
  %3292 = vmatpush1.msra.mxu0 0.0
  %3293 = vmatprep.subr.mxu0 0.0
  %3294 = vmatpush1.msra.mxu0 0.0
  %3295 = vmatprep.subr.mxu0 0.0
  %3296 = vmatpush1.msra.mxu0 0.0
  %3297 = vmatprep.subr.mxu0 0.0
  %3298 = vmatpush1.msra.mxu0 0.0
  %3299 = vmatprep.subr.mxu0 0.0
  %3300 = vmatpush1.msra.mxu0 0.0
  %3301 = vmatprep.subr.mxu0 0.0
  %3302 = vmatpush1.msra.mxu0 0.0
  %3303 = vmatprep.subr.mxu0 0.0
  %3304 = vmatpush1.msra.mxu0 0.0
  %3305 = vmatprep.subr.mxu0 0.0
  %3306 = vmatpush1.msra.mxu0 0.0
  %3307 = vmatprep.subr.mxu0 0.0
  %3308 = vmatpush1.msra.mxu0 0.0
  %3309 = vmatprep.subr.mxu0 0.0
  %3310 = vmatpush1.msra.mxu0 0.0
  %3311 = vmatprep.mubr.f32.mxu0 0.0
  %v3312 = vand.u32 %v242, 4294901760
  %v3313 = vsub.f32 %v242, %v3312
  %3314 = vmatmul.mubr.f32.gmra.mrb[0].mxu0 %v3313
  %v3315 = vpop.f32.mrb[0].mxu0
  %v3316 = vadd.f32 %v3223, %v3315
  %v3317 = vpop.f32.mrb[0].mxu0
  %v3318 = vadd.f32 %v3225, %v3317
  %3319 = vdwg.mxu0
  %v3320 = vand.u32 %v3004, 4294901760
  %3321 = vmatprep.subr.mxu0 %v3320
  %v3322 = vand.u32 %v3003, 4294901760
  %3323 = vmatpush1.msra.mxu0 %v3322
  %v3324 = vand.u32 %v3006, 4294901760
  %3325 = vmatprep.subr.mxu0 %v3324
  %v3326 = vand.u32 %v3005, 4294901760
  %3327 = vmatpush1.msra.mxu0 %v3326
  %v3328 = vand.u32 %v3008, 4294901760
  %3329 = vmatprep.subr.mxu0 %v3328
  %v3330 = vand.u32 %v3007, 4294901760
  %3331 = vmatpush1.msra.mxu0 %v3330
  %v3332 = vand.u32 %v3010, 4294901760
  %3333 = vmatprep.subr.mxu0 %v3332
  %v3334 = vand.u32 %v3009, 4294901760
  %3335 = vmatpush1.msra.mxu0 %v3334
  %v3336 = vand.u32 %v3017, 4294901760
  %3337 = vmatprep.subr.mxu0 %v3336
  %v3338 = vand.u32 %v3014, 4294901760
  %3339 = vmatpush1.msra.mxu0 %v3338
  %3340 = vmatprep.subr.mxu0 0.0
  %3341 = vmatpush1.msra.mxu0 0.0
  %3342 = vmatprep.subr.mxu0 0.0
  %3343 = vmatpush1.msra.mxu0 0.0
  %3344 = vmatprep.subr.mxu0 0.0
  %3345 = vmatpush1.msra.mxu0 0.0
  %3346 = vmatprep.subr.mxu0 0.0
  %3347 = vmatpush1.msra.mxu0 0.0
  %3348 = vmatprep.subr.mxu0 0.0
  %3349 = vmatpush1.msra.mxu0 0.0
  %3350 = vmatprep.subr.mxu0 0.0
  %3351 = vmatpush1.msra.mxu0 0.0
  %3352 = vmatprep.subr.mxu0 0.0
  %3353 = vmatpush1.msra.mxu0 0.0
  %3354 = vmatprep.subr.mxu0 0.0
  %3355 = vmatpush1.msra.mxu0 0.0
  %3356 = vmatprep.subr.mxu0 0.0
  %3357 = vmatpush1.msra.mxu0 0.0
  %3358 = vmatprep.subr.mxu0 0.0
  %3359 = vmatpush1.msra.mxu0 0.0
  %3360 = vmatprep.subr.mxu0 0.0
  %3361 = vmatpush1.msra.mxu0 0.0
  %3362 = vmatprep.subr.mxu0 0.0
  %3363 = vmatpush1.msra.mxu0 0.0
  %3364 = vmatprep.subr.mxu0 0.0
  %3365 = vmatpush1.msra.mxu0 0.0
  %3366 = vmatprep.subr.mxu0 0.0
  %3367 = vmatpush1.msra.mxu0 0.0
  %3368 = vmatprep.subr.mxu0 0.0
  %3369 = vmatpush1.msra.mxu0 0.0
  %3370 = vmatprep.subr.mxu0 0.0
  %3371 = vmatpush1.msra.mxu0 0.0
  %3372 = vmatprep.subr.mxu0 0.0
  %3373 = vmatpush1.msra.mxu0 0.0
  %3374 = vmatprep.subr.mxu0 0.0
  %3375 = vmatpush1.msra.mxu0 0.0
  %3376 = vmatprep.subr.mxu0 0.0
  %3377 = vmatpush1.msra.mxu0 0.0
  %3378 = vmatprep.subr.mxu0 0.0
  %3379 = vmatpush1.msra.mxu0 0.0
  %3380 = vmatprep.subr.mxu0 0.0
  %3381 = vmatpush1.msra.mxu0 0.0
  %3382 = vmatprep.subr.mxu0 0.0
  %3383 = vmatpush1.msra.mxu0 0.0
  %3384 = vmatprep.subr.mxu0 0.0
  %3385 = vmatpush1.msra.mxu0 0.0
  %3386 = vmatprep.subr.mxu0 0.0
  %3387 = vmatpush1.msra.mxu0 0.0
  %3388 = vmatprep.subr.mxu0 0.0
  %3389 = vmatpush1.msra.mxu0 0.0
  %3390 = vmatprep.subr.mxu0 0.0
  %3391 = vmatpush1.msra.mxu0 0.0
  %3392 = vmatprep.subr.mxu0 0.0
  %3393 = vmatpush1.msra.mxu0 0.0
  %3394 = vmatprep.mubr.f32.mxu0 0.0
  %v3395 = vand.u32 %v242, 4294901760
  %v3396 = vsub.f32 %v242, %v3395
  %v3397 = vand.u32 %v3396, 4294901760
  %3398 = vmatmul.mubr.f32.gmra.mrb[0].mxu0 %v3397
  %v3399 = vpop.f32.mrb[0].mxu0
  %v3400 = vadd.f32 %v3316, %v3399
  %v3401 = vpop.f32.mrb[0].mxu0
  %v3402 = vadd.f32 %v3318, %v3401
  %3403 = vdwg.mxu0
  %v3404 = vand.u32 %v3004, 4294901760
  %v3405 = vsub.f32 %v3004, %v3404
  %v3406 = vand.u32 %v3405, 4294901760
  %3407 = vmatprep.subr.mxu0 %v3406
  %v3408 = vand.u32 %v3003, 4294901760
  %v3409 = vsub.f32 %v3003, %v3408
  %v3410 = vand.u32 %v3409, 4294901760
  %3411 = vmatpush1.msra.mxu0 %v3410
  %v3412 = vand.u32 %v3006, 4294901760
  %v3413 = vsub.f32 %v3006, %v3412
  %v3414 = vand.u32 %v3413, 4294901760
  %3415 = vmatprep.subr.mxu0 %v3414
  %v3416 = vand.u32 %v3005, 4294901760
  %v3417 = vsub.f32 %v3005, %v3416
  %v3418 = vand.u32 %v3417, 4294901760
  %3419 = vmatpush1.msra.mxu0 %v3418
  %v3420 = vand.u32 %v3008, 4294901760
  %v3421 = vsub.f32 %v3008, %v3420
  %v3422 = vand.u32 %v3421, 4294901760
  %3423 = vmatprep.subr.mxu0 %v3422
  %v3424 = vand.u32 %v3007, 4294901760
  %v3425 = vsub.f32 %v3007, %v3424
  %v3426 = vand.u32 %v3425, 4294901760
  %3427 = vmatpush1.msra.mxu0 %v3426
  %v3428 = vand.u32 %v3010, 4294901760
  %v3429 = vsub.f32 %v3010, %v3428
  %v3430 = vand.u32 %v3429, 4294901760
  %3431 = vmatprep.subr.mxu0 %v3430
  %v3432 = vand.u32 %v3009, 4294901760
  %v3433 = vsub.f32 %v3009, %v3432
  %v3434 = vand.u32 %v3433, 4294901760
  %3435 = vmatpush1.msra.mxu0 %v3434
  %v3436 = vand.u32 %v3017, 4294901760
  %v3437 = vsub.f32 %v3017, %v3436
  %v3438 = vand.u32 %v3437, 4294901760
  %3439 = vmatprep.subr.mxu0 %v3438
  %v3440 = vand.u32 %v3014, 4294901760
  %v3441 = vsub.f32 %v3014, %v3440
  %v3442 = vand.u32 %v3441, 4294901760
  %3443 = vmatpush1.msra.mxu0 %v3442
  %3444 = vmatprep.subr.mxu0 0.0
  %3445 = vmatpush1.msra.mxu0 0.0
  %3446 = vmatprep.subr.mxu0 0.0
  %3447 = vmatpush1.msra.mxu0 0.0
  %3448 = vmatprep.subr.mxu0 0.0
  %3449 = vmatpush1.msra.mxu0 0.0
  %3450 = vmatprep.subr.mxu0 0.0
  %3451 = vmatpush1.msra.mxu0 0.0
  %3452 = vmatprep.subr.mxu0 0.0
  %3453 = vmatpush1.msra.mxu0 0.0
  %3454 = vmatprep.subr.mxu0 0.0
  %3455 = vmatpush1.msra.mxu0 0.0
  %3456 = vmatprep.subr.mxu0 0.0
  %3457 = vmatpush1.msra.mxu0 0.0
  %3458 = vmatprep.subr.mxu0 0.0
  %3459 = vmatpush1.msra.mxu0 0.0
  %3460 = vmatprep.subr.mxu0 0.0
  %3461 = vmatpush1.msra.mxu0 0.0
  %3462 = vmatprep.subr.mxu0 0.0
  %3463 = vmatpush1.msra.mxu0 0.0
  %3464 = vmatprep.subr.mxu0 0.0
  %3465 = vmatpush1.msra.mxu0 0.0
  %3466 = vmatprep.subr.mxu0 0.0
  %3467 = vmatpush1.msra.mxu0 0.0
  %3468 = vmatprep.subr.mxu0 0.0
  %3469 = vmatpush1.msra.mxu0 0.0
  %3470 = vmatprep.subr.mxu0 0.0
  %3471 = vmatpush1.msra.mxu0 0.0
  %3472 = vmatprep.subr.mxu0 0.0
  %3473 = vmatpush1.msra.mxu0 0.0
  %3474 = vmatprep.subr.mxu0 0.0
  %3475 = vmatpush1.msra.mxu0 0.0
  %3476 = vmatprep.subr.mxu0 0.0
  %3477 = vmatpush1.msra.mxu0 0.0
  %3478 = vmatprep.subr.mxu0 0.0
  %3479 = vmatpush1.msra.mxu0 0.0
  %3480 = vmatprep.subr.mxu0 0.0
  %3481 = vmatpush1.msra.mxu0 0.0
  %3482 = vmatprep.subr.mxu0 0.0
  %3483 = vmatpush1.msra.mxu0 0.0
  %3484 = vmatprep.subr.mxu0 0.0
  %3485 = vmatpush1.msra.mxu0 0.0
  %3486 = vmatprep.subr.mxu0 0.0
  %3487 = vmatpush1.msra.mxu0 0.0
  %3488 = vmatprep.subr.mxu0 0.0
  %3489 = vmatpush1.msra.mxu0 0.0
  %3490 = vmatprep.subr.mxu0 0.0
  %3491 = vmatpush1.msra.mxu0 0.0
  %3492 = vmatprep.subr.mxu0 0.0
  %3493 = vmatpush1.msra.mxu0 0.0
  %3494 = vmatprep.subr.mxu0 0.0
  %3495 = vmatpush1.msra.mxu0 0.0
  %3496 = vmatprep.subr.mxu0 0.0
  %3497 = vmatpush1.msra.mxu0 0.0
  %3498 = vmatprep.mubr.f32.mxu0 0.0
  %v3499 = vand.u32 %v242, 4294901760
  %3500 = vmatmul.mubr.f32.gmra.mrb[0].mxu0 %v3499
  %v3501 = vpop.f32.mrb[0].mxu0
  %v3502 = vadd.f32 %v3400, %v3501
  %v3503 = vpop.f32.mrb[0].mxu0
  %v3504 = vadd.f32 %v3402, %v3503
  %3505 = vdwg.mxu0
  %v3506 = vand.u32 %v3004, 4294901760
  %3507 = vmatprep.subr.mxu0 %v3506
  %v3508 = vand.u32 %v3003, 4294901760
  %3509 = vmatpush1.msra.mxu0 %v3508
  %v3510 = vand.u32 %v3006, 4294901760
  %3511 = vmatprep.subr.mxu0 %v3510
  %v3512 = vand.u32 %v3005, 4294901760
  %3513 = vmatpush1.msra.mxu0 %v3512
  %v3514 = vand.u32 %v3008, 4294901760
  %3515 = vmatprep.subr.mxu0 %v3514
  %v3516 = vand.u32 %v3007, 4294901760
  %3517 = vmatpush1.msra.mxu0 %v3516
  %v3518 = vand.u32 %v3010, 4294901760
  %3519 = vmatprep.subr.mxu0 %v3518
  %v3520 = vand.u32 %v3009, 4294901760
  %3521 = vmatpush1.msra.mxu0 %v3520
  %v3522 = vand.u32 %v3017, 4294901760
  %3523 = vmatprep.subr.mxu0 %v3522
  %v3524 = vand.u32 %v3014, 4294901760
  %3525 = vmatpush1.msra.mxu0 %v3524
  %3526 = vmatprep.subr.mxu0 0.0
  %3527 = vmatpush1.msra.mxu0 0.0
  %3528 = vmatprep.subr.mxu0 0.0
  %3529 = vmatpush1.msra.mxu0 0.0
  %3530 = vmatprep.subr.mxu0 0.0
  %3531 = vmatpush1.msra.mxu0 0.0
  %3532 = vmatprep.subr.mxu0 0.0
  %3533 = vmatpush1.msra.mxu0 0.0
  %3534 = vmatprep.subr.mxu0 0.0
  %3535 = vmatpush1.msra.mxu0 0.0
  %3536 = vmatprep.subr.mxu0 0.0
  %3537 = vmatpush1.msra.mxu0 0.0
  %3538 = vmatprep.subr.mxu0 0.0
  %3539 = vmatpush1.msra.mxu0 0.0
  %3540 = vmatprep.subr.mxu0 0.0
  %3541 = vmatpush1.msra.mxu0 0.0
  %3542 = vmatprep.subr.mxu0 0.0
  %3543 = vmatpush1.msra.mxu0 0.0
  %3544 = vmatprep.subr.mxu0 0.0
  %3545 = vmatpush1.msra.mxu0 0.0
  %3546 = vmatprep.subr.mxu0 0.0
  %3547 = vmatpush1.msra.mxu0 0.0
  %3548 = vmatprep.subr.mxu0 0.0
  %3549 = vmatpush1.msra.mxu0 0.0
  %3550 = vmatprep.subr.mxu0 0.0
  %3551 = vmatpush1.msra.mxu0 0.0
  %3552 = vmatprep.subr.mxu0 0.0
  %3553 = vmatpush1.msra.mxu0 0.0
  %3554 = vmatprep.subr.mxu0 0.0
  %3555 = vmatpush1.msra.mxu0 0.0
  %3556 = vmatprep.subr.mxu0 0.0
  %3557 = vmatpush1.msra.mxu0 0.0
  %3558 = vmatprep.subr.mxu0 0.0
  %3559 = vmatpush1.msra.mxu0 0.0
  %3560 = vmatprep.subr.mxu0 0.0
  %3561 = vmatpush1.msra.mxu0 0.0
  %3562 = vmatprep.subr.mxu0 0.0
  %3563 = vmatpush1.msra.mxu0 0.0
  %3564 = vmatprep.subr.mxu0 0.0
  %3565 = vmatpush1.msra.mxu0 0.0
  %3566 = vmatprep.subr.mxu0 0.0
  %3567 = vmatpush1.msra.mxu0 0.0
  %3568 = vmatprep.subr.mxu0 0.0
  %3569 = vmatpush1.msra.mxu0 0.0
  %3570 = vmatprep.subr.mxu0 0.0
  %3571 = vmatpush1.msra.mxu0 0.0
  %3572 = vmatprep.subr.mxu0 0.0
  %3573 = vmatpush1.msra.mxu0 0.0
  %3574 = vmatprep.subr.mxu0 0.0
  %3575 = vmatpush1.msra.mxu0 0.0
  %3576 = vmatprep.subr.mxu0 0.0
  %3577 = vmatpush1.msra.mxu0 0.0
  %3578 = vmatprep.subr.mxu0 0.0
  %3579 = vmatpush1.msra.mxu0 0.0
  %3580 = vmatprep.mubr.f32.mxu0 0.0
  %v3581 = vand.u32 %v242, 4294901760
  %3582 = vmatmul.mubr.f32.gmra.mrb[0].mxu0 %v3581
  %v3583 = vpop.f32.mrb[0].mxu0
  %v3584 = vadd.f32 %v3502, %v3583
  %v3585 = vpop.f32.mrb[0].mxu0
  %v3586 = vadd.f32 %v3504, %v3585
  %3587 = vdwg.mxu0
  %v3588 = vmax.f32 %v3584, 0.0
  %v3589 = vmax.f32 %v3586, 0.0
  %3590 = vrot.lane.b32.xlu0 %v3588, 34
  %v3591 = vpop.permute.xlu0 %3590
  %3592 = vrot.lane.b32.xlu0 %v3589, 34
  %v3593 = vpop.permute.xlu0 %3592
  %v3594 = vsel %vm49, %v3591, %v3593
  %v3595 = vsel %vm49, %v3593, %v3591
  %v3596 = vmul.f32 %v3595, %v55
  %v3597 = vmul.f32 %v3594, %v59
  %3598 = vst [vmem:[#allocation2] sm:$0xff] %v3596
  %3599 = vst [vmem:[#allocation2 + $0x8] sm:$0xff] %v3597
  %3600 = vrot.lane.b32.xlu0 %v3588, 32
  %v3601 = vpop.permute.xlu0 %3600
  %3602 = vrot.lane.b32.xlu0 %v3589, 32
  %v3603 = vpop.permute.xlu0 %3602
  %v3604 = vsel %vm68, %v3601, %v3603
  %v3605 = vsel %vm68, %v3603, %v3601
  %v3606 = vmul.f32 %v3605, %v74
  %v3607 = vmul.f32 %v3604, %v78
  %3608 = vst [vmem:[#allocation2 + $0x10] sm:$0xff] %v3606
  %3609 = vst [vmem:[#allocation2 + $0x18] sm:$0xff] %v3607
  %3610 = vrot.lane.b32.xlu0 %v3588, 30
  %v3611 = vpop.permute.xlu0 %3610
  %3612 = vrot.lane.b32.xlu0 %v3589, 30
  %v3613 = vpop.permute.xlu0 %3612
  %v3614 = vsel %vm93, %v3611, %v3613
  %v3615 = vsel %vm93, %v3613, %v3611
  %v3616 = vmul.f32 %v3615, %v99
  %v3617 = vmul.f32 %v3614, %v103
  %3618 = vst [vmem:[#allocation2 + $0x20] sm:$0xff] %v3616
  %3619 = vst [vmem:[#allocation2 + $0x28] sm:$0xff] %v3617
  %3620 = vrot.lane.b32.xlu0 %v3588, 2
  %v3621 = vpop.permute.xlu0 %3620
  %3622 = vrot.lane.b32.xlu0 %v3589, 2
  %v3623 = vpop.permute.xlu0 %3622
  %v3624 = vsel %vm112, %v3621, %v3623
  %v3625 = vsel %vm112, %v3623, %v3621
  %v3626 = vmul.f32 %v3625, %v118
  %v3627 = vmul.f32 %v3624, %v122
  %3628 = vst [vmem:[#allocation2 + $0x30] sm:$0xff] %v3626
  %3629 = vst [vmem:[#allocation2 + $0x38] sm:$0xff] %v3627
  %3630 = vst [vmem:[#allocation2 + $0x40] sm:$0xff] %v3588
  %3631 = vst [vmem:[#allocation2 + $0x48] sm:$0xff] %v3589
  %3632 = vrot.lane.b32.xlu0 %v3588, 126
  %v3633 = vpop.permute.xlu0 %3632
  %3634 = vrot.lane.b32.xlu0 %v3589, 126
  %v3635 = vpop.permute.xlu0 %3634
  %v3636 = vsel %vm139, %v3633, %v3635
  %v3637 = vsel %vm139, %v3635, %v3633
  %v3638 = vmul.f32 %v3636, %v145
  %v3639 = vmul.f32 %v3637, %v149
  %3640 = vst [vmem:[#allocation2 + $0x50] sm:$0xff] %v3638
  %3641 = vst [vmem:[#allocation2 + $0x58] sm:$0xff] %v3639
  %3642 = vrot.lane.b32.xlu0 %v3588, 98
  %v3643 = vpop.permute.xlu0 %3642
  %3644 = vrot.lane.b32.xlu0 %v3589, 98
  %v3645 = vpop.permute.xlu0 %3644
  %v3646 = vsel %vm164, %v3643, %v3645
  %v3647 = vsel %vm164, %v3645, %v3643
  %v3648 = vmul.f32 %v3646, %v170
  %v3649 = vmul.f32 %v3647, %v174
  %3650 = vst [vmem:[#allocation2 + $0x60] sm:$0xff] %v3648
  %3651 = vst [vmem:[#allocation2 + $0x68] sm:$0xff] %v3649
  %3652 = vrot.lane.b32.xlu0 %v3588, 96
  %v3653 = vpop.permute.xlu0 %3652
  %3654 = vrot.lane.b32.xlu0 %v3589, 96
  %v3655 = vpop.permute.xlu0 %3654
  %v3656 = vsel %vm183, %v3653, %v3655
  %v3657 = vsel %vm183, %v3655, %v3653
  %v3658 = vmul.f32 %v3656, %v189
  %v3659 = vmul.f32 %v3657, %v193
  %3660 = vst [vmem:[#allocation2 + $0x70] sm:$0xff] %v3658
  %3661 = vst [vmem:[#allocation2 + $0x78] sm:$0xff] %v3659
  %3662 = vrot.lane.b32.xlu0 %v3588, 94
  %v3663 = vpop.permute.xlu0 %3662
  %3664 = vrot.lane.b32.xlu0 %v3589, 94
  %v3665 = vpop.permute.xlu0 %3664
  %v3666 = vsel %vm208, %v3663, %v3665
  %v3667 = vsel %vm208, %v3665, %v3663
  %v3668 = vmul.f32 %v3666, %v214
  %v3669 = vmul.f32 %v3667, %v218
  %3670 = vst [vmem:[#allocation2 + $0x80] sm:$0xff] %v3668
  %3671 = vst [vmem:[#allocation2 + $0x88] sm:$0xff] %v3669
  %3672 = vst.msk [vmem:[%s904] ss:$8 sm:$0x3] %vm226, 1.0
  %3673 = vst.msk [vmem:[%s904] ss:$8 sm:$0x0] %vm226, 1.0
  %v3674 = vld [vmem:[#allocation2] sm:$0xff]
  %v3675 = vld [vmem:[#allocation2 + $0x8] sm:$0xff]
  %v3676 = vld [vmem:[#allocation2 + $0x10] sm:$0xff]
  %v3677 = vld [vmem:[#allocation2 + $0x18] sm:$0xff]
  %v3678 = vld [vmem:[#allocation2 + $0x20] sm:$0xff]
  %v3679 = vld [vmem:[#allocation2 + $0x28] sm:$0xff]
  %v3680 = vld [vmem:[#allocation2 + $0x30] sm:$0xff]
  %v3681 = vld [vmem:[#allocation2 + $0x38] sm:$0xff]
  %v3682 = vld [vmem:[#allocation2 + $0x40] sm:$0xff]
  %v3683 = vld [vmem:[#allocation2 + $0x48] sm:$0xff]
  %v3684 = vld [vmem:[#allocation2 + $0x50] sm:$0xff]
  %v3685 = vld [vmem:[#allocation2 + $0x58] sm:$0xff]
  %v3686 = vld [vmem:[#allocation2 + $0x60] sm:$0xff]
  %v3687 = vld [vmem:[#allocation2 + $0x68] sm:$0xff]
  %v3688 = vld [vmem:[#allocation2 + $0x70] sm:$0xff]
  %v3689 = vld [vmem:[#allocation2 + $0x78] sm:$0xff]
  %v3690 = vld [vmem:[#allocation2 + $0x80] sm:$0xff]
  %v3691 = vld [vmem:[#allocation2 + $0x88] sm:$0xff]
  %v3692 = vld [vmem:[#allocation2 + $0x90] sm:$0x1]
  %v3693 = vld [vmem:[#allocation2 + $0x98] sm:$0x1]
  %v3695 = vsel %vm955, %v3692, 0
  %v3698 = vsel %vm955, %v3693, 0
  %v3700 = vand.u32 %v3675, 4294901760
  %3701 = vmatprep.subr.mxu0 %v3700
  %v3702 = vand.u32 %v3674, 4294901760
  %3703 = vmatpush1.msra.mxu0 %v3702
  %v3704 = vand.u32 %v3677, 4294901760
  %3705 = vmatprep.subr.mxu0 %v3704
  %v3706 = vand.u32 %v3676, 4294901760
  %3707 = vmatpush1.msra.mxu0 %v3706
  %v3708 = vand.u32 %v3679, 4294901760
  %3709 = vmatprep.subr.mxu0 %v3708
  %v3710 = vand.u32 %v3678, 4294901760
  %3711 = vmatpush1.msra.mxu0 %v3710
  %v3712 = vand.u32 %v3681, 4294901760
  %3713 = vmatprep.subr.mxu0 %v3712
  %v3714 = vand.u32 %v3680, 4294901760
  %3715 = vmatpush1.msra.mxu0 %v3714
  %v3716 = vand.u32 %v3683, 4294901760
  %3717 = vmatprep.subr.mxu0 %v3716
  %v3718 = vand.u32 %v3682, 4294901760
  %3719 = vmatpush1.msra.mxu0 %v3718
  %v3720 = vand.u32 %v3685, 4294901760
  %3721 = vmatprep.subr.mxu0 %v3720
  %v3722 = vand.u32 %v3684, 4294901760
  %3723 = vmatpush1.msra.mxu0 %v3722
  %v3724 = vand.u32 %v3687, 4294901760
  %3725 = vmatprep.subr.mxu0 %v3724
  %v3726 = vand.u32 %v3686, 4294901760
  %3727 = vmatpush1.msra.mxu0 %v3726
  %v3728 = vand.u32 %v3689, 4294901760
  %3729 = vmatprep.subr.mxu0 %v3728
  %v3730 = vand.u32 %v3688, 4294901760
  %3731 = vmatpush1.msra.mxu0 %v3730
  %v3732 = vand.u32 %v3691, 4294901760
  %3733 = vmatprep.subr.mxu0 %v3732
  %v3734 = vand.u32 %v3690, 4294901760
  %3735 = vmatpush1.msra.mxu0 %v3734
  %v3736 = vand.u32 %v3698, 4294901760
  %3737 = vmatprep.subr.mxu0 %v3736
  %v3738 = vand.u32 %v3695, 4294901760
  %3739 = vmatpush1.msra.mxu0 %v3738
  %3740 = vmatprep.subr.mxu0 0.0
  %3741 = vmatpush1.msra.mxu0 0.0
  %3742 = vmatprep.subr.mxu0 0.0
  %3743 = vmatpush1.msra.mxu0 0.0
  %3744 = vmatprep.subr.mxu0 0.0
  %3745 = vmatpush1.msra.mxu0 0.0
  %3746 = vmatprep.subr.mxu0 0.0
  %3747 = vmatpush1.msra.mxu0 0.0
  %3748 = vmatprep.subr.mxu0 0.0
  %3749 = vmatpush1.msra.mxu0 0.0
  %3750 = vmatprep.subr.mxu0 0.0
  %3751 = vmatpush1.msra.mxu0 0.0
  %3752 = vmatprep.subr.mxu0 0.0
  %3753 = vmatpush1.msra.mxu0 0.0
  %3754 = vmatprep.subr.mxu0 0.0
  %3755 = vmatpush1.msra.mxu0 0.0
  %3756 = vmatprep.subr.mxu0 0.0
  %3757 = vmatpush1.msra.mxu0 0.0
  %3758 = vmatprep.subr.mxu0 0.0
  %3759 = vmatpush1.msra.mxu0 0.0
  %3760 = vmatprep.subr.mxu0 0.0
  %3761 = vmatpush1.msra.mxu0 0.0
  %3762 = vmatprep.subr.mxu0 0.0
  %3763 = vmatpush1.msra.mxu0 0.0
  %3764 = vmatprep.subr.mxu0 0.0
  %3765 = vmatpush1.msra.mxu0 0.0
  %3766 = vmatprep.subr.mxu0 0.0
  %3767 = vmatpush1.msra.mxu0 0.0
  %3768 = vmatprep.subr.mxu0 0.0
  %3769 = vmatpush1.msra.mxu0 0.0
  %3770 = vmatprep.subr.mxu0 0.0
  %3771 = vmatpush1.msra.mxu0 0.0
  %3772 = vmatprep.subr.mxu0 0.0
  %3773 = vmatpush1.msra.mxu0 0.0
  %3774 = vmatprep.subr.mxu0 0.0
  %3775 = vmatpush1.msra.mxu0 0.0
  %3776 = vmatprep.subr.mxu0 0.0
  %3777 = vmatpush1.msra.mxu0 0.0
  %3778 = vmatprep.subr.mxu0 0.0
  %3779 = vmatpush1.msra.mxu0 0.0
  %3780 = vmatprep.subr.mxu0 0.0
  %3781 = vmatpush1.msra.mxu0 0.0
  %3782 = vmatprep.subr.mxu0 0.0
  %3783 = vmatpush1.msra.mxu0 0.0
  %3784 = vmatprep.mubr.f32.mxu0 0.0
  %v3785 = vand.u32 %v929, 4294901760
  %v3786 = vsub.f32 %v929, %v3785
  %v3787 = vand.u32 %v3786, 4294901760
  %v3788 = vsub.f32 %v3786, %v3787
  %v3789 = vand.u32 %v3788, 4294901760
  %3790 = vmatmul.mubr.f32.gmra.mrb[0].mxu0 %v3789
  %v3791 = vpop.f32.mrb[0].mxu0
  %v3792 = vadd.f32 0.0, %v3791
  %v3793 = vpop.f32.mrb[0].mxu0
  %v3794 = vadd.f32 0.0, %v3793
  %3795 = vmatprep.mubr.f32.mxu0 0.0
  %v3796 = vand.u32 %v932, 4294901760
  %v3797 = vsub.f32 %v932, %v3796
  %v3798 = vand.u32 %v3797, 4294901760
  %v3799 = vsub.f32 %v3797, %v3798
  %v3800 = vand.u32 %v3799, 4294901760
  %3801 = vmatmul.mubr.f32.gmra.mrb[0].mxu0 %v3800
  %v3802 = vpop.f32.mrb[0].mxu0
  %v3803 = vadd.f32 0.0, %v3802
  %v3804 = vpop.f32.mrb[0].mxu0
  %v3805 = vadd.f32 0.0, %v3804
  %3806 = vmatprep.mubr.f32.mxu0 0.0
  %v3807 = vand.u32 %v935, 4294901760
  %v3808 = vsub.f32 %v935, %v3807
  %v3809 = vand.u32 %v3808, 4294901760
  %v3810 = vsub.f32 %v3808, %v3809
  %v3811 = vand.u32 %v3810, 4294901760
  %3812 = vmatmul.mubr.f32.gmra.mrb[0].mxu0 %v3811
  %v3813 = vpop.f32.mrb[0].mxu0
  %v3814 = vadd.f32 0.0, %v3813
  %v3815 = vpop.f32.mrb[0].mxu0
  %v3816 = vadd.f32 0.0, %v3815
  %3817 = vmatprep.mubr.f32.mxu0 0.0
  %v3818 = vand.u32 %v938, 4294901760
  %v3819 = vsub.f32 %v938, %v3818
  %v3820 = vand.u32 %v3819, 4294901760
  %v3821 = vsub.f32 %v3819, %v3820
  %v3822 = vand.u32 %v3821, 4294901760
  %3823 = vmatmul.mubr.f32.gmra.mrb[0].mxu0 %v3822
  %v3824 = vpop.f32.mrb[0].mxu0
  %v3825 = vadd.f32 0.0, %v3824
  %v3826 = vpop.f32.mrb[0].mxu0
  %v3827 = vadd.f32 0.0, %v3826
  %3828 = vmatprep.mubr.f32.mxu0 0.0
  %v3829 = vand.u32 %v941, 4294901760
  %v3830 = vsub.f32 %v941, %v3829
  %v3831 = vand.u32 %v3830, 4294901760
  %v3832 = vsub.f32 %v3830, %v3831
  %v3833 = vand.u32 %v3832, 4294901760
  %3834 = vmatmul.mubr.f32.gmra.mrb[0].mxu0 %v3833
  %v3835 = vpop.f32.mrb[0].mxu0
  %v3836 = vadd.f32 0.0, %v3835
  %v3837 = vpop.f32.mrb[0].mxu0
  %v3838 = vadd.f32 0.0, %v3837
  %3839 = vmatprep.mubr.f32.mxu0 0.0
  %v3840 = vand.u32 %v944, 4294901760
  %v3841 = vsub.f32 %v944, %v3840
  %v3842 = vand.u32 %v3841, 4294901760
  %v3843 = vsub.f32 %v3841, %v3842
  %v3844 = vand.u32 %v3843, 4294901760
  %3845 = vmatmul.mubr.f32.gmra.mrb[0].mxu0 %v3844
  %v3846 = vpop.f32.mrb[0].mxu0
  %v3847 = vadd.f32 0.0, %v3846
  %v3848 = vpop.f32.mrb[0].mxu0
  %v3849 = vadd.f32 0.0, %v3848
  %3850 = vmatprep.mubr.f32.mxu0 0.0
  %v3851 = vand.u32 %v947, 4294901760
  %v3852 = vsub.f32 %v947, %v3851
  %v3853 = vand.u32 %v3852, 4294901760
  %v3854 = vsub.f32 %v3852, %v3853
  %v3855 = vand.u32 %v3854, 4294901760
  %3856 = vmatmul.mubr.f32.gmra.mrb[0].mxu0 %v3855
  %v3857 = vpop.f32.mrb[0].mxu0
  %v3858 = vadd.f32 0.0, %v3857
  %v3859 = vpop.f32.mrb[0].mxu0
  %v3860 = vadd.f32 0.0, %v3859
  %3861 = vmatprep.mubr.f32.mxu0 0.0
  %v3862 = vand.u32 %v950, 4294901760
  %v3863 = vsub.f32 %v950, %v3862
  %v3864 = vand.u32 %v3863, 4294901760
  %v3865 = vsub.f32 %v3863, %v3864
  %v3866 = vand.u32 %v3865, 4294901760
  %3867 = vmatmul.mubr.f32.gmra.mrb[0].mxu0 %v3866
  %v3868 = vpop.f32.mrb[0].mxu0
  %v3869 = vadd.f32 0.0, %v3868
  %v3870 = vpop.f32.mrb[0].mxu0
  %v3871 = vadd.f32 0.0, %v3870
  %3872 = vmatprep.mubr.f32.mxu0 0.0
  %v3873 = vand.u32 %v953, 4294901760
  %v3874 = vsub.f32 %v953, %v3873
  %v3875 = vand.u32 %v3874, 4294901760
  %v3876 = vsub.f32 %v3874, %v3875
  %v3877 = vand.u32 %v3876, 4294901760
  %3878 = vmatmul.mubr.f32.gmra.mrb[0].mxu0 %v3877
  %v3879 = vpop.f32.mrb[0].mxu0
  %v3880 = vadd.f32 0.0, %v3879
  %v3881 = vpop.f32.mrb[0].mxu0
  %v3882 = vadd.f32 0.0, %v3881
  %3883 = vdwg.mxu0
  %v3884 = vand.u32 %v3675, 4294901760
  %v3885 = vsub.f32 %v3675, %v3884
  %v3886 = vand.u32 %v3885, 4294901760
  %v3887 = vsub.f32 %v3885, %v3886
  %v3888 = vand.u32 %v3887, 4294901760
  %3889 = vmatprep.subr.mxu0 %v3888
  %v3890 = vand.u32 %v3674, 4294901760
  %v3891 = vsub.f32 %v3674, %v3890
  %v3892 = vand.u32 %v3891, 4294901760
  %v3893 = vsub.f32 %v3891, %v3892
  %v3894 = vand.u32 %v3893, 4294901760
  %3895 = vmatpush1.msra.mxu0 %v3894
  %v3896 = vand.u32 %v3677, 4294901760
  %v3897 = vsub.f32 %v3677, %v3896
  %v3898 = vand.u32 %v3897, 4294901760
  %v3899 = vsub.f32 %v3897, %v3898
  %v3900 = vand.u32 %v3899, 4294901760
  %3901 = vmatprep.subr.mxu0 %v3900
  %v3902 = vand.u32 %v3676, 4294901760
  %v3903 = vsub.f32 %v3676, %v3902
  %v3904 = vand.u32 %v3903, 4294901760
  %v3905 = vsub.f32 %v3903, %v3904
  %v3906 = vand.u32 %v3905, 4294901760
  %3907 = vmatpush1.msra.mxu0 %v3906
  %v3908 = vand.u32 %v3679, 4294901760
  %v3909 = vsub.f32 %v3679, %v3908
  %v3910 = vand.u32 %v3909, 4294901760
  %v3911 = vsub.f32 %v3909, %v3910
  %v3912 = vand.u32 %v3911, 4294901760
  %3913 = vmatprep.subr.mxu0 %v3912
  %v3914 = vand.u32 %v3678, 4294901760
  %v3915 = vsub.f32 %v3678, %v3914
  %v3916 = vand.u32 %v3915, 4294901760
  %v3917 = vsub.f32 %v3915, %v3916
  %v3918 = vand.u32 %v3917, 4294901760
  %3919 = vmatpush1.msra.mxu0 %v3918
  %v3920 = vand.u32 %v3681, 4294901760
  %v3921 = vsub.f32 %v3681, %v3920
  %v3922 = vand.u32 %v3921, 4294901760
  %v3923 = vsub.f32 %v3921, %v3922
  %v3924 = vand.u32 %v3923, 4294901760
  %3925 = vmatprep.subr.mxu0 %v3924
  %v3926 = vand.u32 %v3680, 4294901760
  %v3927 = vsub.f32 %v3680, %v3926
  %v3928 = vand.u32 %v3927, 4294901760
  %v3929 = vsub.f32 %v3927, %v3928
  %v3930 = vand.u32 %v3929, 4294901760
  %3931 = vmatpush1.msra.mxu0 %v3930
  %v3932 = vand.u32 %v3683, 4294901760
  %v3933 = vsub.f32 %v3683, %v3932
  %v3934 = vand.u32 %v3933, 4294901760
  %v3935 = vsub.f32 %v3933, %v3934
  %v3936 = vand.u32 %v3935, 4294901760
  %3937 = vmatprep.subr.mxu0 %v3936
  %v3938 = vand.u32 %v3682, 4294901760
  %v3939 = vsub.f32 %v3682, %v3938
  %v3940 = vand.u32 %v3939, 4294901760
  %v3941 = vsub.f32 %v3939, %v3940
  %v3942 = vand.u32 %v3941, 4294901760
  %3943 = vmatpush1.msra.mxu0 %v3942
  %v3944 = vand.u32 %v3685, 4294901760
  %v3945 = vsub.f32 %v3685, %v3944
  %v3946 = vand.u32 %v3945, 4294901760
  %v3947 = vsub.f32 %v3945, %v3946
  %v3948 = vand.u32 %v3947, 4294901760
  %3949 = vmatprep.subr.mxu0 %v3948
  %v3950 = vand.u32 %v3684, 4294901760
  %v3951 = vsub.f32 %v3684, %v3950
  %v3952 = vand.u32 %v3951, 4294901760
  %v3953 = vsub.f32 %v3951, %v3952
  %v3954 = vand.u32 %v3953, 4294901760
  %3955 = vmatpush1.msra.mxu0 %v3954
  %v3956 = vand.u32 %v3687, 4294901760
  %v3957 = vsub.f32 %v3687, %v3956
  %v3958 = vand.u32 %v3957, 4294901760
  %v3959 = vsub.f32 %v3957, %v3958
  %v3960 = vand.u32 %v3959, 4294901760
  %3961 = vmatprep.subr.mxu0 %v3960
  %v3962 = vand.u32 %v3686, 4294901760
  %v3963 = vsub.f32 %v3686, %v3962
  %v3964 = vand.u32 %v3963, 4294901760
  %v3965 = vsub.f32 %v3963, %v3964
  %v3966 = vand.u32 %v3965, 4294901760
  %3967 = vmatpush1.msra.mxu0 %v3966
  %v3968 = vand.u32 %v3689, 4294901760
  %v3969 = vsub.f32 %v3689, %v3968
  %v3970 = vand.u32 %v3969, 4294901760
  %v3971 = vsub.f32 %v3969, %v3970
  %v3972 = vand.u32 %v3971, 4294901760
  %3973 = vmatprep.subr.mxu0 %v3972
  %v3974 = vand.u32 %v3688, 4294901760
  %v3975 = vsub.f32 %v3688, %v3974
  %v3976 = vand.u32 %v3975, 4294901760
  %v3977 = vsub.f32 %v3975, %v3976
  %v3978 = vand.u32 %v3977, 4294901760
  %3979 = vmatpush1.msra.mxu0 %v3978
  %v3980 = vand.u32 %v3691, 4294901760
  %v3981 = vsub.f32 %v3691, %v3980
  %v3982 = vand.u32 %v3981, 4294901760
  %v3983 = vsub.f32 %v3981, %v3982
  %v3984 = vand.u32 %v3983, 4294901760
  %3985 = vmatprep.subr.mxu0 %v3984
  %v3986 = vand.u32 %v3690, 4294901760
  %v3987 = vsub.f32 %v3690, %v3986
  %v3988 = vand.u32 %v3987, 4294901760
  %v3989 = vsub.f32 %v3987, %v3988
  %v3990 = vand.u32 %v3989, 4294901760
  %3991 = vmatpush1.msra.mxu0 %v3990
  %v3992 = vand.u32 %v3698, 4294901760
  %v3993 = vsub.f32 %v3698, %v3992
  %v3994 = vand.u32 %v3993, 4294901760
  %v3995 = vsub.f32 %v3993, %v3994
  %v3996 = vand.u32 %v3995, 4294901760
  %3997 = vmatprep.subr.mxu0 %v3996
  %v3998 = vand.u32 %v3695, 4294901760
  %v3999 = vsub.f32 %v3695, %v3998
  %v4000 = vand.u32 %v3999, 4294901760
  %v4001 = vsub.f32 %v3999, %v4000
  %v4002 = vand.u32 %v4001, 4294901760
  %4003 = vmatpush1.msra.mxu0 %v4002
  %4004 = vmatprep.subr.mxu0 0.0
  %4005 = vmatpush1.msra.mxu0 0.0
  %4006 = vmatprep.subr.mxu0 0.0
  %4007 = vmatpush1.msra.mxu0 0.0
  %4008 = vmatprep.subr.mxu0 0.0
  %4009 = vmatpush1.msra.mxu0 0.0
  %4010 = vmatprep.subr.mxu0 0.0
  %4011 = vmatpush1.msra.mxu0 0.0
  %4012 = vmatprep.subr.mxu0 0.0
  %4013 = vmatpush1.msra.mxu0 0.0
  %4014 = vmatprep.subr.mxu0 0.0
  %4015 = vmatpush1.msra.mxu0 0.0
  %4016 = vmatprep.subr.mxu0 0.0
  %4017 = vmatpush1.msra.mxu0 0.0
  %4018 = vmatprep.subr.mxu0 0.0
  %4019 = vmatpush1.msra.mxu0 0.0
  %4020 = vmatprep.subr.mxu0 0.0
  %4021 = vmatpush1.msra.mxu0 0.0
  %4022 = vmatprep.subr.mxu0 0.0
  %4023 = vmatpush1.msra.mxu0 0.0
  %4024 = vmatprep.subr.mxu0 0.0
  %4025 = vmatpush1.msra.mxu0 0.0
  %4026 = vmatprep.subr.mxu0 0.0
  %4027 = vmatpush1.msra.mxu0 0.0
  %4028 = vmatprep.subr.mxu0 0.0
  %4029 = vmatpush1.msra.mxu0 0.0
  %4030 = vmatprep.subr.mxu0 0.0
  %4031 = vmatpush1.msra.mxu0 0.0
  %4032 = vmatprep.subr.mxu0 0.0
  %4033 = vmatpush1.msra.mxu0 0.0
  %4034 = vmatprep.subr.mxu0 0.0
  %4035 = vmatpush1.msra.mxu0 0.0
  %4036 = vmatprep.subr.mxu0 0.0
  %4037 = vmatpush1.msra.mxu0 0.0
  %4038 = vmatprep.subr.mxu0 0.0
  %4039 = vmatpush1.msra.mxu0 0.0
  %4040 = vmatprep.subr.mxu0 0.0
  %4041 = vmatpush1.msra.mxu0 0.0
  %4042 = vmatprep.subr.mxu0 0.0
  %4043 = vmatpush1.msra.mxu0 0.0
  %4044 = vmatprep.subr.mxu0 0.0
  %4045 = vmatpush1.msra.mxu0 0.0
  %4046 = vmatprep.subr.mxu0 0.0
  %4047 = vmatpush1.msra.mxu0 0.0
  %4048 = vmatprep.mubr.f32.mxu0 0.0
  %v4049 = vand.u32 %v929, 4294901760
  %4050 = vmatmul.mubr.f32.gmra.mrb[0].mxu0 %v4049
  %v4051 = vpop.f32.mrb[0].mxu0
  %v4052 = vadd.f32 %v3792, %v4051
  %v4053 = vpop.f32.mrb[0].mxu0
  %v4054 = vadd.f32 %v3794, %v4053
  %4055 = vmatprep.mubr.f32.mxu0 0.0
  %v4056 = vand.u32 %v932, 4294901760
  %4057 = vmatmul.mubr.f32.gmra.mrb[0].mxu0 %v4056
  %v4058 = vpop.f32.mrb[0].mxu0
  %v4059 = vadd.f32 %v3803, %v4058
  %v4060 = vpop.f32.mrb[0].mxu0
  %v4061 = vadd.f32 %v3805, %v4060
  %4062 = vmatprep.mubr.f32.mxu0 0.0
  %v4063 = vand.u32 %v935, 4294901760
  %4064 = vmatmul.mubr.f32.gmra.mrb[0].mxu0 %v4063
  %v4065 = vpop.f32.mrb[0].mxu0
  %v4066 = vadd.f32 %v3814, %v4065
  %v4067 = vpop.f32.mrb[0].mxu0
  %v4068 = vadd.f32 %v3816, %v4067
  %4069 = vmatprep.mubr.f32.mxu0 0.0
  %v4070 = vand.u32 %v938, 4294901760
  %4071 = vmatmul.mubr.f32.gmra.mrb[0].mxu0 %v4070
  %v4072 = vpop.f32.mrb[0].mxu0
  %v4073 = vadd.f32 %v3825, %v4072
  %v4074 = vpop.f32.mrb[0].mxu0
  %v4075 = vadd.f32 %v3827, %v4074
  %4076 = vmatprep.mubr.f32.mxu0 0.0
  %v4077 = vand.u32 %v941, 4294901760
  %4078 = vmatmul.mubr.f32.gmra.mrb[0].mxu0 %v4077
  %v4079 = vpop.f32.mrb[0].mxu0
  %v4080 = vadd.f32 %v3836, %v4079
  %v4081 = vpop.f32.mrb[0].mxu0
  %v4082 = vadd.f32 %v3838, %v4081
  %4083 = vmatprep.mubr.f32.mxu0 0.0
  %v4084 = vand.u32 %v944, 4294901760
  %4085 = vmatmul.mubr.f32.gmra.mrb[0].mxu0 %v4084
  %v4086 = vpop.f32.mrb[0].mxu0
  %v4087 = vadd.f32 %v3847, %v4086
  %v4088 = vpop.f32.mrb[0].mxu0
  %v4089 = vadd.f32 %v3849, %v4088
  %4090 = vmatprep.mubr.f32.mxu0 0.0
  %v4091 = vand.u32 %v947, 4294901760
  %4092 = vmatmul.mubr.f32.gmra.mrb[0].mxu0 %v4091
  %v4093 = vpop.f32.mrb[0].mxu0
  %v4094 = vadd.f32 %v3858, %v4093
  %v4095 = vpop.f32.mrb[0].mxu0
  %v4096 = vadd.f32 %v3860, %v4095
  %4097 = vmatprep.mubr.f32.mxu0 0.0
  %v4098 = vand.u32 %v950, 4294901760
  %4099 = vmatmul.mubr.f32.gmra.mrb[0].mxu0 %v4098
  %v4100 = vpop.f32.mrb[0].mxu0
  %v4101 = vadd.f32 %v3869, %v4100
  %v4102 = vpop.f32.mrb[0].mxu0
  %v4103 = vadd.f32 %v3871, %v4102
  %4104 = vmatprep.mubr.f32.mxu0 0.0
  %v4105 = vand.u32 %v953, 4294901760
  %4106 = vmatmul.mubr.f32.gmra.mrb[0].mxu0 %v4105
  %v4107 = vpop.f32.mrb[0].mxu0
  %v4108 = vadd.f32 %v3880, %v4107
  %v4109 = vpop.f32.mrb[0].mxu0
  %v4110 = vadd.f32 %v3882, %v4109
  %4111 = vdwg.mxu0
  %v4112 = vand.u32 %v3675, 4294901760
  %v4113 = vsub.f32 %v3675, %v4112
  %4114 = vmatprep.subr.mxu0 %v4113
  %v4115 = vand.u32 %v3674, 4294901760
  %v4116 = vsub.f32 %v3674, %v4115
  %4117 = vmatpush1.msra.mxu0 %v4116
  %v4118 = vand.u32 %v3677, 4294901760
  %v4119 = vsub.f32 %v3677, %v4118
  %4120 = vmatprep.subr.mxu0 %v4119
  %v4121 = vand.u32 %v3676, 4294901760
  %v4122 = vsub.f32 %v3676, %v4121
  %4123 = vmatpush1.msra.mxu0 %v4122
  %v4124 = vand.u32 %v3679, 4294901760
  %v4125 = vsub.f32 %v3679, %v4124
  %4126 = vmatprep.subr.mxu0 %v4125
  %v4127 = vand.u32 %v3678, 4294901760
  %v4128 = vsub.f32 %v3678, %v4127
  %4129 = vmatpush1.msra.mxu0 %v4128
  %v4130 = vand.u32 %v3681, 4294901760
  %v4131 = vsub.f32 %v3681, %v4130
  %4132 = vmatprep.subr.mxu0 %v4131
  %v4133 = vand.u32 %v3680, 4294901760
  %v4134 = vsub.f32 %v3680, %v4133
  %4135 = vmatpush1.msra.mxu0 %v4134
  %v4136 = vand.u32 %v3683, 4294901760
  %v4137 = vsub.f32 %v3683, %v4136
  %4138 = vmatprep.subr.mxu0 %v4137
  %v4139 = vand.u32 %v3682, 4294901760
  %v4140 = vsub.f32 %v3682, %v4139
  %4141 = vmatpush1.msra.mxu0 %v4140
  %v4142 = vand.u32 %v3685, 4294901760
  %v4143 = vsub.f32 %v3685, %v4142
  %4144 = vmatprep.subr.mxu0 %v4143
  %v4145 = vand.u32 %v3684, 4294901760
  %v4146 = vsub.f32 %v3684, %v4145
  %4147 = vmatpush1.msra.mxu0 %v4146
  %v4148 = vand.u32 %v3687, 4294901760
  %v4149 = vsub.f32 %v3687, %v4148
  %4150 = vmatprep.subr.mxu0 %v4149
  %v4151 = vand.u32 %v3686, 4294901760
  %v4152 = vsub.f32 %v3686, %v4151
  %4153 = vmatpush1.msra.mxu0 %v4152
  %v4154 = vand.u32 %v3689, 4294901760
  %v4155 = vsub.f32 %v3689, %v4154
  %4156 = vmatprep.subr.mxu0 %v4155
  %v4157 = vand.u32 %v3688, 4294901760
  %v4158 = vsub.f32 %v3688, %v4157
  %4159 = vmatpush1.msra.mxu0 %v4158
  %v4160 = vand.u32 %v3691, 4294901760
  %v4161 = vsub.f32 %v3691, %v4160
  %4162 = vmatprep.subr.mxu0 %v4161
  %v4163 = vand.u32 %v3690, 4294901760
  %v4164 = vsub.f32 %v3690, %v4163
  %4165 = vmatpush1.msra.mxu0 %v4164
  %v4166 = vand.u32 %v3698, 4294901760
  %v4167 = vsub.f32 %v3698, %v4166
  %4168 = vmatprep.subr.mxu0 %v4167
  %v4169 = vand.u32 %v3695, 4294901760
  %v4170 = vsub.f32 %v3695, %v4169
  %4171 = vmatpush1.msra.mxu0 %v4170
  %4172 = vmatprep.subr.mxu0 0.0
  %4173 = vmatpush1.msra.mxu0 0.0
  %4174 = vmatprep.subr.mxu0 0.0
  %4175 = vmatpush1.msra.mxu0 0.0
  %4176 = vmatprep.subr.mxu0 0.0
  %4177 = vmatpush1.msra.mxu0 0.0
  %4178 = vmatprep.subr.mxu0 0.0
  %4179 = vmatpush1.msra.mxu0 0.0
  %4180 = vmatprep.subr.mxu0 0.0
  %4181 = vmatpush1.msra.mxu0 0.0
  %4182 = vmatprep.subr.mxu0 0.0
  %4183 = vmatpush1.msra.mxu0 0.0
  %4184 = vmatprep.subr.mxu0 0.0
  %4185 = vmatpush1.msra.mxu0 0.0
  %4186 = vmatprep.subr.mxu0 0.0
  %4187 = vmatpush1.msra.mxu0 0.0
  %4188 = vmatprep.subr.mxu0 0.0
  %4189 = vmatpush1.msra.mxu0 0.0
  %4190 = vmatprep.subr.mxu0 0.0
  %4191 = vmatpush1.msra.mxu0 0.0
  %4192 = vmatprep.subr.mxu0 0.0
  %4193 = vmatpush1.msra.mxu0 0.0
  %4194 = vmatprep.subr.mxu0 0.0
  %4195 = vmatpush1.msra.mxu0 0.0
  %4196 = vmatprep.subr.mxu0 0.0
  %4197 = vmatpush1.msra.mxu0 0.0
  %4198 = vmatprep.subr.mxu0 0.0
  %4199 = vmatpush1.msra.mxu0 0.0
  %4200 = vmatprep.subr.mxu0 0.0
  %4201 = vmatpush1.msra.mxu0 0.0
  %4202 = vmatprep.subr.mxu0 0.0
  %4203 = vmatpush1.msra.mxu0 0.0
  %4204 = vmatprep.subr.mxu0 0.0
  %4205 = vmatpush1.msra.mxu0 0.0
  %4206 = vmatprep.subr.mxu0 0.0
  %4207 = vmatpush1.msra.mxu0 0.0
  %4208 = vmatprep.subr.mxu0 0.0
  %4209 = vmatpush1.msra.mxu0 0.0
  %4210 = vmatprep.subr.mxu0 0.0
  %4211 = vmatpush1.msra.mxu0 0.0
  %4212 = vmatprep.subr.mxu0 0.0
  %4213 = vmatpush1.msra.mxu0 0.0
  %4214 = vmatprep.subr.mxu0 0.0
  %4215 = vmatpush1.msra.mxu0 0.0
  %4216 = vmatprep.mubr.f32.mxu0 0.0
  %v4217 = vand.u32 %v929, 4294901760
  %v4218 = vsub.f32 %v929, %v4217
  %4219 = vmatmul.mubr.f32.gmra.mrb[0].mxu0 %v4218
  %v4220 = vpop.f32.mrb[0].mxu0
  %v4221 = vadd.f32 %v4052, %v4220
  %v4222 = vpop.f32.mrb[0].mxu0
  %v4223 = vadd.f32 %v4054, %v4222
  %4224 = vmatprep.mubr.f32.mxu0 0.0
  %v4225 = vand.u32 %v932, 4294901760
  %v4226 = vsub.f32 %v932, %v4225
  %4227 = vmatmul.mubr.f32.gmra.mrb[0].mxu0 %v4226
  %v4228 = vpop.f32.mrb[0].mxu0
  %v4229 = vadd.f32 %v4059, %v4228
  %v4230 = vpop.f32.mrb[0].mxu0
  %v4231 = vadd.f32 %v4061, %v4230
  %4232 = vmatprep.mubr.f32.mxu0 0.0
  %v4233 = vand.u32 %v935, 4294901760
  %v4234 = vsub.f32 %v935, %v4233
  %4235 = vmatmul.mubr.f32.gmra.mrb[0].mxu0 %v4234
  %v4236 = vpop.f32.mrb[0].mxu0
  %v4237 = vadd.f32 %v4066, %v4236
  %v4238 = vpop.f32.mrb[0].mxu0
  %v4239 = vadd.f32 %v4068, %v4238
  %4240 = vmatprep.mubr.f32.mxu0 0.0
  %v4241 = vand.u32 %v938, 4294901760
  %v4242 = vsub.f32 %v938, %v4241
  %4243 = vmatmul.mubr.f32.gmra.mrb[0].mxu0 %v4242
  %v4244 = vpop.f32.mrb[0].mxu0
  %v4245 = vadd.f32 %v4073, %v4244
  %v4246 = vpop.f32.mrb[0].mxu0
  %v4247 = vadd.f32 %v4075, %v4246
  %4248 = vmatprep.mubr.f32.mxu0 0.0
  %v4249 = vand.u32 %v941, 4294901760
  %v4250 = vsub.f32 %v941, %v4249
  %4251 = vmatmul.mubr.f32.gmra.mrb[0].mxu0 %v4250
  %v4252 = vpop.f32.mrb[0].mxu0
  %v4253 = vadd.f32 %v4080, %v4252
  %v4254 = vpop.f32.mrb[0].mxu0
  %v4255 = vadd.f32 %v4082, %v4254
  %4256 = vmatprep.mubr.f32.mxu0 0.0
  %v4257 = vand.u32 %v944, 4294901760
  %v4258 = vsub.f32 %v944, %v4257
  %4259 = vmatmul.mubr.f32.gmra.mrb[0].mxu0 %v4258
  %v4260 = vpop.f32.mrb[0].mxu0
  %v4261 = vadd.f32 %v4087, %v4260
  %v4262 = vpop.f32.mrb[0].mxu0
  %v4263 = vadd.f32 %v4089, %v4262
  %4264 = vmatprep.mubr.f32.mxu0 0.0
  %v4265 = vand.u32 %v947, 4294901760
  %v4266 = vsub.f32 %v947, %v4265
  %4267 = vmatmul.mubr.f32.gmra.mrb[0].mxu0 %v4266
  %v4268 = vpop.f32.mrb[0].mxu0
  %v4269 = vadd.f32 %v4094, %v4268
  %v4270 = vpop.f32.mrb[0].mxu0
  %v4271 = vadd.f32 %v4096, %v4270
  %4272 = vmatprep.mubr.f32.mxu0 0.0
  %v4273 = vand.u32 %v950, 4294901760
  %v4274 = vsub.f32 %v950, %v4273
  %4275 = vmatmul.mubr.f32.gmra.mrb[0].mxu0 %v4274
  %v4276 = vpop.f32.mrb[0].mxu0
  %v4277 = vadd.f32 %v4101, %v4276
  %v4278 = vpop.f32.mrb[0].mxu0
  %v4279 = vadd.f32 %v4103, %v4278
  %4280 = vmatprep.mubr.f32.mxu0 0.0
  %v4281 = vand.u32 %v953, 4294901760
  %v4282 = vsub.f32 %v953, %v4281
  %4283 = vmatmul.mubr.f32.gmra.mrb[0].mxu0 %v4282
  %v4284 = vpop.f32.mrb[0].mxu0
  %v4285 = vadd.f32 %v4108, %v4284
  %v4286 = vpop.f32.mrb[0].mxu0
  %v4287 = vadd.f32 %v4110, %v4286
  %4288 = vdwg.mxu0
  %v4289 = vand.u32 %v3675, 4294901760
  %4290 = vmatprep.subr.mxu0 %v4289
  %v4291 = vand.u32 %v3674, 4294901760
  %4292 = vmatpush1.msra.mxu0 %v4291
  %v4293 = vand.u32 %v3677, 4294901760
  %4294 = vmatprep.subr.mxu0 %v4293
  %v4295 = vand.u32 %v3676, 4294901760
  %4296 = vmatpush1.msra.mxu0 %v4295
  %v4297 = vand.u32 %v3679, 4294901760
  %4298 = vmatprep.subr.mxu0 %v4297
  %v4299 = vand.u32 %v3678, 4294901760
  %4300 = vmatpush1.msra.mxu0 %v4299
  %v4301 = vand.u32 %v3681, 4294901760
  %4302 = vmatprep.subr.mxu0 %v4301
  %v4303 = vand.u32 %v3680, 4294901760
  %4304 = vmatpush1.msra.mxu0 %v4303
  %v4305 = vand.u32 %v3683, 4294901760
  %4306 = vmatprep.subr.mxu0 %v4305
  %v4307 = vand.u32 %v3682, 4294901760
  %4308 = vmatpush1.msra.mxu0 %v4307
  %v4309 = vand.u32 %v3685, 4294901760
  %4310 = vmatprep.subr.mxu0 %v4309
  %v4311 = vand.u32 %v3684, 4294901760
  %4312 = vmatpush1.msra.mxu0 %v4311
  %v4313 = vand.u32 %v3687, 4294901760
  %4314 = vmatprep.subr.mxu0 %v4313
  %v4315 = vand.u32 %v3686, 4294901760
  %4316 = vmatpush1.msra.mxu0 %v4315
  %v4317 = vand.u32 %v3689, 4294901760
  %4318 = vmatprep.subr.mxu0 %v4317
  %v4319 = vand.u32 %v3688, 4294901760
  %4320 = vmatpush1.msra.mxu0 %v4319
  %v4321 = vand.u32 %v3691, 4294901760
  %4322 = vmatprep.subr.mxu0 %v4321
  %v4323 = vand.u32 %v3690, 4294901760
  %4324 = vmatpush1.msra.mxu0 %v4323
  %v4325 = vand.u32 %v3698, 4294901760
  %4326 = vmatprep.subr.mxu0 %v4325
  %v4327 = vand.u32 %v3695, 4294901760
  %4328 = vmatpush1.msra.mxu0 %v4327
  %4329 = vmatprep.subr.mxu0 0.0
  %4330 = vmatpush1.msra.mxu0 0.0
  %4331 = vmatprep.subr.mxu0 0.0
  %4332 = vmatpush1.msra.mxu0 0.0
  %4333 = vmatprep.subr.mxu0 0.0
  %4334 = vmatpush1.msra.mxu0 0.0
  %4335 = vmatprep.subr.mxu0 0.0
  %4336 = vmatpush1.msra.mxu0 0.0
  %4337 = vmatprep.subr.mxu0 0.0
  %4338 = vmatpush1.msra.mxu0 0.0
  %4339 = vmatprep.subr.mxu0 0.0
  %4340 = vmatpush1.msra.mxu0 0.0
  %4341 = vmatprep.subr.mxu0 0.0
  %4342 = vmatpush1.msra.mxu0 0.0
  %4343 = vmatprep.subr.mxu0 0.0
  %4344 = vmatpush1.msra.mxu0 0.0
  %4345 = vmatprep.subr.mxu0 0.0
  %4346 = vmatpush1.msra.mxu0 0.0
  %4347 = vmatprep.subr.mxu0 0.0
  %4348 = vmatpush1.msra.mxu0 0.0
  %4349 = vmatprep.subr.mxu0 0.0
  %4350 = vmatpush1.msra.mxu0 0.0
  %4351 = vmatprep.subr.mxu0 0.0
  %4352 = vmatpush1.msra.mxu0 0.0
  %4353 = vmatprep.subr.mxu0 0.0
  %4354 = vmatpush1.msra.mxu0 0.0
  %4355 = vmatprep.subr.mxu0 0.0
  %4356 = vmatpush1.msra.mxu0 0.0
  %4357 = vmatprep.subr.mxu0 0.0
  %4358 = vmatpush1.msra.mxu0 0.0
  %4359 = vmatprep.subr.mxu0 0.0
  %4360 = vmatpush1.msra.mxu0 0.0
  %4361 = vmatprep.subr.mxu0 0.0
  %4362 = vmatpush1.msra.mxu0 0.0
  %4363 = vmatprep.subr.mxu0 0.0
  %4364 = vmatpush1.msra.mxu0 0.0
  %4365 = vmatprep.subr.mxu0 0.0
  %4366 = vmatpush1.msra.mxu0 0.0
  %4367 = vmatprep.subr.mxu0 0.0
  %4368 = vmatpush1.msra.mxu0 0.0
  %4369 = vmatprep.subr.mxu0 0.0
  %4370 = vmatpush1.msra.mxu0 0.0
  %4371 = vmatprep.subr.mxu0 0.0
  %4372 = vmatpush1.msra.mxu0 0.0
  %4373 = vmatprep.mubr.f32.mxu0 0.0
  %v4374 = vand.u32 %v929, 4294901760
  %v4375 = vsub.f32 %v929, %v4374
  %v4376 = vand.u32 %v4375, 4294901760
  %4377 = vmatmul.mubr.f32.gmra.mrb[0].mxu0 %v4376
  %v4378 = vpop.f32.mrb[0].mxu0
  %v4379 = vadd.f32 %v4221, %v4378
  %v4380 = vpop.f32.mrb[0].mxu0
  %v4381 = vadd.f32 %v4223, %v4380
  %4382 = vmatprep.mubr.f32.mxu0 0.0
  %v4383 = vand.u32 %v932, 4294901760
  %v4384 = vsub.f32 %v932, %v4383
  %v4385 = vand.u32 %v4384, 4294901760
  %4386 = vmatmul.mubr.f32.gmra.mrb[0].mxu0 %v4385
  %v4387 = vpop.f32.mrb[0].mxu0
  %v4388 = vadd.f32 %v4229, %v4387
  %v4389 = vpop.f32.mrb[0].mxu0
  %v4390 = vadd.f32 %v4231, %v4389
  %4391 = vmatprep.mubr.f32.mxu0 0.0
  %v4392 = vand.u32 %v935, 4294901760
  %v4393 = vsub.f32 %v935, %v4392
  %v4394 = vand.u32 %v4393, 4294901760
  %4395 = vmatmul.mubr.f32.gmra.mrb[0].mxu0 %v4394
  %v4396 = vpop.f32.mrb[0].mxu0
  %v4397 = vadd.f32 %v4237, %v4396
  %v4398 = vpop.f32.mrb[0].mxu0
  %v4399 = vadd.f32 %v4239, %v4398
  %4400 = vmatprep.mubr.f32.mxu0 0.0
  %v4401 = vand.u32 %v938, 4294901760
  %v4402 = vsub.f32 %v938, %v4401
  %v4403 = vand.u32 %v4402, 4294901760
  %4404 = vmatmul.mubr.f32.gmra.mrb[0].mxu0 %v4403
  %v4405 = vpop.f32.mrb[0].mxu0
  %v4406 = vadd.f32 %v4245, %v4405
  %v4407 = vpop.f32.mrb[0].mxu0
  %v4408 = vadd.f32 %v4247, %v4407
  %4409 = vmatprep.mubr.f32.mxu0 0.0
  %v4410 = vand.u32 %v941, 4294901760
  %v4411 = vsub.f32 %v941, %v4410
  %v4412 = vand.u32 %v4411, 4294901760
  %4413 = vmatmul.mubr.f32.gmra.mrb[0].mxu0 %v4412
  %v4414 = vpop.f32.mrb[0].mxu0
  %v4415 = vadd.f32 %v4253, %v4414
  %v4416 = vpop.f32.mrb[0].mxu0
  %v4417 = vadd.f32 %v4255, %v4416
  %4418 = vmatprep.mubr.f32.mxu0 0.0
  %v4419 = vand.u32 %v944, 4294901760
  %v4420 = vsub.f32 %v944, %v4419
  %v4421 = vand.u32 %v4420, 4294901760
  %4422 = vmatmul.mubr.f32.gmra.mrb[0].mxu0 %v4421
  %v4423 = vpop.f32.mrb[0].mxu0
  %v4424 = vadd.f32 %v4261, %v4423
  %v4425 = vpop.f32.mrb[0].mxu0
  %v4426 = vadd.f32 %v4263, %v4425
  %4427 = vmatprep.mubr.f32.mxu0 0.0
  %v4428 = vand.u32 %v947, 4294901760
  %v4429 = vsub.f32 %v947, %v4428
  %v4430 = vand.u32 %v4429, 4294901760
  %4431 = vmatmul.mubr.f32.gmra.mrb[0].mxu0 %v4430
  %v4432 = vpop.f32.mrb[0].mxu0
  %v4433 = vadd.f32 %v4269, %v4432
  %v4434 = vpop.f32.mrb[0].mxu0
  %v4435 = vadd.f32 %v4271, %v4434
  %4436 = vmatprep.mubr.f32.mxu0 0.0
  %v4437 = vand.u32 %v950, 4294901760
  %v4438 = vsub.f32 %v950, %v4437
  %v4439 = vand.u32 %v4438, 4294901760
  %4440 = vmatmul.mubr.f32.gmra.mrb[0].mxu0 %v4439
  %v4441 = vpop.f32.mrb[0].mxu0
  %v4442 = vadd.f32 %v4277, %v4441
  %v4443 = vpop.f32.mrb[0].mxu0
  %v4444 = vadd.f32 %v4279, %v4443
  %4445 = vmatprep.mubr.f32.mxu0 0.0
  %v4446 = vand.u32 %v953, 4294901760
  %v4447 = vsub.f32 %v953, %v4446
  %v4448 = vand.u32 %v4447, 4294901760
  %4449 = vmatmul.mubr.f32.gmra.mrb[0].mxu0 %v4448
  %v4450 = vpop.f32.mrb[0].mxu0
  %v4451 = vadd.f32 %v4285, %v4450
  %v4452 = vpop.f32.mrb[0].mxu0
  %v4453 = vadd.f32 %v4287, %v4452
  %4454 = vdwg.mxu0
  %v4455 = vand.u32 %v3675, 4294901760
  %v4456 = vsub.f32 %v3675, %v4455
  %v4457 = vand.u32 %v4456, 4294901760
  %4458 = vmatprep.subr.mxu0 %v4457
  %v4459 = vand.u32 %v3674, 4294901760
  %v4460 = vsub.f32 %v3674, %v4459
  %v4461 = vand.u32 %v4460, 4294901760
  %4462 = vmatpush1.msra.mxu0 %v4461
  %v4463 = vand.u32 %v3677, 4294901760
  %v4464 = vsub.f32 %v3677, %v4463
  %v4465 = vand.u32 %v4464, 4294901760
  %4466 = vmatprep.subr.mxu0 %v4465
  %v4467 = vand.u32 %v3676, 4294901760
  %v4468 = vsub.f32 %v3676, %v4467
  %v4469 = vand.u32 %v4468, 4294901760
  %4470 = vmatpush1.msra.mxu0 %v4469
  %v4471 = vand.u32 %v3679, 4294901760
  %v4472 = vsub.f32 %v3679, %v4471
  %v4473 = vand.u32 %v4472, 4294901760
  %4474 = vmatprep.subr.mxu0 %v4473
  %v4475 = vand.u32 %v3678, 4294901760
  %v4476 = vsub.f32 %v3678, %v4475
  %v4477 = vand.u32 %v4476, 4294901760
  %4478 = vmatpush1.msra.mxu0 %v4477
  %v4479 = vand.u32 %v3681, 4294901760
  %v4480 = vsub.f32 %v3681, %v4479
  %v4481 = vand.u32 %v4480, 4294901760
  %4482 = vmatprep.subr.mxu0 %v4481
  %v4483 = vand.u32 %v3680, 4294901760
  %v4484 = vsub.f32 %v3680, %v4483
  %v4485 = vand.u32 %v4484, 4294901760
  %4486 = vmatpush1.msra.mxu0 %v4485
  %v4487 = vand.u32 %v3683, 4294901760
  %v4488 = vsub.f32 %v3683, %v4487
  %v4489 = vand.u32 %v4488, 4294901760
  %4490 = vmatprep.subr.mxu0 %v4489
  %v4491 = vand.u32 %v3682, 4294901760
  %v4492 = vsub.f32 %v3682, %v4491
  %v4493 = vand.u32 %v4492, 4294901760
  %4494 = vmatpush1.msra.mxu0 %v4493
  %v4495 = vand.u32 %v3685, 4294901760
  %v4496 = vsub.f32 %v3685, %v4495
  %v4497 = vand.u32 %v4496, 4294901760
  %4498 = vmatprep.subr.mxu0 %v4497
  %v4499 = vand.u32 %v3684, 4294901760
  %v4500 = vsub.f32 %v3684, %v4499
  %v4501 = vand.u32 %v4500, 4294901760
  %4502 = vmatpush1.msra.mxu0 %v4501
  %v4503 = vand.u32 %v3687, 4294901760
  %v4504 = vsub.f32 %v3687, %v4503
  %v4505 = vand.u32 %v4504, 4294901760
  %4506 = vmatprep.subr.mxu0 %v4505
  %v4507 = vand.u32 %v3686, 4294901760
  %v4508 = vsub.f32 %v3686, %v4507
  %v4509 = vand.u32 %v4508, 4294901760
  %4510 = vmatpush1.msra.mxu0 %v4509
  %v4511 = vand.u32 %v3689, 4294901760
  %v4512 = vsub.f32 %v3689, %v4511
  %v4513 = vand.u32 %v4512, 4294901760
  %4514 = vmatprep.subr.mxu0 %v4513
  %v4515 = vand.u32 %v3688, 4294901760
  %v4516 = vsub.f32 %v3688, %v4515
  %v4517 = vand.u32 %v4516, 4294901760
  %4518 = vmatpush1.msra.mxu0 %v4517
  %v4519 = vand.u32 %v3691, 4294901760
  %v4520 = vsub.f32 %v3691, %v4519
  %v4521 = vand.u32 %v4520, 4294901760
  %4522 = vmatprep.subr.mxu0 %v4521
  %v4523 = vand.u32 %v3690, 4294901760
  %v4524 = vsub.f32 %v3690, %v4523
  %v4525 = vand.u32 %v4524, 4294901760
  %4526 = vmatpush1.msra.mxu0 %v4525
  %v4527 = vand.u32 %v3698, 4294901760
  %v4528 = vsub.f32 %v3698, %v4527
  %v4529 = vand.u32 %v4528, 4294901760
  %4530 = vmatprep.subr.mxu0 %v4529
  %v4531 = vand.u32 %v3695, 4294901760
  %v4532 = vsub.f32 %v3695, %v4531
  %v4533 = vand.u32 %v4532, 4294901760
  %4534 = vmatpush1.msra.mxu0 %v4533
  %4535 = vmatprep.subr.mxu0 0.0
  %4536 = vmatpush1.msra.mxu0 0.0
  %4537 = vmatprep.subr.mxu0 0.0
  %4538 = vmatpush1.msra.mxu0 0.0
  %4539 = vmatprep.subr.mxu0 0.0
  %4540 = vmatpush1.msra.mxu0 0.0
  %4541 = vmatprep.subr.mxu0 0.0
  %4542 = vmatpush1.msra.mxu0 0.0
  %4543 = vmatprep.subr.mxu0 0.0
  %4544 = vmatpush1.msra.mxu0 0.0
  %4545 = vmatprep.subr.mxu0 0.0
  %4546 = vmatpush1.msra.mxu0 0.0
  %4547 = vmatprep.subr.mxu0 0.0
  %4548 = vmatpush1.msra.mxu0 0.0
  %4549 = vmatprep.subr.mxu0 0.0
  %4550 = vmatpush1.msra.mxu0 0.0
  %4551 = vmatprep.subr.mxu0 0.0
  %4552 = vmatpush1.msra.mxu0 0.0
  %4553 = vmatprep.subr.mxu0 0.0
  %4554 = vmatpush1.msra.mxu0 0.0
  %4555 = vmatprep.subr.mxu0 0.0
  %4556 = vmatpush1.msra.mxu0 0.0
  %4557 = vmatprep.subr.mxu0 0.0
  %4558 = vmatpush1.msra.mxu0 0.0
  %4559 = vmatprep.subr.mxu0 0.0
  %4560 = vmatpush1.msra.mxu0 0.0
  %4561 = vmatprep.subr.mxu0 0.0
  %4562 = vmatpush1.msra.mxu0 0.0
  %4563 = vmatprep.subr.mxu0 0.0
  %4564 = vmatpush1.msra.mxu0 0.0
  %4565 = vmatprep.subr.mxu0 0.0
  %4566 = vmatpush1.msra.mxu0 0.0
  %4567 = vmatprep.subr.mxu0 0.0
  %4568 = vmatpush1.msra.mxu0 0.0
  %4569 = vmatprep.subr.mxu0 0.0
  %4570 = vmatpush1.msra.mxu0 0.0
  %4571 = vmatprep.subr.mxu0 0.0
  %4572 = vmatpush1.msra.mxu0 0.0
  %4573 = vmatprep.subr.mxu0 0.0
  %4574 = vmatpush1.msra.mxu0 0.0
  %4575 = vmatprep.subr.mxu0 0.0
  %4576 = vmatpush1.msra.mxu0 0.0
  %4577 = vmatprep.subr.mxu0 0.0
  %4578 = vmatpush1.msra.mxu0 0.0
  %4579 = vmatprep.mubr.f32.mxu0 0.0
  %v4580 = vand.u32 %v929, 4294901760
  %4581 = vmatmul.mubr.f32.gmra.mrb[0].mxu0 %v4580
  %v4582 = vpop.f32.mrb[0].mxu0
  %v4583 = vadd.f32 %v4379, %v4582
  %v4584 = vpop.f32.mrb[0].mxu0
  %v4585 = vadd.f32 %v4381, %v4584
  %4586 = vmatprep.mubr.f32.mxu0 0.0
  %v4587 = vand.u32 %v932, 4294901760
  %4588 = vmatmul.mubr.f32.gmra.mrb[0].mxu0 %v4587
  %v4589 = vpop.f32.mrb[0].mxu0
  %v4590 = vadd.f32 %v4388, %v4589
  %v4591 = vpop.f32.mrb[0].mxu0
  %v4592 = vadd.f32 %v4390, %v4591
  %4593 = vmatprep.mubr.f32.mxu0 0.0
  %v4594 = vand.u32 %v935, 4294901760
  %4595 = vmatmul.mubr.f32.gmra.mrb[0].mxu0 %v4594
  %v4596 = vpop.f32.mrb[0].mxu0
  %v4597 = vadd.f32 %v4397, %v4596
  %v4598 = vpop.f32.mrb[0].mxu0
  %v4599 = vadd.f32 %v4399, %v4598
  %4600 = vmatprep.mubr.f32.mxu0 0.0
  %v4601 = vand.u32 %v938, 4294901760
  %4602 = vmatmul.mubr.f32.gmra.mrb[0].mxu0 %v4601
  %v4603 = vpop.f32.mrb[0].mxu0
  %v4604 = vadd.f32 %v4406, %v4603
  %v4605 = vpop.f32.mrb[0].mxu0
  %v4606 = vadd.f32 %v4408, %v4605
  %4607 = vmatprep.mubr.f32.mxu0 0.0
  %v4608 = vand.u32 %v941, 4294901760
  %4609 = vmatmul.mubr.f32.gmra.mrb[0].mxu0 %v4608
  %v4610 = vpop.f32.mrb[0].mxu0
  %v4611 = vadd.f32 %v4415, %v4610
  %v4612 = vpop.f32.mrb[0].mxu0
  %v4613 = vadd.f32 %v4417, %v4612
  %4614 = vmatprep.mubr.f32.mxu0 0.0
  %v4615 = vand.u32 %v944, 4294901760
  %4616 = vmatmul.mubr.f32.gmra.mrb[0].mxu0 %v4615
  %v4617 = vpop.f32.mrb[0].mxu0
  %v4618 = vadd.f32 %v4424, %v4617
  %v4619 = vpop.f32.mrb[0].mxu0
  %v4620 = vadd.f32 %v4426, %v4619
  %4621 = vmatprep.mubr.f32.mxu0 0.0
  %v4622 = vand.u32 %v947, 4294901760
  %4623 = vmatmul.mubr.f32.gmra.mrb[0].mxu0 %v4622
  %v4624 = vpop.f32.mrb[0].mxu0
  %v4625 = vadd.f32 %v4433, %v4624
  %v4626 = vpop.f32.mrb[0].mxu0
  %v4627 = vadd.f32 %v4435, %v4626
  %4628 = vmatprep.mubr.f32.mxu0 0.0
  %v4629 = vand.u32 %v950, 4294901760
  %4630 = vmatmul.mubr.f32.gmra.mrb[0].mxu0 %v4629
  %v4631 = vpop.f32.mrb[0].mxu0
  %v4632 = vadd.f32 %v4442, %v4631
  %v4633 = vpop.f32.mrb[0].mxu0
  %v4634 = vadd.f32 %v4444, %v4633
  %4635 = vmatprep.mubr.f32.mxu0 0.0
  %v4636 = vand.u32 %v953, 4294901760
  %4637 = vmatmul.mubr.f32.gmra.mrb[0].mxu0 %v4636
  %v4638 = vpop.f32.mrb[0].mxu0
  %v4639 = vadd.f32 %v4451, %v4638
  %v4640 = vpop.f32.mrb[0].mxu0
  %v4641 = vadd.f32 %v4453, %v4640
  %4642 = vdwg.mxu0
  %v4643 = vand.u32 %v3675, 4294901760
  %4644 = vmatprep.subr.mxu0 %v4643
  %v4645 = vand.u32 %v3674, 4294901760
  %4646 = vmatpush1.msra.mxu0 %v4645
  %v4647 = vand.u32 %v3677, 4294901760
  %4648 = vmatprep.subr.mxu0 %v4647
  %v4649 = vand.u32 %v3676, 4294901760
  %4650 = vmatpush1.msra.mxu0 %v4649
  %v4651 = vand.u32 %v3679, 4294901760
  %4652 = vmatprep.subr.mxu0 %v4651
  %v4653 = vand.u32 %v3678, 4294901760
  %4654 = vmatpush1.msra.mxu0 %v4653
  %v4655 = vand.u32 %v3681, 4294901760
  %4656 = vmatprep.subr.mxu0 %v4655
  %v4657 = vand.u32 %v3680, 4294901760
  %4658 = vmatpush1.msra.mxu0 %v4657
  %v4659 = vand.u32 %v3683, 4294901760
  %4660 = vmatprep.subr.mxu0 %v4659
  %v4661 = vand.u32 %v3682, 4294901760
  %4662 = vmatpush1.msra.mxu0 %v4661
  %v4663 = vand.u32 %v3685, 4294901760
  %4664 = vmatprep.subr.mxu0 %v4663
  %v4665 = vand.u32 %v3684, 4294901760
  %4666 = vmatpush1.msra.mxu0 %v4665
  %v4667 = vand.u32 %v3687, 4294901760
  %4668 = vmatprep.subr.mxu0 %v4667
  %v4669 = vand.u32 %v3686, 4294901760
  %4670 = vmatpush1.msra.mxu0 %v4669
  %v4671 = vand.u32 %v3689, 4294901760
  %4672 = vmatprep.subr.mxu0 %v4671
  %v4673 = vand.u32 %v3688, 4294901760
  %4674 = vmatpush1.msra.mxu0 %v4673
  %v4675 = vand.u32 %v3691, 4294901760
  %4676 = vmatprep.subr.mxu0 %v4675
  %v4677 = vand.u32 %v3690, 4294901760
  %4678 = vmatpush1.msra.mxu0 %v4677
  %v4679 = vand.u32 %v3698, 4294901760
  %4680 = vmatprep.subr.mxu0 %v4679
  %v4681 = vand.u32 %v3695, 4294901760
  %4682 = vmatpush1.msra.mxu0 %v4681
  %4683 = vmatprep.subr.mxu0 0.0
  %4684 = vmatpush1.msra.mxu0 0.0
  %4685 = vmatprep.subr.mxu0 0.0
  %4686 = vmatpush1.msra.mxu0 0.0
  %4687 = vmatprep.subr.mxu0 0.0
  %4688 = vmatpush1.msra.mxu0 0.0
  %4689 = vmatprep.subr.mxu0 0.0
  %4690 = vmatpush1.msra.mxu0 0.0
  %4691 = vmatprep.subr.mxu0 0.0
  %4692 = vmatpush1.msra.mxu0 0.0
  %4693 = vmatprep.subr.mxu0 0.0
  %4694 = vmatpush1.msra.mxu0 0.0
  %4695 = vmatprep.subr.mxu0 0.0
  %4696 = vmatpush1.msra.mxu0 0.0
  %4697 = vmatprep.subr.mxu0 0.0
  %4698 = vmatpush1.msra.mxu0 0.0
  %4699 = vmatprep.subr.mxu0 0.0
  %4700 = vmatpush1.msra.mxu0 0.0
  %4701 = vmatprep.subr.mxu0 0.0
  %4702 = vmatpush1.msra.mxu0 0.0
  %4703 = vmatprep.subr.mxu0 0.0
  %4704 = vmatpush1.msra.mxu0 0.0
  %4705 = vmatprep.subr.mxu0 0.0
  %4706 = vmatpush1.msra.mxu0 0.0
  %4707 = vmatprep.subr.mxu0 0.0
  %4708 = vmatpush1.msra.mxu0 0.0
  %4709 = vmatprep.subr.mxu0 0.0
  %4710 = vmatpush1.msra.mxu0 0.0
  %4711 = vmatprep.subr.mxu0 0.0
  %4712 = vmatpush1.msra.mxu0 0.0
  %4713 = vmatprep.subr.mxu0 0.0
  %4714 = vmatpush1.msra.mxu0 0.0
  %4715 = vmatprep.subr.mxu0 0.0
  %4716 = vmatpush1.msra.mxu0 0.0
  %4717 = vmatprep.subr.mxu0 0.0
  %4718 = vmatpush1.msra.mxu0 0.0
  %4719 = vmatprep.subr.mxu0 0.0
  %4720 = vmatpush1.msra.mxu0 0.0
  %4721 = vmatprep.subr.mxu0 0.0
  %4722 = vmatpush1.msra.mxu0 0.0
  %4723 = vmatprep.subr.mxu0 0.0
  %4724 = vmatpush1.msra.mxu0 0.0
  %4725 = vmatprep.subr.mxu0 0.0
  %4726 = vmatpush1.msra.mxu0 0.0
  %4727 = vmatprep.mubr.f32.mxu0 0.0
  %v4728 = vand.u32 %v929, 4294901760
  %4729 = vmatmul.mubr.f32.gmra.mrb[0].mxu0 %v4728
  %v4730 = vpop.f32.mrb[0].mxu0
  %v4731 = vadd.f32 %v4583, %v4730
  %v4732 = vpop.f32.mrb[0].mxu0
  %v4733 = vadd.f32 %v4585, %v4732
  %4734 = vmatprep.mubr.f32.mxu0 0.0
  %v4735 = vand.u32 %v932, 4294901760
  %4736 = vmatmul.mubr.f32.gmra.mrb[0].mxu0 %v4735
  %v4737 = vpop.f32.mrb[0].mxu0
  %v4738 = vadd.f32 %v4590, %v4737
  %v4739 = vpop.f32.mrb[0].mxu0
  %v4740 = vadd.f32 %v4592, %v4739
  %4741 = vmatprep.mubr.f32.mxu0 0.0
  %v4742 = vand.u32 %v935, 4294901760
  %4743 = vmatmul.mubr.f32.gmra.mrb[0].mxu0 %v4742
  %v4744 = vpop.f32.mrb[0].mxu0
  %v4745 = vadd.f32 %v4597, %v4744
  %v4746 = vpop.f32.mrb[0].mxu0
  %v4747 = vadd.f32 %v4599, %v4746
  %4748 = vmatprep.mubr.f32.mxu0 0.0
  %v4749 = vand.u32 %v938, 4294901760
  %4750 = vmatmul.mubr.f32.gmra.mrb[0].mxu0 %v4749
  %v4751 = vpop.f32.mrb[0].mxu0
  %v4752 = vadd.f32 %v4604, %v4751
  %v4753 = vpop.f32.mrb[0].mxu0
  %v4754 = vadd.f32 %v4606, %v4753
  %4755 = vmatprep.mubr.f32.mxu0 0.0
  %v4756 = vand.u32 %v941, 4294901760
  %4757 = vmatmul.mubr.f32.gmra.mrb[0].mxu0 %v4756
  %v4758 = vpop.f32.mrb[0].mxu0
  %v4759 = vadd.f32 %v4611, %v4758
  %v4760 = vpop.f32.mrb[0].mxu0
  %v4761 = vadd.f32 %v4613, %v4760
  %4762 = vmatprep.mubr.f32.mxu0 0.0
  %v4763 = vand.u32 %v944, 4294901760
  %4764 = vmatmul.mubr.f32.gmra.mrb[0].mxu0 %v4763
  %v4765 = vpop.f32.mrb[0].mxu0
  %v4766 = vadd.f32 %v4618, %v4765
  %v4767 = vpop.f32.mrb[0].mxu0
  %v4768 = vadd.f32 %v4620, %v4767
  %4769 = vmatprep.mubr.f32.mxu0 0.0
  %v4770 = vand.u32 %v947, 4294901760
  %4771 = vmatmul.mubr.f32.gmra.mrb[0].mxu0 %v4770
  %v4772 = vpop.f32.mrb[0].mxu0
  %v4773 = vadd.f32 %v4625, %v4772
  %v4774 = vpop.f32.mrb[0].mxu0
  %v4775 = vadd.f32 %v4627, %v4774
  %4776 = vmatprep.mubr.f32.mxu0 0.0
  %v4777 = vand.u32 %v950, 4294901760
  %4778 = vmatmul.mubr.f32.gmra.mrb[0].mxu0 %v4777
  %v4779 = vpop.f32.mrb[0].mxu0
  %v4780 = vadd.f32 %v4632, %v4779
  %v4781 = vpop.f32.mrb[0].mxu0
  %v4782 = vadd.f32 %v4634, %v4781
  %4783 = vmatprep.mubr.f32.mxu0 0.0
  %v4784 = vand.u32 %v953, 4294901760
  %4785 = vmatmul.mubr.f32.gmra.mrb[0].mxu0 %v4784
  %v4786 = vpop.f32.mrb[0].mxu0
  %v4787 = vadd.f32 %v4639, %v4786
  %v4788 = vpop.f32.mrb[0].mxu0
  %v4789 = vadd.f32 %v4641, %v4788
  %4790 = vdwg.mxu0
  %v4791 = vmax.f32 %v4738, %v4740
  %4792 = vmax.xlane.f32.xlu0 %v4791
  %v4793 = vpop.xlane.xlu0 %4792
  %v4794 = vmax.f32 %v4745, %v4747
  %4795 = vmax.xlane.f32.xlu0 %v4794
  %v4796 = vpop.xlane.xlu0 %4795
  %v4797 = vmax.f32 %v4752, %v4754
  %4798 = vmax.xlane.f32.xlu0 %v4797
  %v4799 = vpop.xlane.xlu0 %4798
  %v4800 = vmax.f32 %v4759, %v4761
  %4801 = vmax.xlane.f32.xlu0 %v4800
  %v4802 = vpop.xlane.xlu0 %4801
  %v4803 = vmax.f32 %v4766, %v4768
  %4804 = vmax.xlane.f32.xlu0 %v4803
  %v4805 = vpop.xlane.xlu0 %4804
  %v4806 = vmax.f32 %v4773, %v4775
  %4807 = vmax.xlane.f32.xlu0 %v4806
  %v4808 = vpop.xlane.xlu0 %4807
  %v4809 = vmax.f32 %v4780, %v4782
  %4810 = vmax.xlane.f32.xlu0 %v4809
  %v4811 = vpop.xlane.xlu0 %4810
  %v4812 = vmax.f32 %v4787, %v4789
  %4813 = vmax.xlane.f32.xlu0 %v4812
  %v4814 = vpop.xlane.xlu0 %4813
  %v4815 = vsub.f32 %v4738, %v4793
  %v4816 = vsub.f32 %v4740, %v4793
  %v4817 = vsub.f32 %v4745, %v4796
  %v4818 = vsub.f32 %v4747, %v4796
  %v4819 = vsub.f32 %v4752, %v4799
  %v4820 = vsub.f32 %v4754, %v4799
  %v4821 = vsub.f32 %v4759, %v4802
  %v4822 = vsub.f32 %v4761, %v4802
  %v4823 = vsub.f32 %v4766, %v4805
  %v4824 = vsub.f32 %v4768, %v4805
  %v4825 = vsub.f32 %v4773, %v4808
  %v4826 = vsub.f32 %v4775, %v4808
  %v4827 = vsub.f32 %v4780, %v4811
  %v4828 = vsub.f32 %v4782, %v4811
  %v4829 = vsub.f32 %v4787, %v4814
  %v4830 = vsub.f32 %v4789, %v4814
  %v4831 = vmul.f32 %v4815, 1.442695
  %v4832 = vpow.pop %v4831
  %v4833 = vmul.f32 %v4816, 1.442695
  %v4834 = vpow.pop %v4833
  %v4835 = vmul.f32 %v4817, 1.442695
  %v4836 = vpow.pop %v4835
  %v4837 = vmul.f32 %v4818, 1.442695
  %v4838 = vpow.pop %v4837
  %v4839 = vmul.f32 %v4819, 1.442695
  %v4840 = vpow.pop %v4839
  %v4841 = vmul.f32 %v4820, 1.442695
  %v4842 = vpow.pop %v4841
  %v4843 = vmul.f32 %v4821, 1.442695
  %v4844 = vpow.pop %v4843
  %v4845 = vmul.f32 %v4822, 1.442695
  %v4846 = vpow.pop %v4845
  %v4847 = vmul.f32 %v4823, 1.442695
  %v4848 = vpow.pop %v4847
  %v4849 = vmul.f32 %v4824, 1.442695
  %v4850 = vpow.pop %v4849
  %v4851 = vmul.f32 %v4825, 1.442695
  %v4852 = vpow.pop %v4851
  %v4853 = vmul.f32 %v4826, 1.442695
  %v4854 = vpow.pop %v4853
  %v4855 = vmul.f32 %v4827, 1.442695
  %v4856 = vpow.pop %v4855
  %v4857 = vmul.f32 %v4828, 1.442695
  %v4858 = vpow.pop %v4857
  %v4859 = vmul.f32 %v4829, 1.442695
  %v4860 = vpow.pop %v4859
  %v4861 = vmul.f32 %v4830, 1.442695
  %v4862 = vpow.pop %v4861
  %v4863 = vadd.f32 %v4832, %v4834
  %4864 = vadd.xlane.f32.xlu0 %v4863
  %v4865 = vpop.xlane.xlu0 %4864
  %v4866 = vadd.f32 %v4836, %v4838
  %4867 = vadd.xlane.f32.xlu0 %v4866
  %v4868 = vpop.xlane.xlu0 %4867
  %v4869 = vadd.f32 %v4840, %v4842
  %4870 = vadd.xlane.f32.xlu0 %v4869
  %v4871 = vpop.xlane.xlu0 %4870
  %v4872 = vadd.f32 %v4844, %v4846
  %4873 = vadd.xlane.f32.xlu0 %v4872
  %v4874 = vpop.xlane.xlu0 %4873
  %v4875 = vadd.f32 %v4848, %v4850
  %4876 = vadd.xlane.f32.xlu0 %v4875
  %v4877 = vpop.xlane.xlu0 %4876
  %v4878 = vadd.f32 %v4852, %v4854
  %4879 = vadd.xlane.f32.xlu0 %v4878
  %v4880 = vpop.xlane.xlu0 %4879
  %v4881 = vadd.f32 %v4856, %v4858
  %4882 = vadd.xlane.f32.xlu0 %v4881
  %v4883 = vpop.xlane.xlu0 %4882
  %v4884 = vadd.f32 %v4860, %v4862
  %4885 = vadd.xlane.f32.xlu0 %v4884
  %v4886 = vpop.xlane.xlu0 %4885
  %v4887 = vrcp.pop %v4865
  %v4888 = vmul.f32 1.0, %v4887
  %v4889 = vrcp.pop %v4868
  %v4890 = vmul.f32 1.0, %v4889
  %v4891 = vrcp.pop %v4871
  %v4892 = vmul.f32 1.0, %v4891
  %v4893 = vrcp.pop %v4874
  %v4894 = vmul.f32 1.0, %v4893
  %v4895 = vrcp.pop %v4877
  %v4896 = vmul.f32 1.0, %v4895
  %v4897 = vrcp.pop %v4880
  %v4898 = vmul.f32 1.0, %v4897
  %v4899 = vrcp.pop %v4883
  %v4900 = vmul.f32 1.0, %v4899
  %v4901 = vrcp.pop %v4886
  %v4902 = vmul.f32 1.0, %v4901
  %v4903 = vmul.f32 %v4832, %v4888
  %v4904 = vmul.f32 %v4834, %v4888
  %v4905 = vmul.f32 %v4836, %v4890
  %v4906 = vmul.f32 %v4838, %v4890
  %v4907 = vmul.f32 %v4840, %v4892
  %v4908 = vmul.f32 %v4842, %v4892
  %v4909 = vmul.f32 %v4844, %v4894
  %v4910 = vmul.f32 %v4846, %v4894
  %v4911 = vmul.f32 %v4848, %v4896
  %v4912 = vmul.f32 %v4850, %v4896
  %v4913 = vmul.f32 %v4852, %v4898
  %v4914 = vmul.f32 %v4854, %v4898
  %v4915 = vmul.f32 %v4856, %v4900
  %v4916 = vmul.f32 %v4858, %v4900
  %v4917 = vmul.f32 %v4860, %v4902
  %v4918 = vmul.f32 %v4862, %v4902
  %v4919 = vadd.f32 %v4903, %v4905
  %v4920 = vadd.f32 %v4919, %v4907
  %v4921 = vadd.f32 %v4920, %v4909
  %v4922 = vadd.f32 %v4921, %v4911
  %v4923 = vadd.f32 %v4922, %v4913
  %v4924 = vadd.f32 %v4923, %v4915
  %v4925 = vadd.f32 %v4924, %v4917
  %v4926 = vrot.slane %v4925, 4
  %v4927 = vadd.f32 %v4925, %v4926
  %v4928 = vrot.slane %v4927, 2
  %v4929 = vadd.f32 %v4927, %v4928
  %v4930 = vrot.slane %v4929, 1
  %v4931 = vadd.f32 %v4929, %v4930
  %v4932 = vadd.f32 %v4904, %v4906
  %v4933 = vadd.f32 %v4932, %v4908
  %v4934 = vadd.f32 %v4933, %v4910
  %v4935 = vadd.f32 %v4934, %v4912
  %v4936 = vadd.f32 %v4935, %v4914
  %v4937 = vadd.f32 %v4936, %v4916
  %v4938 = vadd.f32 %v4937, %v4918
  %v4939 = vrot.slane %v4938, 4
  %v4940 = vadd.f32 %v4938, %v4939
  %v4941 = vrot.slane %v4940, 2
  %v4942 = vadd.f32 %v4940, %v4941
  %v4943 = vrot.slane %v4942, 1
  %v4944 = vadd.f32 %v4942, %v4943
  %v4945 = vadd.f32 %v4931, 1e-09
  %v4946 = vadd.f32 %v4944, 1e-09
  %v4947 = vrcp.pop %v4945
  %v4948 = vmul.f32 1.0, %v4947
  %v4949 = vrcp.pop %v4946
  %v4950 = vmul.f32 1.0, %v4949
  %v4951 = vand.u32 %v4904, 4294901760
  %4952 = vmatprep.subr.mxu0 %v4951
  %v4953 = vand.u32 %v4903, 4294901760
  %4954 = vmatpush1.msra.mxu0 %v4953
  %v4955 = vand.u32 %v4906, 4294901760
  %4956 = vmatprep.subr.mxu0 %v4955
  %v4957 = vand.u32 %v4905, 4294901760
  %4958 = vmatpush1.msra.mxu0 %v4957
  %v4959 = vand.u32 %v4908, 4294901760
  %4960 = vmatprep.subr.mxu0 %v4959
  %v4961 = vand.u32 %v4907, 4294901760
  %4962 = vmatpush1.msra.mxu0 %v4961
  %v4963 = vand.u32 %v4910, 4294901760
  %4964 = vmatprep.subr.mxu0 %v4963
  %v4965 = vand.u32 %v4909, 4294901760
  %4966 = vmatpush1.msra.mxu0 %v4965
  %v4967 = vand.u32 %v4912, 4294901760
  %4968 = vmatprep.subr.mxu0 %v4967
  %v4969 = vand.u32 %v4911, 4294901760
  %4970 = vmatpush1.msra.mxu0 %v4969
  %v4971 = vand.u32 %v4914, 4294901760
  %4972 = vmatprep.subr.mxu0 %v4971
  %v4973 = vand.u32 %v4913, 4294901760
  %4974 = vmatpush1.msra.mxu0 %v4973
  %v4975 = vand.u32 %v4916, 4294901760
  %4976 = vmatprep.subr.mxu0 %v4975
  %v4977 = vand.u32 %v4915, 4294901760
  %4978 = vmatpush1.msra.mxu0 %v4977
  %v4979 = vand.u32 %v4918, 4294901760
  %4980 = vmatprep.subr.mxu0 %v4979
  %v4981 = vand.u32 %v4917, 4294901760
  %4982 = vmatpush1.msra.mxu0 %v4981
  %4983 = vmatprep.subr.mxu0 0.0
  %4984 = vmatpush1.msra.mxu0 0.0
  %4985 = vmatprep.subr.mxu0 0.0
  %4986 = vmatpush1.msra.mxu0 0.0
  %4987 = vmatprep.subr.mxu0 0.0
  %4988 = vmatpush1.msra.mxu0 0.0
  %4989 = vmatprep.subr.mxu0 0.0
  %4990 = vmatpush1.msra.mxu0 0.0
  %4991 = vmatprep.subr.mxu0 0.0
  %4992 = vmatpush1.msra.mxu0 0.0
  %4993 = vmatprep.subr.mxu0 0.0
  %4994 = vmatpush1.msra.mxu0 0.0
  %4995 = vmatprep.subr.mxu0 0.0
  %4996 = vmatpush1.msra.mxu0 0.0
  %4997 = vmatprep.subr.mxu0 0.0
  %4998 = vmatpush1.msra.mxu0 0.0
  %4999 = vmatprep.subr.mxu0 0.0
  %5000 = vmatpush1.msra.mxu0 0.0
  %5001 = vmatprep.subr.mxu0 0.0
  %5002 = vmatpush1.msra.mxu0 0.0
  %5003 = vmatprep.subr.mxu0 0.0
  %5004 = vmatpush1.msra.mxu0 0.0
  %5005 = vmatprep.subr.mxu0 0.0
  %5006 = vmatpush1.msra.mxu0 0.0
  %5007 = vmatprep.subr.mxu0 0.0
  %5008 = vmatpush1.msra.mxu0 0.0
  %5009 = vmatprep.subr.mxu0 0.0
  %5010 = vmatpush1.msra.mxu0 0.0
  %5011 = vmatprep.subr.mxu0 0.0
  %5012 = vmatpush1.msra.mxu0 0.0
  %5013 = vmatprep.subr.mxu0 0.0
  %5014 = vmatpush1.msra.mxu0 0.0
  %5015 = vmatprep.subr.mxu0 0.0
  %5016 = vmatpush1.msra.mxu0 0.0
  %5017 = vmatprep.subr.mxu0 0.0
  %5018 = vmatpush1.msra.mxu0 0.0
  %5019 = vmatprep.subr.mxu0 0.0
  %5020 = vmatpush1.msra.mxu0 0.0
  %5021 = vmatprep.subr.mxu0 0.0
  %5022 = vmatpush1.msra.mxu0 0.0
  %5023 = vmatprep.subr.mxu0 0.0
  %5024 = vmatpush1.msra.mxu0 0.0
  %5025 = vmatprep.subr.mxu0 0.0
  %5026 = vmatpush1.msra.mxu0 0.0
  %5027 = vmatprep.subr.mxu0 0.0
  %5028 = vmatpush1.msra.mxu0 0.0
  %5029 = vmatprep.subr.mxu0 0.0
  %5030 = vmatpush1.msra.mxu0 0.0
  %5031 = vmatprep.mubr.f32.mxu0 0.0
  %v5032 = vand.u32 %v2215, 4294901760
  %v5033 = vsub.f32 %v2215, %v5032
  %v5034 = vand.u32 %v5033, 4294901760
  %v5035 = vsub.f32 %v5033, %v5034
  %v5036 = vand.u32 %v5035, 4294901760
  %5037 = vmatmul.mubr.f32.gmra.mrb[0].mxu0 %v5036
  %v5038 = vpop.f32.mrb[0].mxu0
  %v5039 = vadd.f32 0.0, %v5038
  %v5040 = vpop.f32.mrb[0].mxu0
  %v5041 = vadd.f32 0.0, %v5040
  %5042 = vdwg.mxu0
  %v5043 = vand.u32 %v4904, 4294901760
  %v5044 = vsub.f32 %v4904, %v5043
  %v5045 = vand.u32 %v5044, 4294901760
  %v5046 = vsub.f32 %v5044, %v5045
  %v5047 = vand.u32 %v5046, 4294901760
  %5048 = vmatprep.subr.mxu0 %v5047
  %v5049 = vand.u32 %v4903, 4294901760
  %v5050 = vsub.f32 %v4903, %v5049
  %v5051 = vand.u32 %v5050, 4294901760
  %v5052 = vsub.f32 %v5050, %v5051
  %v5053 = vand.u32 %v5052, 4294901760
  %5054 = vmatpush1.msra.mxu0 %v5053
  %v5055 = vand.u32 %v4906, 4294901760
  %v5056 = vsub.f32 %v4906, %v5055
  %v5057 = vand.u32 %v5056, 4294901760
  %v5058 = vsub.f32 %v5056, %v5057
  %v5059 = vand.u32 %v5058, 4294901760
  %5060 = vmatprep.subr.mxu0 %v5059
  %v5061 = vand.u32 %v4905, 4294901760
  %v5062 = vsub.f32 %v4905, %v5061
  %v5063 = vand.u32 %v5062, 4294901760
  %v5064 = vsub.f32 %v5062, %v5063
  %v5065 = vand.u32 %v5064, 4294901760
  %5066 = vmatpush1.msra.mxu0 %v5065
  %v5067 = vand.u32 %v4908, 4294901760
  %v5068 = vsub.f32 %v4908, %v5067
  %v5069 = vand.u32 %v5068, 4294901760
  %v5070 = vsub.f32 %v5068, %v5069
  %v5071 = vand.u32 %v5070, 4294901760
  %5072 = vmatprep.subr.mxu0 %v5071
  %v5073 = vand.u32 %v4907, 4294901760
  %v5074 = vsub.f32 %v4907, %v5073
  %v5075 = vand.u32 %v5074, 4294901760
  %v5076 = vsub.f32 %v5074, %v5075
  %v5077 = vand.u32 %v5076, 4294901760
  %5078 = vmatpush1.msra.mxu0 %v5077
  %v5079 = vand.u32 %v4910, 4294901760
  %v5080 = vsub.f32 %v4910, %v5079
  %v5081 = vand.u32 %v5080, 4294901760
  %v5082 = vsub.f32 %v5080, %v5081
  %v5083 = vand.u32 %v5082, 4294901760
  %5084 = vmatprep.subr.mxu0 %v5083
  %v5085 = vand.u32 %v4909, 4294901760
  %v5086 = vsub.f32 %v4909, %v5085
  %v5087 = vand.u32 %v5086, 4294901760
  %v5088 = vsub.f32 %v5086, %v5087
  %v5089 = vand.u32 %v5088, 4294901760
  %5090 = vmatpush1.msra.mxu0 %v5089
  %v5091 = vand.u32 %v4912, 4294901760
  %v5092 = vsub.f32 %v4912, %v5091
  %v5093 = vand.u32 %v5092, 4294901760
  %v5094 = vsub.f32 %v5092, %v5093
  %v5095 = vand.u32 %v5094, 4294901760
  %5096 = vmatprep.subr.mxu0 %v5095
  %v5097 = vand.u32 %v4911, 4294901760
  %v5098 = vsub.f32 %v4911, %v5097
  %v5099 = vand.u32 %v5098, 4294901760
  %v5100 = vsub.f32 %v5098, %v5099
  %v5101 = vand.u32 %v5100, 4294901760
  %5102 = vmatpush1.msra.mxu0 %v5101
  %v5103 = vand.u32 %v4914, 4294901760
  %v5104 = vsub.f32 %v4914, %v5103
  %v5105 = vand.u32 %v5104, 4294901760
  %v5106 = vsub.f32 %v5104, %v5105
  %v5107 = vand.u32 %v5106, 4294901760
  %5108 = vmatprep.subr.mxu0 %v5107
  %v5109 = vand.u32 %v4913, 4294901760
  %v5110 = vsub.f32 %v4913, %v5109
  %v5111 = vand.u32 %v5110, 4294901760
  %v5112 = vsub.f32 %v5110, %v5111
  %v5113 = vand.u32 %v5112, 4294901760
  %5114 = vmatpush1.msra.mxu0 %v5113
  %v5115 = vand.u32 %v4916, 4294901760
  %v5116 = vsub.f32 %v4916, %v5115
  %v5117 = vand.u32 %v5116, 4294901760
  %v5118 = vsub.f32 %v5116, %v5117
  %v5119 = vand.u32 %v5118, 4294901760
  %5120 = vmatprep.subr.mxu0 %v5119
  %v5121 = vand.u32 %v4915, 4294901760
  %v5122 = vsub.f32 %v4915, %v5121
  %v5123 = vand.u32 %v5122, 4294901760
  %v5124 = vsub.f32 %v5122, %v5123
  %v5125 = vand.u32 %v5124, 4294901760
  %5126 = vmatpush1.msra.mxu0 %v5125
  %v5127 = vand.u32 %v4918, 4294901760
  %v5128 = vsub.f32 %v4918, %v5127
  %v5129 = vand.u32 %v5128, 4294901760
  %v5130 = vsub.f32 %v5128, %v5129
  %v5131 = vand.u32 %v5130, 4294901760
  %5132 = vmatprep.subr.mxu0 %v5131
  %v5133 = vand.u32 %v4917, 4294901760
  %v5134 = vsub.f32 %v4917, %v5133
  %v5135 = vand.u32 %v5134, 4294901760
  %v5136 = vsub.f32 %v5134, %v5135
  %v5137 = vand.u32 %v5136, 4294901760
  %5138 = vmatpush1.msra.mxu0 %v5137
  %5139 = vmatprep.subr.mxu0 0.0
  %5140 = vmatpush1.msra.mxu0 0.0
  %5141 = vmatprep.subr.mxu0 0.0
  %5142 = vmatpush1.msra.mxu0 0.0
  %5143 = vmatprep.subr.mxu0 0.0
  %5144 = vmatpush1.msra.mxu0 0.0
  %5145 = vmatprep.subr.mxu0 0.0
  %5146 = vmatpush1.msra.mxu0 0.0
  %5147 = vmatprep.subr.mxu0 0.0
  %5148 = vmatpush1.msra.mxu0 0.0
  %5149 = vmatprep.subr.mxu0 0.0
  %5150 = vmatpush1.msra.mxu0 0.0
  %5151 = vmatprep.subr.mxu0 0.0
  %5152 = vmatpush1.msra.mxu0 0.0
  %5153 = vmatprep.subr.mxu0 0.0
  %5154 = vmatpush1.msra.mxu0 0.0
  %5155 = vmatprep.subr.mxu0 0.0
  %5156 = vmatpush1.msra.mxu0 0.0
  %5157 = vmatprep.subr.mxu0 0.0
  %5158 = vmatpush1.msra.mxu0 0.0
  %5159 = vmatprep.subr.mxu0 0.0
  %5160 = vmatpush1.msra.mxu0 0.0
  %5161 = vmatprep.subr.mxu0 0.0
  %5162 = vmatpush1.msra.mxu0 0.0
  %5163 = vmatprep.subr.mxu0 0.0
  %5164 = vmatpush1.msra.mxu0 0.0
  %5165 = vmatprep.subr.mxu0 0.0
  %5166 = vmatpush1.msra.mxu0 0.0
  %5167 = vmatprep.subr.mxu0 0.0
  %5168 = vmatpush1.msra.mxu0 0.0
  %5169 = vmatprep.subr.mxu0 0.0
  %5170 = vmatpush1.msra.mxu0 0.0
  %5171 = vmatprep.subr.mxu0 0.0
  %5172 = vmatpush1.msra.mxu0 0.0
  %5173 = vmatprep.subr.mxu0 0.0
  %5174 = vmatpush1.msra.mxu0 0.0
  %5175 = vmatprep.subr.mxu0 0.0
  %5176 = vmatpush1.msra.mxu0 0.0
  %5177 = vmatprep.subr.mxu0 0.0
  %5178 = vmatpush1.msra.mxu0 0.0
  %5179 = vmatprep.subr.mxu0 0.0
  %5180 = vmatpush1.msra.mxu0 0.0
  %5181 = vmatprep.subr.mxu0 0.0
  %5182 = vmatpush1.msra.mxu0 0.0
  %5183 = vmatprep.subr.mxu0 0.0
  %5184 = vmatpush1.msra.mxu0 0.0
  %5185 = vmatprep.subr.mxu0 0.0
  %5186 = vmatpush1.msra.mxu0 0.0
  %5187 = vmatprep.mubr.f32.mxu0 0.0
  %v5188 = vand.u32 %v2215, 4294901760
  %5189 = vmatmul.mubr.f32.gmra.mrb[0].mxu0 %v5188
  %v5190 = vpop.f32.mrb[0].mxu0
  %v5191 = vadd.f32 %v5039, %v5190
  %v5192 = vpop.f32.mrb[0].mxu0
  %v5193 = vadd.f32 %v5041, %v5192
  %5194 = vdwg.mxu0
  %v5195 = vand.u32 %v4904, 4294901760
  %v5196 = vsub.f32 %v4904, %v5195
  %5197 = vmatprep.subr.mxu0 %v5196
  %v5198 = vand.u32 %v4903, 4294901760
  %v5199 = vsub.f32 %v4903, %v5198
  %5200 = vmatpush1.msra.mxu0 %v5199
  %v5201 = vand.u32 %v4906, 4294901760
  %v5202 = vsub.f32 %v4906, %v5201
  %5203 = vmatprep.subr.mxu0 %v5202
  %v5204 = vand.u32 %v4905, 4294901760
  %v5205 = vsub.f32 %v4905, %v5204
  %5206 = vmatpush1.msra.mxu0 %v5205
  %v5207 = vand.u32 %v4908, 4294901760
  %v5208 = vsub.f32 %v4908, %v5207
  %5209 = vmatprep.subr.mxu0 %v5208
  %v5210 = vand.u32 %v4907, 4294901760
  %v5211 = vsub.f32 %v4907, %v5210
  %5212 = vmatpush1.msra.mxu0 %v5211
  %v5213 = vand.u32 %v4910, 4294901760
  %v5214 = vsub.f32 %v4910, %v5213
  %5215 = vmatprep.subr.mxu0 %v5214
  %v5216 = vand.u32 %v4909, 4294901760
  %v5217 = vsub.f32 %v4909, %v5216
  %5218 = vmatpush1.msra.mxu0 %v5217
  %v5219 = vand.u32 %v4912, 4294901760
  %v5220 = vsub.f32 %v4912, %v5219
  %5221 = vmatprep.subr.mxu0 %v5220
  %v5222 = vand.u32 %v4911, 4294901760
  %v5223 = vsub.f32 %v4911, %v5222
  %5224 = vmatpush1.msra.mxu0 %v5223
  %v5225 = vand.u32 %v4914, 4294901760
  %v5226 = vsub.f32 %v4914, %v5225
  %5227 = vmatprep.subr.mxu0 %v5226
  %v5228 = vand.u32 %v4913, 4294901760
  %v5229 = vsub.f32 %v4913, %v5228
  %5230 = vmatpush1.msra.mxu0 %v5229
  %v5231 = vand.u32 %v4916, 4294901760
  %v5232 = vsub.f32 %v4916, %v5231
  %5233 = vmatprep.subr.mxu0 %v5232
  %v5234 = vand.u32 %v4915, 4294901760
  %v5235 = vsub.f32 %v4915, %v5234
  %5236 = vmatpush1.msra.mxu0 %v5235
  %v5237 = vand.u32 %v4918, 4294901760
  %v5238 = vsub.f32 %v4918, %v5237
  %5239 = vmatprep.subr.mxu0 %v5238
  %v5240 = vand.u32 %v4917, 4294901760
  %v5241 = vsub.f32 %v4917, %v5240
  %5242 = vmatpush1.msra.mxu0 %v5241
  %5243 = vmatprep.subr.mxu0 0.0
  %5244 = vmatpush1.msra.mxu0 0.0
  %5245 = vmatprep.subr.mxu0 0.0
  %5246 = vmatpush1.msra.mxu0 0.0
  %5247 = vmatprep.subr.mxu0 0.0
  %5248 = vmatpush1.msra.mxu0 0.0
  %5249 = vmatprep.subr.mxu0 0.0
  %5250 = vmatpush1.msra.mxu0 0.0
  %5251 = vmatprep.subr.mxu0 0.0
  %5252 = vmatpush1.msra.mxu0 0.0
  %5253 = vmatprep.subr.mxu0 0.0
  %5254 = vmatpush1.msra.mxu0 0.0
  %5255 = vmatprep.subr.mxu0 0.0
  %5256 = vmatpush1.msra.mxu0 0.0
  %5257 = vmatprep.subr.mxu0 0.0
  %5258 = vmatpush1.msra.mxu0 0.0
  %5259 = vmatprep.subr.mxu0 0.0
  %5260 = vmatpush1.msra.mxu0 0.0
  %5261 = vmatprep.subr.mxu0 0.0
  %5262 = vmatpush1.msra.mxu0 0.0
  %5263 = vmatprep.subr.mxu0 0.0
  %5264 = vmatpush1.msra.mxu0 0.0
  %5265 = vmatprep.subr.mxu0 0.0
  %5266 = vmatpush1.msra.mxu0 0.0
  %5267 = vmatprep.subr.mxu0 0.0
  %5268 = vmatpush1.msra.mxu0 0.0
  %5269 = vmatprep.subr.mxu0 0.0
  %5270 = vmatpush1.msra.mxu0 0.0
  %5271 = vmatprep.subr.mxu0 0.0
  %5272 = vmatpush1.msra.mxu0 0.0
  %5273 = vmatprep.subr.mxu0 0.0
  %5274 = vmatpush1.msra.mxu0 0.0
  %5275 = vmatprep.subr.mxu0 0.0
  %5276 = vmatpush1.msra.mxu0 0.0
  %5277 = vmatprep.subr.mxu0 0.0
  %5278 = vmatpush1.msra.mxu0 0.0
  %5279 = vmatprep.subr.mxu0 0.0
  %5280 = vmatpush1.msra.mxu0 0.0
  %5281 = vmatprep.subr.mxu0 0.0
  %5282 = vmatpush1.msra.mxu0 0.0
  %5283 = vmatprep.subr.mxu0 0.0
  %5284 = vmatpush1.msra.mxu0 0.0
  %5285 = vmatprep.subr.mxu0 0.0
  %5286 = vmatpush1.msra.mxu0 0.0
  %5287 = vmatprep.subr.mxu0 0.0
  %5288 = vmatpush1.msra.mxu0 0.0
  %5289 = vmatprep.subr.mxu0 0.0
  %5290 = vmatpush1.msra.mxu0 0.0
  %5291 = vmatprep.mubr.f32.mxu0 0.0
  %v5292 = vand.u32 %v2215, 4294901760
  %v5293 = vsub.f32 %v2215, %v5292
  %5294 = vmatmul.mubr.f32.gmra.mrb[0].mxu0 %v5293
  %v5295 = vpop.f32.mrb[0].mxu0
  %v5296 = vadd.f32 %v5191, %v5295
  %v5297 = vpop.f32.mrb[0].mxu0
  %v5298 = vadd.f32 %v5193, %v5297
  %5299 = vdwg.mxu0
  %v5300 = vand.u32 %v4904, 4294901760
  %5301 = vmatprep.subr.mxu0 %v5300
  %v5302 = vand.u32 %v4903, 4294901760
  %5303 = vmatpush1.msra.mxu0 %v5302
  %v5304 = vand.u32 %v4906, 4294901760
  %5305 = vmatprep.subr.mxu0 %v5304
  %v5306 = vand.u32 %v4905, 4294901760
  %5307 = vmatpush1.msra.mxu0 %v5306
  %v5308 = vand.u32 %v4908, 4294901760
  %5309 = vmatprep.subr.mxu0 %v5308
  %v5310 = vand.u32 %v4907, 4294901760
  %5311 = vmatpush1.msra.mxu0 %v5310
  %v5312 = vand.u32 %v4910, 4294901760
  %5313 = vmatprep.subr.mxu0 %v5312
  %v5314 = vand.u32 %v4909, 4294901760
  %5315 = vmatpush1.msra.mxu0 %v5314
  %v5316 = vand.u32 %v4912, 4294901760
  %5317 = vmatprep.subr.mxu0 %v5316
  %v5318 = vand.u32 %v4911, 4294901760
  %5319 = vmatpush1.msra.mxu0 %v5318
  %v5320 = vand.u32 %v4914, 4294901760
  %5321 = vmatprep.subr.mxu0 %v5320
  %v5322 = vand.u32 %v4913, 4294901760
  %5323 = vmatpush1.msra.mxu0 %v5322
  %v5324 = vand.u32 %v4916, 4294901760
  %5325 = vmatprep.subr.mxu0 %v5324
  %v5326 = vand.u32 %v4915, 4294901760
  %5327 = vmatpush1.msra.mxu0 %v5326
  %v5328 = vand.u32 %v4918, 4294901760
  %5329 = vmatprep.subr.mxu0 %v5328
  %v5330 = vand.u32 %v4917, 4294901760
  %5331 = vmatpush1.msra.mxu0 %v5330
  %5332 = vmatprep.subr.mxu0 0.0
  %5333 = vmatpush1.msra.mxu0 0.0
  %5334 = vmatprep.subr.mxu0 0.0
  %5335 = vmatpush1.msra.mxu0 0.0
  %5336 = vmatprep.subr.mxu0 0.0
  %5337 = vmatpush1.msra.mxu0 0.0
  %5338 = vmatprep.subr.mxu0 0.0
  %5339 = vmatpush1.msra.mxu0 0.0
  %5340 = vmatprep.subr.mxu0 0.0
  %5341 = vmatpush1.msra.mxu0 0.0
  %5342 = vmatprep.subr.mxu0 0.0
  %5343 = vmatpush1.msra.mxu0 0.0
  %5344 = vmatprep.subr.mxu0 0.0
  %5345 = vmatpush1.msra.mxu0 0.0
  %5346 = vmatprep.subr.mxu0 0.0
  %5347 = vmatpush1.msra.mxu0 0.0
  %5348 = vmatprep.subr.mxu0 0.0
  %5349 = vmatpush1.msra.mxu0 0.0
  %5350 = vmatprep.subr.mxu0 0.0
  %5351 = vmatpush1.msra.mxu0 0.0
  %5352 = vmatprep.subr.mxu0 0.0
  %5353 = vmatpush1.msra.mxu0 0.0
  %5354 = vmatprep.subr.mxu0 0.0
  %5355 = vmatpush1.msra.mxu0 0.0
  %5356 = vmatprep.subr.mxu0 0.0
  %5357 = vmatpush1.msra.mxu0 0.0
  %5358 = vmatprep.subr.mxu0 0.0
  %5359 = vmatpush1.msra.mxu0 0.0
  %5360 = vmatprep.subr.mxu0 0.0
  %5361 = vmatpush1.msra.mxu0 0.0
  %5362 = vmatprep.subr.mxu0 0.0
  %5363 = vmatpush1.msra.mxu0 0.0
  %5364 = vmatprep.subr.mxu0 0.0
  %5365 = vmatpush1.msra.mxu0 0.0
  %5366 = vmatprep.subr.mxu0 0.0
  %5367 = vmatpush1.msra.mxu0 0.0
  %5368 = vmatprep.subr.mxu0 0.0
  %5369 = vmatpush1.msra.mxu0 0.0
  %5370 = vmatprep.subr.mxu0 0.0
  %5371 = vmatpush1.msra.mxu0 0.0
  %5372 = vmatprep.subr.mxu0 0.0
  %5373 = vmatpush1.msra.mxu0 0.0
  %5374 = vmatprep.subr.mxu0 0.0
  %5375 = vmatpush1.msra.mxu0 0.0
  %5376 = vmatprep.subr.mxu0 0.0
  %5377 = vmatpush1.msra.mxu0 0.0
  %5378 = vmatprep.subr.mxu0 0.0
  %5379 = vmatpush1.msra.mxu0 0.0
  %5380 = vmatprep.mubr.f32.mxu0 0.0
  %v5381 = vand.u32 %v2215, 4294901760
  %v5382 = vsub.f32 %v2215, %v5381
  %v5383 = vand.u32 %v5382, 4294901760
  %5384 = vmatmul.mubr.f32.gmra.mrb[0].mxu0 %v5383
  %v5385 = vpop.f32.mrb[0].mxu0
  %v5386 = vadd.f32 %v5296, %v5385
  %v5387 = vpop.f32.mrb[0].mxu0
  %v5388 = vadd.f32 %v5298, %v5387
  %5389 = vdwg.mxu0
  %v5390 = vand.u32 %v4904, 4294901760
  %v5391 = vsub.f32 %v4904, %v5390
  %v5392 = vand.u32 %v5391, 4294901760
  %5393 = vmatprep.subr.mxu0 %v5392
  %v5394 = vand.u32 %v4903, 4294901760
  %v5395 = vsub.f32 %v4903, %v5394
  %v5396 = vand.u32 %v5395, 4294901760
  %5397 = vmatpush1.msra.mxu0 %v5396
  %v5398 = vand.u32 %v4906, 4294901760
  %v5399 = vsub.f32 %v4906, %v5398
  %v5400 = vand.u32 %v5399, 4294901760
  %5401 = vmatprep.subr.mxu0 %v5400
  %v5402 = vand.u32 %v4905, 4294901760
  %v5403 = vsub.f32 %v4905, %v5402
  %v5404 = vand.u32 %v5403, 4294901760
  %5405 = vmatpush1.msra.mxu0 %v5404
  %v5406 = vand.u32 %v4908, 4294901760
  %v5407 = vsub.f32 %v4908, %v5406
  %v5408 = vand.u32 %v5407, 4294901760
  %5409 = vmatprep.subr.mxu0 %v5408
  %v5410 = vand.u32 %v4907, 4294901760
  %v5411 = vsub.f32 %v4907, %v5410
  %v5412 = vand.u32 %v5411, 4294901760
  %5413 = vmatpush1.msra.mxu0 %v5412
  %v5414 = vand.u32 %v4910, 4294901760
  %v5415 = vsub.f32 %v4910, %v5414
  %v5416 = vand.u32 %v5415, 4294901760
  %5417 = vmatprep.subr.mxu0 %v5416
  %v5418 = vand.u32 %v4909, 4294901760
  %v5419 = vsub.f32 %v4909, %v5418
  %v5420 = vand.u32 %v5419, 4294901760
  %5421 = vmatpush1.msra.mxu0 %v5420
  %v5422 = vand.u32 %v4912, 4294901760
  %v5423 = vsub.f32 %v4912, %v5422
  %v5424 = vand.u32 %v5423, 4294901760
  %5425 = vmatprep.subr.mxu0 %v5424
  %v5426 = vand.u32 %v4911, 4294901760
  %v5427 = vsub.f32 %v4911, %v5426
  %v5428 = vand.u32 %v5427, 4294901760
  %5429 = vmatpush1.msra.mxu0 %v5428
  %v5430 = vand.u32 %v4914, 4294901760
  %v5431 = vsub.f32 %v4914, %v5430
  %v5432 = vand.u32 %v5431, 4294901760
  %5433 = vmatprep.subr.mxu0 %v5432
  %v5434 = vand.u32 %v4913, 4294901760
  %v5435 = vsub.f32 %v4913, %v5434
  %v5436 = vand.u32 %v5435, 4294901760
  %5437 = vmatpush1.msra.mxu0 %v5436
  %v5438 = vand.u32 %v4916, 4294901760
  %v5439 = vsub.f32 %v4916, %v5438
  %v5440 = vand.u32 %v5439, 4294901760
  %5441 = vmatprep.subr.mxu0 %v5440
  %v5442 = vand.u32 %v4915, 4294901760
  %v5443 = vsub.f32 %v4915, %v5442
  %v5444 = vand.u32 %v5443, 4294901760
  %5445 = vmatpush1.msra.mxu0 %v5444
  %v5446 = vand.u32 %v4918, 4294901760
  %v5447 = vsub.f32 %v4918, %v5446
  %v5448 = vand.u32 %v5447, 4294901760
  %5449 = vmatprep.subr.mxu0 %v5448
  %v5450 = vand.u32 %v4917, 4294901760
  %v5451 = vsub.f32 %v4917, %v5450
  %v5452 = vand.u32 %v5451, 4294901760
  %5453 = vmatpush1.msra.mxu0 %v5452
  %5454 = vmatprep.subr.mxu0 0.0
  %5455 = vmatpush1.msra.mxu0 0.0
  %5456 = vmatprep.subr.mxu0 0.0
  %5457 = vmatpush1.msra.mxu0 0.0
  %5458 = vmatprep.subr.mxu0 0.0
  %5459 = vmatpush1.msra.mxu0 0.0
  %5460 = vmatprep.subr.mxu0 0.0
  %5461 = vmatpush1.msra.mxu0 0.0
  %5462 = vmatprep.subr.mxu0 0.0
  %5463 = vmatpush1.msra.mxu0 0.0
  %5464 = vmatprep.subr.mxu0 0.0
  %5465 = vmatpush1.msra.mxu0 0.0
  %5466 = vmatprep.subr.mxu0 0.0
  %5467 = vmatpush1.msra.mxu0 0.0
  %5468 = vmatprep.subr.mxu0 0.0
  %5469 = vmatpush1.msra.mxu0 0.0
  %5470 = vmatprep.subr.mxu0 0.0
  %5471 = vmatpush1.msra.mxu0 0.0
  %5472 = vmatprep.subr.mxu0 0.0
  %5473 = vmatpush1.msra.mxu0 0.0
  %5474 = vmatprep.subr.mxu0 0.0
  %5475 = vmatpush1.msra.mxu0 0.0
  %5476 = vmatprep.subr.mxu0 0.0
  %5477 = vmatpush1.msra.mxu0 0.0
  %5478 = vmatprep.subr.mxu0 0.0
  %5479 = vmatpush1.msra.mxu0 0.0
  %5480 = vmatprep.subr.mxu0 0.0
  %5481 = vmatpush1.msra.mxu0 0.0
  %5482 = vmatprep.subr.mxu0 0.0
  %5483 = vmatpush1.msra.mxu0 0.0
  %5484 = vmatprep.subr.mxu0 0.0
  %5485 = vmatpush1.msra.mxu0 0.0
  %5486 = vmatprep.subr.mxu0 0.0
  %5487 = vmatpush1.msra.mxu0 0.0
  %5488 = vmatprep.subr.mxu0 0.0
  %5489 = vmatpush1.msra.mxu0 0.0
  %5490 = vmatprep.subr.mxu0 0.0
  %5491 = vmatpush1.msra.mxu0 0.0
  %5492 = vmatprep.subr.mxu0 0.0
  %5493 = vmatpush1.msra.mxu0 0.0
  %5494 = vmatprep.subr.mxu0 0.0
  %5495 = vmatpush1.msra.mxu0 0.0
  %5496 = vmatprep.subr.mxu0 0.0
  %5497 = vmatpush1.msra.mxu0 0.0
  %5498 = vmatprep.subr.mxu0 0.0
  %5499 = vmatpush1.msra.mxu0 0.0
  %5500 = vmatprep.subr.mxu0 0.0
  %5501 = vmatpush1.msra.mxu0 0.0
  %5502 = vmatprep.mubr.f32.mxu0 0.0
  %v5503 = vand.u32 %v2215, 4294901760
  %5504 = vmatmul.mubr.f32.gmra.mrb[0].mxu0 %v5503
  %v5505 = vpop.f32.mrb[0].mxu0
  %v5506 = vadd.f32 %v5386, %v5505
  %v5507 = vpop.f32.mrb[0].mxu0
  %v5508 = vadd.f32 %v5388, %v5507
  %5509 = vdwg.mxu0
  %v5510 = vand.u32 %v4904, 4294901760
  %5511 = vmatprep.subr.mxu0 %v5510
  %v5512 = vand.u32 %v4903, 4294901760
  %5513 = vmatpush1.msra.mxu0 %v5512
  %v5514 = vand.u32 %v4906, 4294901760
  %5515 = vmatprep.subr.mxu0 %v5514
  %v5516 = vand.u32 %v4905, 4294901760
  %5517 = vmatpush1.msra.mxu0 %v5516
  %v5518 = vand.u32 %v4908, 4294901760
  %5519 = vmatprep.subr.mxu0 %v5518
  %v5520 = vand.u32 %v4907, 4294901760
  %5521 = vmatpush1.msra.mxu0 %v5520
  %v5522 = vand.u32 %v4910, 4294901760
  %5523 = vmatprep.subr.mxu0 %v5522
  %v5524 = vand.u32 %v4909, 4294901760
  %5525 = vmatpush1.msra.mxu0 %v5524
  %v5526 = vand.u32 %v4912, 4294901760
  %5527 = vmatprep.subr.mxu0 %v5526
  %v5528 = vand.u32 %v4911, 4294901760
  %5529 = vmatpush1.msra.mxu0 %v5528
  %v5530 = vand.u32 %v4914, 4294901760
  %5531 = vmatprep.subr.mxu0 %v5530
  %v5532 = vand.u32 %v4913, 4294901760
  %5533 = vmatpush1.msra.mxu0 %v5532
  %v5534 = vand.u32 %v4916, 4294901760
  %5535 = vmatprep.subr.mxu0 %v5534
  %v5536 = vand.u32 %v4915, 4294901760
  %5537 = vmatpush1.msra.mxu0 %v5536
  %v5538 = vand.u32 %v4918, 4294901760
  %5539 = vmatprep.subr.mxu0 %v5538
  %v5540 = vand.u32 %v4917, 4294901760
  %5541 = vmatpush1.msra.mxu0 %v5540
  %5542 = vmatprep.subr.mxu0 0.0
  %5543 = vmatpush1.msra.mxu0 0.0
  %5544 = vmatprep.subr.mxu0 0.0
  %5545 = vmatpush1.msra.mxu0 0.0
  %5546 = vmatprep.subr.mxu0 0.0
  %5547 = vmatpush1.msra.mxu0 0.0
  %5548 = vmatprep.subr.mxu0 0.0
  %5549 = vmatpush1.msra.mxu0 0.0
  %5550 = vmatprep.subr.mxu0 0.0
  %5551 = vmatpush1.msra.mxu0 0.0
  %5552 = vmatprep.subr.mxu0 0.0
  %5553 = vmatpush1.msra.mxu0 0.0
  %5554 = vmatprep.subr.mxu0 0.0
  %5555 = vmatpush1.msra.mxu0 0.0
  %5556 = vmatprep.subr.mxu0 0.0
  %5557 = vmatpush1.msra.mxu0 0.0
  %5558 = vmatprep.subr.mxu0 0.0
  %5559 = vmatpush1.msra.mxu0 0.0
  %5560 = vmatprep.subr.mxu0 0.0
  %5561 = vmatpush1.msra.mxu0 0.0
  %5562 = vmatprep.subr.mxu0 0.0
  %5563 = vmatpush1.msra.mxu0 0.0
  %5564 = vmatprep.subr.mxu0 0.0
  %5565 = vmatpush1.msra.mxu0 0.0
  %5566 = vmatprep.subr.mxu0 0.0
  %5567 = vmatpush1.msra.mxu0 0.0
  %5568 = vmatprep.subr.mxu0 0.0
  %5569 = vmatpush1.msra.mxu0 0.0
  %5570 = vmatprep.subr.mxu0 0.0
  %5571 = vmatpush1.msra.mxu0 0.0
  %5572 = vmatprep.subr.mxu0 0.0
  %5573 = vmatpush1.msra.mxu0 0.0
  %5574 = vmatprep.subr.mxu0 0.0
  %5575 = vmatpush1.msra.mxu0 0.0
  %5576 = vmatprep.subr.mxu0 0.0
  %5577 = vmatpush1.msra.mxu0 0.0
  %5578 = vmatprep.subr.mxu0 0.0
  %5579 = vmatpush1.msra.mxu0 0.0
  %5580 = vmatprep.subr.mxu0 0.0
  %5581 = vmatpush1.msra.mxu0 0.0
  %5582 = vmatprep.subr.mxu0 0.0
  %5583 = vmatpush1.msra.mxu0 0.0
  %5584 = vmatprep.subr.mxu0 0.0
  %5585 = vmatpush1.msra.mxu0 0.0
  %5586 = vmatprep.subr.mxu0 0.0
  %5587 = vmatpush1.msra.mxu0 0.0
  %5588 = vmatprep.subr.mxu0 0.0
  %5589 = vmatpush1.msra.mxu0 0.0
  %5590 = vmatprep.mubr.f32.mxu0 0.0
  %v5591 = vand.u32 %v2215, 4294901760
  %5592 = vmatmul.mubr.f32.gmra.mrb[0].mxu0 %v5591
  %v5593 = vpop.f32.mrb[0].mxu0
  %v5594 = vadd.f32 %v5506, %v5593
  %v5595 = vpop.f32.mrb[0].mxu0
  %v5596 = vadd.f32 %v5508, %v5595
  %5597 = vdwg.mxu0
  %v5598 = vmul.f32 %v5594, %v4948
  %v5599 = vmul.f32 %v5596, %v4950
  %v5600 = vadd.f32 %v5598, %v2869
  %v5601 = vadd.f32 %v5599, %v2869
  %v5602 = vadd.f32 %v5600, %v4731
  %v5603 = vadd.f32 %v5601, %v4733
  %v5604 = vmax.f32 %v5602, 0.0
  %v5605 = vmax.f32 %v5603, 0.0
  %v5608 = vrot.slane %v5604, 4
  %v5609 = vrot.slane %v5605, 4
  %v5612 = vsel %vm2883, %v2891, %v5608
  %v5613 = vsel %vm2883, %v2893, %v5609
  %s5614 = scalar_lea.vmem %s6, 32
  %5615 = vst [vmem:[%s5614] sm:$0xff] %v5612
  %5616 = vst [vmem:[%s5614 + $0x8] sm:$0xff] %v5613
  %5617 = vst [vmem:[%s5614 + $0x10] sm:$0xf] %v5608
  %5618 = vst [vmem:[%s5614 + $0x18] sm:$0xf] %v5609
  // Predicated region
  $region26: #{dense_layer_forward.1} parent=0 // pred_check
    _
  $region27: #{dense_layer_forward.1} parent=0 // pred_check_branch
    %5620 = sbr.rel (0) target = $region29
  $region28: #{dense_layer_forward.1} parent=0 // pred_region
    _
  $region29: #{dense_layer_forward.1} parent=0 // pred_fallthru
    _
  // Predicated region
  $region30: #{dense_layer_forward.1} parent=0 // pred_check
    _
  $region31: #{dense_layer_forward.1} parent=0 // pred_check_branch
    %5622 = sbr.rel (0) target = $region33
  $region32: #{dense_layer_forward.1} parent=0 // pred_region
    _
  $region33: #{dense_layer_forward.1} parent=0 // pred_fallthru
    _

</llo_original>
